<compile_context>
chip_gen: v6e
topology: v6e:2x2x1
jax: 0.10.0
libtpu: 0.0.40
codegen_flags: <defaults>
</compile_context>

<pallas_src>
import functools

import jax
import jax.numpy as jnp
from jax.experimental import pallas as pl
from jax.experimental.pallas import tpu as pltpu

IN_DIM = 28 * 28      # 784
HIDDEN = 500
OUT_DIM = 10

IN_PAD = 896          # 7 * 128
HID_PAD = 512         # 4 * 128
OUT_PAD = 128         # lane-dense output width
TILE_B = 256          # batch tile (multiple of 256 for the 256-wide MXU)


def _round_up(n, m):
    return (n + m - 1) // m * m


def mlp_kernel(x_ref, w1_ref, b1_ref, w2_ref, b2_ref, w3_ref, b3_ref, o_ref):
    # Layer 1: Linear(784->500) + ReLU  (bf16 inputs, f32 accumulation)
    h1 = jnp.dot(x_ref[...], w1_ref[...], preferred_element_type=jnp.float32)
    h1 = jnp.maximum(h1 + b1_ref[...], 0.0)
    # Layer 2: Linear(500->500) + ReLU
    h2 = jnp.dot(h1.astype(jnp.bfloat16), w2_ref[...],
                 preferred_element_type=jnp.float32)
    h2 = jnp.maximum(h2 + b2_ref[...], 0.0)
    # Layer 3: Linear(500->10) -> logits (padded to 128 lanes, unmasked store)
    logits = jnp.dot(h2.astype(jnp.bfloat16), w3_ref[...],
                     preferred_element_type=jnp.float32)
    o_ref[...] = (logits + b3_ref[...]).astype(o_ref.dtype)


def _pad2(a, rows, cols, dtype):
    out = jnp.zeros((rows, cols), dtype)
    return out.at[: a.shape[0], : a.shape[1]].set(a.astype(dtype))


def prepare_params(params):
    """Zero-pad to hardware-aligned shapes; weights in bf16, biases f32."""
    w1 = _pad2(params["w1"], IN_PAD, HID_PAD, jnp.bfloat16)
    w2 = _pad2(params["w2"], HID_PAD, HID_PAD, jnp.bfloat16)
    w3 = _pad2(params["w3"], HID_PAD, OUT_PAD, jnp.bfloat16)
    b1 = _pad2(params["b1"], 1, HID_PAD, jnp.float32)
    b2 = _pad2(params["b2"], 1, HID_PAD, jnp.float32)
    b3 = _pad2(params["b3"], 1, OUT_PAD, jnp.float32)
    return w1, b1, w2, b2, w3, b3


@jax.jit
def simple_nn_forward(x, params):
    """x: [B, 784] float32. Returns softmax(dim=0) probabilities [B, 10]."""
    B = x.shape[0]
    w1, b1, w2, b2, w3, b3 = prepare_params(params)

    # Pad batch to a multiple of the batch tile and features to 896 lanes.
    Bp = _round_up(max(B, 1), TILE_B)
    xp = jnp.zeros((Bp, IN_PAD), jnp.bfloat16)
    xp = xp.at[:B, :IN_DIM].set(x.astype(jnp.bfloat16))

    grid = (Bp // TILE_B,)
    flops = 2 * Bp * (IN_PAD * HID_PAD + HID_PAD * HID_PAD + HID_PAD * OUT_PAD)
    bytes_accessed = (xp.size * 2
                      + (w1.size + w2.size + w3.size) * 2
                      + (b1.size + b2.size + b3.size) * 4
                      + Bp * OUT_PAD * 4)

    logits_padded = pl.pallas_call(
        mlp_kernel,
        out_shape=jax.ShapeDtypeStruct((Bp, OUT_PAD), jnp.float32),
        grid_spec=pltpu.PrefetchScalarGridSpec(
            num_scalar_prefetch=0,
            grid=grid,
            in_specs=[
                pl.BlockSpec((TILE_B, IN_PAD), lambda i: (i, 0)),    # x tile
                pl.BlockSpec((IN_PAD, HID_PAD), lambda i: (0, 0)),   # w1 (resident)
                pl.BlockSpec((1, HID_PAD), lambda i: (0, 0)),        # b1
                pl.BlockSpec((HID_PAD, HID_PAD), lambda i: (0, 0)),  # w2 (resident)
                pl.BlockSpec((1, HID_PAD), lambda i: (0, 0)),        # b2
                pl.BlockSpec((HID_PAD, OUT_PAD), lambda i: (0, 0)),  # w3 (resident)
                pl.BlockSpec((1, OUT_PAD), lambda i: (0, 0)),        # b3
            ],
            out_specs=pl.BlockSpec((TILE_B, OUT_PAD), lambda i: (i, 0)),
        ),
        compiler_params=pltpu.CompilerParams(
            dimension_semantics=("parallel",),
            vmem_limit_bytes=64 * 1024 * 1024,
        ),
        cost_estimate=pl.CostEstimate(
            flops=flops, transcendentals=0, bytes_accessed=bytes_accessed),
    )(xp, w1, b1, w2, b2, w3, b3)

    # Slice away batch/lane padding, then Softmax over dim=0 (batch axis),
    # exactly matching nn.Softmax(dim=0). Done in the wrapper so the batch
    # grid stays a clean data-parallel map (cross-tile reduction otherwise).
    logits = logits_padded[:B, :OUT_DIM]
    return jax.nn.softmax(logits, axis=0)


def init_params(key):
    """Deterministic init mimicking PyTorch Linear default (U[-1/sqrt(fan_in), +])."""
    ks = jax.random.split(key, 6)

    def linear(kw, kb, fan_in, fan_out):
        bound = 1.0 / jnp.sqrt(float(fan_in))
        # stored as (in, out) = transpose of PyTorch (out, in)
        w = jax.random.uniform(kw, (fan_in, fan_out), jnp.float32, -bound, bound)
        b = jax.random.uniform(kb, (1, fan_out), jnp.float32, -bound, bound)
        return w, b

    w1, b1 = linear(ks[0], ks[1], IN_DIM, HIDDEN)
    w2, b2 = linear(ks[2], ks[3], HIDDEN, HIDDEN)
    w3, b3 = linear(ks[4], ks[5], HIDDEN, OUT_DIM)
    return {"w1": w1, "b1": b1, "w2": w2, "b2": b2, "w3": w3, "b3": b3}


def reference_forward(x, params):
    h1 = jnp.maximum(x @ params["w1"] + params["b1"], 0.0)
    h2 = jnp.maximum(h1 @ params["w2"] + params["b2"], 0.0)
    logits = h2 @ params["w3"] + params["b3"]
    return jax.nn.softmax(logits, axis=0)


if __name__ == "__main__":
    key = jax.random.PRNGKey(0)
    k_x, k_p = jax.random.split(key)

    B = 8
    x = jax.random.normal(k_x, (B, IN_DIM), jnp.float32)
    params = init_params(k_p)

    out = simple_nn_forward(x, params)
    out = jax.block_until_ready(out)

    # sanity: shape, softmax over dim=0 -> each column sums to 1,
    # and agreement with an f32 pure-JAX reference (loose tol for bf16 weights)
    assert out.shape == (B, OUT_DIM)
    col_sums = jnp.sum(out, axis=0)
    assert bool(jnp.all(jnp.abs(col_sums - 1.0) < 1e-4))
    ref = reference_forward(x, params)
    assert bool(jnp.max(jnp.abs(out - ref)) < 5e-2)

    print("KERNEL_OK")
</pallas_src>

<mosaic_0001>
module attributes {stable_mosaic.version = 11 : i64} {
  func.func @mlp_kernel(%arg0: i32, %arg1: memref<256x896xbf16, #tpu.memory_space<vmem>>, %arg2: memref<896x512xbf16, #tpu.memory_space<vmem>>, %arg3: memref<1x512xf32, #tpu.memory_space<vmem>>, %arg4: memref<512x512xbf16, #tpu.memory_space<vmem>>, %arg5: memref<1x512xf32, #tpu.memory_space<vmem>>, %arg6: memref<512x128xbf16, #tpu.memory_space<vmem>>, %arg7: memref<1x128xf32, #tpu.memory_space<vmem>>, %arg8: memref<256x128xf32, #tpu.memory_space<vmem>>) attributes {dimension_semantics = [#tpu.dimension_semantics<parallel>], iteration_bounds = array<i64: 1>, scalar_prefetch = 0 : i64, scratch_operands = 0 : i64, tpu.core_type = #tpu.core_type<tc>, window_params = [{transform_indices = @transform_0, window_bounds = array<i64: 256, 896>}, {pipeline_mode = #tpu.pipeline_mode<synchronous>, transform_indices = @transform_1, window_bounds = array<i64: 896, 512>}, {pipeline_mode = #tpu.pipeline_mode<synchronous>, transform_indices = @transform_2, window_bounds = array<i64: 1, 512>}, {pipeline_mode = #tpu.pipeline_mode<synchronous>, transform_indices = @transform_3, window_bounds = array<i64: 512, 512>}, {pipeline_mode = #tpu.pipeline_mode<synchronous>, transform_indices = @transform_4, window_bounds = array<i64: 1, 512>}, {pipeline_mode = #tpu.pipeline_mode<synchronous>, transform_indices = @transform_5, window_bounds = array<i64: 512, 128>}, {pipeline_mode = #tpu.pipeline_mode<synchronous>, transform_indices = @transform_6, window_bounds = array<i64: 1, 128>}, {transform_indices = @transform_7, window_bounds = array<i64: 256, 128>}]} {
    %c0 = arith.constant 0 : index
    %c0_0 = arith.constant 0 : index
    %0 = vector.load %arg1[%c0, %c0_0] : memref<256x896xbf16, #tpu.memory_space<vmem>>, vector<256x896xbf16>
    %c0_1 = arith.constant 0 : index
    %c0_2 = arith.constant 0 : index
    %1 = vector.load %arg2[%c0_1, %c0_2] : memref<896x512xbf16, #tpu.memory_space<vmem>>, vector<896x512xbf16>
    %cst = arith.constant dense<0.000000e+00> : vector<256x512xf32>
    %2 = tpu.matmul %0, %1, %cst {dimension_numbers = #tpu.dot_dimension_numbers<[1], [0], [0], [1], [0, 0, 1, 1], [], []>} : vector<256x896xbf16>, vector<896x512xbf16>, vector<256x512xf32> -> vector<256x512xf32>
    %c0_3 = arith.constant 0 : index
    %c0_4 = arith.constant 0 : index
    %3 = vector.load %arg3[%c0_3, %c0_4] : memref<1x512xf32, #tpu.memory_space<vmem>>, vector<1x512xf32>
    %4 = vector.broadcast %3 : vector<1x512xf32> to vector<256x512xf32>
    %5 = arith.addf %2, %4 : vector<256x512xf32>
    %cst_5 = arith.constant 0.000000e+00 : f32
    %6 = vector.broadcast %cst_5 : f32 to vector<256x512xf32>
    %7 = arith.maximumf %5, %6 : vector<256x512xf32>
    %8 = arith.truncf %7 : vector<256x512xf32> to vector<256x512xbf16>
    %c0_6 = arith.constant 0 : index
    %c0_7 = arith.constant 0 : index
    %9 = vector.load %arg4[%c0_6, %c0_7] : memref<512x512xbf16, #tpu.memory_space<vmem>>, vector<512x512xbf16>
    %cst_8 = arith.constant dense<0.000000e+00> : vector<256x512xf32>
    %10 = tpu.matmul %8, %9, %cst_8 {dimension_numbers = #tpu.dot_dimension_numbers<[1], [0], [0], [1], [0, 0, 1, 1], [], []>} : vector<256x512xbf16>, vector<512x512xbf16>, vector<256x512xf32> -> vector<256x512xf32>
    %c0_9 = arith.constant 0 : index
    %c0_10 = arith.constant 0 : index
    %11 = vector.load %arg5[%c0_9, %c0_10] : memref<1x512xf32, #tpu.memory_space<vmem>>, vector<1x512xf32>
    %12 = vector.broadcast %11 : vector<1x512xf32> to vector<256x512xf32>
    %13 = arith.addf %10, %12 : vector<256x512xf32>
    %cst_11 = arith.constant 0.000000e+00 : f32
    %14 = vector.broadcast %cst_11 : f32 to vector<256x512xf32>
    %15 = arith.maximumf %13, %14 : vector<256x512xf32>
    %16 = arith.truncf %15 : vector<256x512xf32> to vector<256x512xbf16>
    %c0_12 = arith.constant 0 : index
    %c0_13 = arith.constant 0 : index
    %17 = vector.load %arg6[%c0_12, %c0_13] : memref<512x128xbf16, #tpu.memory_space<vmem>>, vector<512x128xbf16>
    %cst_14 = arith.constant dense<0.000000e+00> : vector<256x128xf32>
    %18 = tpu.matmul %16, %17, %cst_14 {dimension_numbers = #tpu.dot_dimension_numbers<[1], [0], [0], [1], [0, 0, 1, 1], [], []>} : vector<256x512xbf16>, vector<512x128xbf16>, vector<256x128xf32> -> vector<256x128xf32>
    %c0_15 = arith.constant 0 : index
    %c0_16 = arith.constant 0 : index
    %19 = vector.load %arg7[%c0_15, %c0_16] : memref<1x128xf32, #tpu.memory_space<vmem>>, vector<1x128xf32>
    %20 = vector.broadcast %19 : vector<1x128xf32> to vector<256x128xf32>
    %21 = arith.addf %18, %20 : vector<256x128xf32>
    %c0_17 = arith.constant 0 : index
    %c0_18 = arith.constant 0 : index
    %22 = vector.load %arg8[%c0_17, %c0_18] : memref<256x128xf32, #tpu.memory_space<vmem>>, vector<256x128xf32>
    tpu.vector_store %arg8[%c0_17, %c0_18], %21 {strides = array<i32>} : memref<256x128xf32, #tpu.memory_space<vmem>>, vector<256x128xf32>,
    return
  }
  func.func @transform_0(%arg0: i32) -> (i32, i32) {
    %c0_i32 = arith.constant 0 : i32
    %c0_i32_0 = arith.constant 0 : i32
    return %arg0, %c0_i32 : i32, i32
  }
  func.func @transform_1(%arg0: i32) -> (i32, i32) {
    %c0_i32 = arith.constant 0 : i32
    %c0_i32_0 = arith.constant 0 : i32
    %c0_i32_1 = arith.constant 0 : i32
    return %c0_i32, %c0_i32_0 : i32, i32
  }
  func.func @transform_2(%arg0: i32) -> (i32, i32) {
    %c0_i32 = arith.constant 0 : i32
    %c0_i32_0 = arith.constant 0 : i32
    %c0_i32_1 = arith.constant 0 : i32
    return %c0_i32, %c0_i32_0 : i32, i32
  }
  func.func @transform_3(%arg0: i32) -> (i32, i32) {
    %c0_i32 = arith.constant 0 : i32
    %c0_i32_0 = arith.constant 0 : i32
    %c0_i32_1 = arith.constant 0 : i32
    return %c0_i32, %c0_i32_0 : i32, i32
  }
  func.func @transform_4(%arg0: i32) -> (i32, i32) {
    %c0_i32 = arith.constant 0 : i32
    %c0_i32_0 = arith.constant 0 : i32
    %c0_i32_1 = arith.constant 0 : i32
    return %c0_i32, %c0_i32_0 : i32, i32
  }
  func.func @transform_5(%arg0: i32) -> (i32, i32) {
    %c0_i32 = arith.constant 0 : i32
    %c0_i32_0 = arith.constant 0 : i32
    %c0_i32_1 = arith.constant 0 : i32
    return %c0_i32, %c0_i32_0 : i32, i32
  }
  func.func @transform_6(%arg0: i32) -> (i32, i32) {
    %c0_i32 = arith.constant 0 : i32
    %c0_i32_0 = arith.constant 0 : i32
    %c0_i32_1 = arith.constant 0 : i32
    return %c0_i32, %c0_i32_0 : i32, i32
  }
  func.func @transform_7(%arg0: i32) -> (i32, i32) {
    %c0_i32 = arith.constant 0 : i32
    %c0_i32_0 = arith.constant 0 : i32
    return %arg0, %c0_i32 : i32, i32
  }
}

</mosaic_0001>

<llo_original>
// kernel: simple_nn_forward.1
$region0: #{simple_nn_forward.1}
  #allocation0 [shape = 'u32[]', space=smem, size = 0x4, offset = 0x4, fixed_abs, tag = 'smem constant byte address 0x4 - core index']
  #allocation1 [shape = 'u32[144,128]{1,0:T(1,128)}', space=vmem, size = 0x12000, scoped, tag = 'internal scratch']
  %s0 = inlined_call_operand.vmem [shape: bf16[256,896], index: 0, kind: input, shape index: {}]
  %s1 = inlined_call_operand.vmem [shape: bf16[896,512], index: 1, kind: input, shape index: {}]
  %s2 = inlined_call_operand.vmem [shape: f32[1,512], index: 2, kind: input, shape index: {}]
  %s3 = inlined_call_operand.vmem [shape: bf16[512,512], index: 3, kind: input, shape index: {}]
  %s4 = inlined_call_operand.vmem [shape: f32[1,512], index: 4, kind: input, shape index: {}]
  %s5 = inlined_call_operand.vmem [shape: bf16[512,128], index: 5, kind: input, shape index: {}]
  %s6 = inlined_call_operand.vmem [shape: f32[1,128], index: 6, kind: input, shape index: {}]
  %s7 = inlined_call_operand.vmem [shape: f32[256,128], index: 7, kind: output, shape index: {}]
  %s8 = sld [smem:[#allocation0]]
  $region38: #{simple_nn_forward.1} parent=0
    _
  %s10 = ssub.s32 1, %s8
  %s11 = scalar_select 0, %s10, %s8
  // Predicated region
  $region2: #{simple_nn_forward.1} parent=0 // pred_check
    _
  $region3: #{simple_nn_forward.1} parent=0 // pred_check_branch
    %13 = sbr.rel (0) target = $region5
  $region4: #{simple_nn_forward.1} parent=0 // pred_region
    _
  $region5: #{simple_nn_forward.1} parent=0 // pred_fallthru
    _
  // Predicated region
  $region6: #{simple_nn_forward.1} parent=0 // pred_check
    _
  $region7: #{simple_nn_forward.1} parent=0 // pred_check_branch
    %15 = sbr.rel (0) target = $region9
  $region8: #{simple_nn_forward.1} parent=0 // pred_region
    _
  $region9: #{simple_nn_forward.1} parent=0 // pred_fallthru
    _
  // Predicated region
  $region10: #{simple_nn_forward.1} parent=0 // pred_check
    _
  $region11: #{simple_nn_forward.1} parent=0 // pred_check_branch
    %17 = sbr.rel (0) target = $region13
  $region12: #{simple_nn_forward.1} parent=0 // pred_region
    _
  $region13: #{simple_nn_forward.1} parent=0 // pred_fallthru
    _
  // Predicated region
  $region14: #{simple_nn_forward.1} parent=0 // pred_check
    _
  $region15: #{simple_nn_forward.1} parent=0 // pred_check_branch
    %19 = sbr.rel (0) target = $region17
  $region16: #{simple_nn_forward.1} parent=0 // pred_region
    _
  $region17: #{simple_nn_forward.1} parent=0 // pred_fallthru
    _
  // Predicated region
  $region18: #{simple_nn_forward.1} parent=0 // pred_check
    _
  $region19: #{simple_nn_forward.1} parent=0 // pred_check_branch
    %21 = sbr.rel (0) target = $region21
  $region20: #{simple_nn_forward.1} parent=0 // pred_region
    _
  $region21: #{simple_nn_forward.1} parent=0 // pred_fallthru
    _
  // Predicated region
  $region22: #{simple_nn_forward.1} parent=0 // pred_check
    _
  $region23: #{simple_nn_forward.1} parent=0 // pred_check_branch
    %23 = sbr.rel (0) target = $region25
  $region24: #{simple_nn_forward.1} parent=0 // pred_region
    _
  $region25: #{simple_nn_forward.1} parent=0 // pred_fallthru
    _
  // Predicated region
  $region26: #{simple_nn_forward.1} parent=0 // pred_check
    _
  $region27: #{simple_nn_forward.1} parent=0 // pred_check_branch
    %25 = sbr.rel (0) target = $region29
  $region28: #{simple_nn_forward.1} parent=0 // pred_region
    _
  $region29: #{simple_nn_forward.1} parent=0 // pred_fallthru
    _
  %v27 = vld [vmem:[%s0] sm:$0xff]
  %v28 = vld [vmem:[%s0 + $0x8] sm:$0xff]
  %v29 = vld [vmem:[%s0 + $0x10] sm:$0xff]
  %v30 = vld [vmem:[%s0 + $0x18] sm:$0xf]
  %v31 = vld [vmem:[%s0 + $0x1c] sm:$0xff]
  %v32 = vld [vmem:[%s0 + $0x24] sm:$0xff]
  %v33 = vld [vmem:[%s0 + $0x2c] sm:$0xff]
  %v34 = vld [vmem:[%s0 + $0x34] sm:$0xf]
  %v35 = vld [vmem:[%s0 + $0x38] sm:$0xff]
  %v36 = vld [vmem:[%s0 + $0x40] sm:$0xff]
  %v37 = vld [vmem:[%s0 + $0x48] sm:$0xff]
  %v38 = vld [vmem:[%s0 + $0x50] sm:$0xf]
  %v39 = vld [vmem:[%s0 + $0x54] sm:$0xff]
  %v40 = vld [vmem:[%s0 + $0x5c] sm:$0xff]
  %v41 = vld [vmem:[%s0 + $0x64] sm:$0xff]
  %v42 = vld [vmem:[%s0 + $0x6c] sm:$0xf]
  %v43 = vld [vmem:[%s0 + $0x70] sm:$0xff]
  %v44 = vld [vmem:[%s0 + $0x78] sm:$0xff]
  %v45 = vld [vmem:[%s0 + $0x80] sm:$0xff]
  %v46 = vld [vmem:[%s0 + $0x88] sm:$0xf]
  %v47 = vld [vmem:[%s0 + $0x8c] sm:$0xff]
  %v48 = vld [vmem:[%s0 + $0x94] sm:$0xff]
  %v49 = vld [vmem:[%s0 + $0x9c] sm:$0xff]
  %v50 = vld [vmem:[%s0 + $0xa4] sm:$0xf]
  %v51 = vld [vmem:[%s0 + $0xa8] sm:$0xff]
  %v52 = vld [vmem:[%s0 + $0xb0] sm:$0xff]
  %v53 = vld [vmem:[%s0 + $0xb8] sm:$0xff]
  %v54 = vld [vmem:[%s0 + $0xc0] sm:$0xf]
  %v55 = vld [vmem:[%s0 + $0xc4] sm:$0xff]
  %v56 = vld [vmem:[%s0 + $0xcc] sm:$0xff]
  %v57 = vld [vmem:[%s0 + $0xd4] sm:$0xff]
  %v58 = vld [vmem:[%s0 + $0xdc] sm:$0xf]
  %v59 = vld [vmem:[%s0 + $0xe0] sm:$0xff]
  %v60 = vld [vmem:[%s0 + $0xe8] sm:$0xff]
  %v61 = vld [vmem:[%s0 + $0xf0] sm:$0xff]
  %v62 = vld [vmem:[%s0 + $0xf8] sm:$0xf]
  %v63 = vld [vmem:[%s0 + $0xfc] sm:$0xff]
  %v64 = vld [vmem:[%s0 + $0x104] sm:$0xff]
  %v65 = vld [vmem:[%s0 + $0x10c] sm:$0xff]
  %v66 = vld [vmem:[%s0 + $0x114] sm:$0xf]
  %v67 = vld [vmem:[%s0 + $0x118] sm:$0xff]
  %v68 = vld [vmem:[%s0 + $0x120] sm:$0xff]
  %v69 = vld [vmem:[%s0 + $0x128] sm:$0xff]
  %v70 = vld [vmem:[%s0 + $0x130] sm:$0xf]
  %v71 = vld [vmem:[%s0 + $0x134] sm:$0xff]
  %v72 = vld [vmem:[%s0 + $0x13c] sm:$0xff]
  %v73 = vld [vmem:[%s0 + $0x144] sm:$0xff]
  %v74 = vld [vmem:[%s0 + $0x14c] sm:$0xf]
  %v75 = vld [vmem:[%s0 + $0x150] sm:$0xff]
  %v76 = vld [vmem:[%s0 + $0x158] sm:$0xff]
  %v77 = vld [vmem:[%s0 + $0x160] sm:$0xff]
  %v78 = vld [vmem:[%s0 + $0x168] sm:$0xf]
  %v79 = vld [vmem:[%s0 + $0x16c] sm:$0xff]
  %v80 = vld [vmem:[%s0 + $0x174] sm:$0xff]
  %v81 = vld [vmem:[%s0 + $0x17c] sm:$0xff]
  %v82 = vld [vmem:[%s0 + $0x184] sm:$0xf]
  %v83 = vld [vmem:[%s0 + $0x188] sm:$0xff]
  %v84 = vld [vmem:[%s0 + $0x190] sm:$0xff]
  %v85 = vld [vmem:[%s0 + $0x198] sm:$0xff]
  %v86 = vld [vmem:[%s0 + $0x1a0] sm:$0xf]
  %v87 = vld [vmem:[%s0 + $0x1a4] sm:$0xff]
  %v88 = vld [vmem:[%s0 + $0x1ac] sm:$0xff]
  %v89 = vld [vmem:[%s0 + $0x1b4] sm:$0xff]
  %v90 = vld [vmem:[%s0 + $0x1bc] sm:$0xf]
  %v91 = vld [vmem:[%s0 + $0x1c0] sm:$0xff]
  %v92 = vld [vmem:[%s0 + $0x1c8] sm:$0xff]
  %v93 = vld [vmem:[%s0 + $0x1d0] sm:$0xff]
  %v94 = vld [vmem:[%s0 + $0x1d8] sm:$0xf]
  %v95 = vld [vmem:[%s0 + $0x1dc] sm:$0xff]
  %v96 = vld [vmem:[%s0 + $0x1e4] sm:$0xff]
  %v97 = vld [vmem:[%s0 + $0x1ec] sm:$0xff]
  %v98 = vld [vmem:[%s0 + $0x1f4] sm:$0xf]
  %v99 = vld [vmem:[%s0 + $0x1f8] sm:$0xff]
  %v100 = vld [vmem:[%s0 + $0x200] sm:$0xff]
  %v101 = vld [vmem:[%s0 + $0x208] sm:$0xff]
  %v102 = vld [vmem:[%s0 + $0x210] sm:$0xf]
  %v103 = vld [vmem:[%s0 + $0x214] sm:$0xff]
  %v104 = vld [vmem:[%s0 + $0x21c] sm:$0xff]
  %v105 = vld [vmem:[%s0 + $0x224] sm:$0xff]
  %v106 = vld [vmem:[%s0 + $0x22c] sm:$0xf]
  %v107 = vld [vmem:[%s0 + $0x230] sm:$0xff]
  %v108 = vld [vmem:[%s0 + $0x238] sm:$0xff]
  %v109 = vld [vmem:[%s0 + $0x240] sm:$0xff]
  %v110 = vld [vmem:[%s0 + $0x248] sm:$0xf]
  %v111 = vld [vmem:[%s0 + $0x24c] sm:$0xff]
  %v112 = vld [vmem:[%s0 + $0x254] sm:$0xff]
  %v113 = vld [vmem:[%s0 + $0x25c] sm:$0xff]
  %v114 = vld [vmem:[%s0 + $0x264] sm:$0xf]
  %v115 = vld [vmem:[%s0 + $0x268] sm:$0xff]
  %v116 = vld [vmem:[%s0 + $0x270] sm:$0xff]
  %v117 = vld [vmem:[%s0 + $0x278] sm:$0xff]
  %v118 = vld [vmem:[%s0 + $0x280] sm:$0xf]
  %v119 = vld [vmem:[%s0 + $0x284] sm:$0xff]
  %v120 = vld [vmem:[%s0 + $0x28c] sm:$0xff]
  %v121 = vld [vmem:[%s0 + $0x294] sm:$0xff]
  %v122 = vld [vmem:[%s0 + $0x29c] sm:$0xf]
  %v123 = vld [vmem:[%s0 + $0x2a0] sm:$0xff]
  %v124 = vld [vmem:[%s0 + $0x2a8] sm:$0xff]
  %v125 = vld [vmem:[%s0 + $0x2b0] sm:$0xff]
  %v126 = vld [vmem:[%s0 + $0x2b8] sm:$0xf]
  %v127 = vld [vmem:[%s0 + $0x2bc] sm:$0xff]
  %v128 = vld [vmem:[%s0 + $0x2c4] sm:$0xff]
  %v129 = vld [vmem:[%s0 + $0x2cc] sm:$0xff]
  %v130 = vld [vmem:[%s0 + $0x2d4] sm:$0xf]
  %v131 = vld [vmem:[%s0 + $0x2d8] sm:$0xff]
  %v132 = vld [vmem:[%s0 + $0x2e0] sm:$0xff]
  %v133 = vld [vmem:[%s0 + $0x2e8] sm:$0xff]
  %v134 = vld [vmem:[%s0 + $0x2f0] sm:$0xf]
  %v135 = vld [vmem:[%s0 + $0x2f4] sm:$0xff]
  %v136 = vld [vmem:[%s0 + $0x2fc] sm:$0xff]
  %v137 = vld [vmem:[%s0 + $0x304] sm:$0xff]
  %v138 = vld [vmem:[%s0 + $0x30c] sm:$0xf]
  %v139 = vld [vmem:[%s0 + $0x310] sm:$0xff]
  %v140 = vld [vmem:[%s0 + $0x318] sm:$0xff]
  %v141 = vld [vmem:[%s0 + $0x320] sm:$0xff]
  %v142 = vld [vmem:[%s0 + $0x328] sm:$0xf]
  %v143 = vld [vmem:[%s0 + $0x32c] sm:$0xff]
  %v144 = vld [vmem:[%s0 + $0x334] sm:$0xff]
  %v145 = vld [vmem:[%s0 + $0x33c] sm:$0xff]
  %v146 = vld [vmem:[%s0 + $0x344] sm:$0xf]
  %v147 = vld [vmem:[%s0 + $0x348] sm:$0xff]
  %v148 = vld [vmem:[%s0 + $0x350] sm:$0xff]
  %v149 = vld [vmem:[%s0 + $0x358] sm:$0xff]
  %v150 = vld [vmem:[%s0 + $0x360] sm:$0xf]
  %v151 = vld [vmem:[%s0 + $0x364] sm:$0xff]
  %v152 = vld [vmem:[%s0 + $0x36c] sm:$0xff]
  %v153 = vld [vmem:[%s0 + $0x374] sm:$0xff]
  %v154 = vld [vmem:[%s0 + $0x37c] sm:$0xf]
  %v155 = vld [vmem:[%s1] sm:$0xff]
  %v156 = vld [vmem:[%s1 + $0x8] sm:$0xff]
  %v157 = vld [vmem:[%s1 + $0x10] sm:$0xff]
  %v158 = vld [vmem:[%s1 + $0x18] sm:$0xff]
  %v159 = vld [vmem:[%s1 + $0x20] sm:$0xff]
  %v160 = vld [vmem:[%s1 + $0x28] sm:$0xff]
  %v161 = vld [vmem:[%s1 + $0x30] sm:$0xff]
  %v162 = vld [vmem:[%s1 + $0x38] sm:$0xff]
  %v163 = vld [vmem:[%s1 + $0x40] sm:$0xff]
  %v164 = vld [vmem:[%s1 + $0x48] sm:$0xff]
  %v165 = vld [vmem:[%s1 + $0x50] sm:$0xff]
  %v166 = vld [vmem:[%s1 + $0x58] sm:$0xff]
  %v167 = vld [vmem:[%s1 + $0x60] sm:$0xff]
  %v168 = vld [vmem:[%s1 + $0x68] sm:$0xff]
  %v169 = vld [vmem:[%s1 + $0x70] sm:$0xff]
  %v170 = vld [vmem:[%s1 + $0x78] sm:$0xff]
  %v171 = vld [vmem:[%s1 + $0x80] sm:$0xff]
  %v172 = vld [vmem:[%s1 + $0x88] sm:$0xff]
  %v173 = vld [vmem:[%s1 + $0x90] sm:$0xff]
  %v174 = vld [vmem:[%s1 + $0x98] sm:$0xff]
  %v175 = vld [vmem:[%s1 + $0xa0] sm:$0xff]
  %v176 = vld [vmem:[%s1 + $0xa8] sm:$0xff]
  %v177 = vld [vmem:[%s1 + $0xb0] sm:$0xff]
  %v178 = vld [vmem:[%s1 + $0xb8] sm:$0xff]
  %v179 = vld [vmem:[%s1 + $0xc0] sm:$0xff]
  %v180 = vld [vmem:[%s1 + $0xc8] sm:$0xff]
  %v181 = vld [vmem:[%s1 + $0xd0] sm:$0xff]
  %v182 = vld [vmem:[%s1 + $0xd8] sm:$0xff]
  %v183 = vld [vmem:[%s1 + $0xe0] sm:$0xff]
  %v184 = vld [vmem:[%s1 + $0xe8] sm:$0xff]
  %v185 = vld [vmem:[%s1 + $0xf0] sm:$0xff]
  %v186 = vld [vmem:[%s1 + $0xf8] sm:$0xff]
  %v187 = vld [vmem:[%s1 + $0x100] sm:$0xff]
  %v188 = vld [vmem:[%s1 + $0x108] sm:$0xff]
  %v189 = vld [vmem:[%s1 + $0x110] sm:$0xff]
  %v190 = vld [vmem:[%s1 + $0x118] sm:$0xff]
  %v191 = vld [vmem:[%s1 + $0x120] sm:$0xff]
  %v192 = vld [vmem:[%s1 + $0x128] sm:$0xff]
  %v193 = vld [vmem:[%s1 + $0x130] sm:$0xff]
  %v194 = vld [vmem:[%s1 + $0x138] sm:$0xff]
  %v195 = vld [vmem:[%s1 + $0x140] sm:$0xff]
  %v196 = vld [vmem:[%s1 + $0x148] sm:$0xff]
  %v197 = vld [vmem:[%s1 + $0x150] sm:$0xff]
  %v198 = vld [vmem:[%s1 + $0x158] sm:$0xff]
  %v199 = vld [vmem:[%s1 + $0x160] sm:$0xff]
  %v200 = vld [vmem:[%s1 + $0x168] sm:$0xff]
  %v201 = vld [vmem:[%s1 + $0x170] sm:$0xff]
  %v202 = vld [vmem:[%s1 + $0x178] sm:$0xff]
  %v203 = vld [vmem:[%s1 + $0x180] sm:$0xff]
  %v204 = vld [vmem:[%s1 + $0x188] sm:$0xff]
  %v205 = vld [vmem:[%s1 + $0x190] sm:$0xff]
  %v206 = vld [vmem:[%s1 + $0x198] sm:$0xff]
  %v207 = vld [vmem:[%s1 + $0x1a0] sm:$0xff]
  %v208 = vld [vmem:[%s1 + $0x1a8] sm:$0xff]
  %v209 = vld [vmem:[%s1 + $0x1b0] sm:$0xff]
  %v210 = vld [vmem:[%s1 + $0x1b8] sm:$0xff]
  %v211 = vld [vmem:[%s1 + $0x1c0] sm:$0xff]
  %v212 = vld [vmem:[%s1 + $0x1c8] sm:$0xff]
  %v213 = vld [vmem:[%s1 + $0x1d0] sm:$0xff]
  %v214 = vld [vmem:[%s1 + $0x1d8] sm:$0xff]
  %v215 = vld [vmem:[%s1 + $0x1e0] sm:$0xff]
  %v216 = vld [vmem:[%s1 + $0x1e8] sm:$0xff]
  %v217 = vld [vmem:[%s1 + $0x1f0] sm:$0xff]
  %v218 = vld [vmem:[%s1 + $0x1f8] sm:$0xff]
  %v219 = vld [vmem:[%s1 + $0x200] sm:$0xff]
  %v220 = vld [vmem:[%s1 + $0x208] sm:$0xff]
  %v221 = vld [vmem:[%s1 + $0x210] sm:$0xff]
  %v222 = vld [vmem:[%s1 + $0x218] sm:$0xff]
  %v223 = vld [vmem:[%s1 + $0x220] sm:$0xff]
  %v224 = vld [vmem:[%s1 + $0x228] sm:$0xff]
  %v225 = vld [vmem:[%s1 + $0x230] sm:$0xff]
  %v226 = vld [vmem:[%s1 + $0x238] sm:$0xff]
  %v227 = vld [vmem:[%s1 + $0x240] sm:$0xff]
  %v228 = vld [vmem:[%s1 + $0x248] sm:$0xff]
  %v229 = vld [vmem:[%s1 + $0x250] sm:$0xff]
  %v230 = vld [vmem:[%s1 + $0x258] sm:$0xff]
  %v231 = vld [vmem:[%s1 + $0x260] sm:$0xff]
  %v232 = vld [vmem:[%s1 + $0x268] sm:$0xff]
  %v233 = vld [vmem:[%s1 + $0x270] sm:$0xff]
  %v234 = vld [vmem:[%s1 + $0x278] sm:$0xff]
  %v235 = vld [vmem:[%s1 + $0x280] sm:$0xff]
  %v236 = vld [vmem:[%s1 + $0x288] sm:$0xff]
  %v237 = vld [vmem:[%s1 + $0x290] sm:$0xff]
  %v238 = vld [vmem:[%s1 + $0x298] sm:$0xff]
  %v239 = vld [vmem:[%s1 + $0x2a0] sm:$0xff]
  %v240 = vld [vmem:[%s1 + $0x2a8] sm:$0xff]
  %v241 = vld [vmem:[%s1 + $0x2b0] sm:$0xff]
  %v242 = vld [vmem:[%s1 + $0x2b8] sm:$0xff]
  %v243 = vld [vmem:[%s1 + $0x2c0] sm:$0xff]
  %v244 = vld [vmem:[%s1 + $0x2c8] sm:$0xff]
  %v245 = vld [vmem:[%s1 + $0x2d0] sm:$0xff]
  %v246 = vld [vmem:[%s1 + $0x2d8] sm:$0xff]
  %v247 = vld [vmem:[%s1 + $0x2e0] sm:$0xff]
  %v248 = vld [vmem:[%s1 + $0x2e8] sm:$0xff]
  %v249 = vld [vmem:[%s1 + $0x2f0] sm:$0xff]
  %v250 = vld [vmem:[%s1 + $0x2f8] sm:$0xff]
  %v251 = vld [vmem:[%s1 + $0x300] sm:$0xff]
  %v252 = vld [vmem:[%s1 + $0x308] sm:$0xff]
  %v253 = vld [vmem:[%s1 + $0x310] sm:$0xff]
  %v254 = vld [vmem:[%s1 + $0x318] sm:$0xff]
  %v255 = vld [vmem:[%s1 + $0x320] sm:$0xff]
  %v256 = vld [vmem:[%s1 + $0x328] sm:$0xff]
  %v257 = vld [vmem:[%s1 + $0x330] sm:$0xff]
  %v258 = vld [vmem:[%s1 + $0x338] sm:$0xff]
  %v259 = vld [vmem:[%s1 + $0x340] sm:$0xff]
  %v260 = vld [vmem:[%s1 + $0x348] sm:$0xff]
  %v261 = vld [vmem:[%s1 + $0x350] sm:$0xff]
  %v262 = vld [vmem:[%s1 + $0x358] sm:$0xff]
  %v263 = vld [vmem:[%s1 + $0x360] sm:$0xff]
  %v264 = vld [vmem:[%s1 + $0x368] sm:$0xff]
  %v265 = vld [vmem:[%s1 + $0x370] sm:$0xff]
  %v266 = vld [vmem:[%s1 + $0x378] sm:$0xff]
  %v267 = vld [vmem:[%s1 + $0x380] sm:$0xff]
  %v268 = vld [vmem:[%s1 + $0x388] sm:$0xff]
  %v269 = vld [vmem:[%s1 + $0x390] sm:$0xff]
  %v270 = vld [vmem:[%s1 + $0x398] sm:$0xff]
  %v271 = vld [vmem:[%s1 + $0x3a0] sm:$0xff]
  %v272 = vld [vmem:[%s1 + $0x3a8] sm:$0xff]
  %v273 = vld [vmem:[%s1 + $0x3b0] sm:$0xff]
  %v274 = vld [vmem:[%s1 + $0x3b8] sm:$0xff]
  %v275 = vld [vmem:[%s1 + $0x3c0] sm:$0xff]
  %v276 = vld [vmem:[%s1 + $0x3c8] sm:$0xff]
  %v277 = vld [vmem:[%s1 + $0x3d0] sm:$0xff]
  %v278 = vld [vmem:[%s1 + $0x3d8] sm:$0xff]
  %v279 = vld [vmem:[%s1 + $0x3e0] sm:$0xff]
  %v280 = vld [vmem:[%s1 + $0x3e8] sm:$0xff]
  %v281 = vld [vmem:[%s1 + $0x3f0] sm:$0xff]
  %v282 = vld [vmem:[%s1 + $0x3f8] sm:$0xff]
  %v283 = vld [vmem:[%s1 + $0x400] sm:$0xff]
  %v284 = vld [vmem:[%s1 + $0x408] sm:$0xff]
  %v285 = vld [vmem:[%s1 + $0x410] sm:$0xff]
  %v286 = vld [vmem:[%s1 + $0x418] sm:$0xff]
  %v287 = vld [vmem:[%s1 + $0x420] sm:$0xff]
  %v288 = vld [vmem:[%s1 + $0x428] sm:$0xff]
  %v289 = vld [vmem:[%s1 + $0x430] sm:$0xff]
  %v290 = vld [vmem:[%s1 + $0x438] sm:$0xff]
  %v291 = vld [vmem:[%s1 + $0x440] sm:$0xff]
  %v292 = vld [vmem:[%s1 + $0x448] sm:$0xff]
  %v293 = vld [vmem:[%s1 + $0x450] sm:$0xff]
  %v294 = vld [vmem:[%s1 + $0x458] sm:$0xff]
  %v295 = vld [vmem:[%s1 + $0x460] sm:$0xff]
  %v296 = vld [vmem:[%s1 + $0x468] sm:$0xff]
  %v297 = vld [vmem:[%s1 + $0x470] sm:$0xff]
  %v298 = vld [vmem:[%s1 + $0x478] sm:$0xff]
  %v299 = vld [vmem:[%s1 + $0x480] sm:$0xff]
  %v300 = vld [vmem:[%s1 + $0x488] sm:$0xff]
  %v301 = vld [vmem:[%s1 + $0x490] sm:$0xff]
  %v302 = vld [vmem:[%s1 + $0x498] sm:$0xff]
  %v303 = vld [vmem:[%s1 + $0x4a0] sm:$0xff]
  %v304 = vld [vmem:[%s1 + $0x4a8] sm:$0xff]
  %v305 = vld [vmem:[%s1 + $0x4b0] sm:$0xff]
  %v306 = vld [vmem:[%s1 + $0x4b8] sm:$0xff]
  %v307 = vld [vmem:[%s1 + $0x4c0] sm:$0xff]
  %v308 = vld [vmem:[%s1 + $0x4c8] sm:$0xff]
  %v309 = vld [vmem:[%s1 + $0x4d0] sm:$0xff]
  %v310 = vld [vmem:[%s1 + $0x4d8] sm:$0xff]
  %v311 = vld [vmem:[%s1 + $0x4e0] sm:$0xff]
  %v312 = vld [vmem:[%s1 + $0x4e8] sm:$0xff]
  %v313 = vld [vmem:[%s1 + $0x4f0] sm:$0xff]
  %v314 = vld [vmem:[%s1 + $0x4f8] sm:$0xff]
  %v315 = vld [vmem:[%s1 + $0x500] sm:$0xff]
  %v316 = vld [vmem:[%s1 + $0x508] sm:$0xff]
  %v317 = vld [vmem:[%s1 + $0x510] sm:$0xff]
  %v318 = vld [vmem:[%s1 + $0x518] sm:$0xff]
  %v319 = vld [vmem:[%s1 + $0x520] sm:$0xff]
  %v320 = vld [vmem:[%s1 + $0x528] sm:$0xff]
  %v321 = vld [vmem:[%s1 + $0x530] sm:$0xff]
  %v322 = vld [vmem:[%s1 + $0x538] sm:$0xff]
  %v323 = vld [vmem:[%s1 + $0x540] sm:$0xff]
  %v324 = vld [vmem:[%s1 + $0x548] sm:$0xff]
  %v325 = vld [vmem:[%s1 + $0x550] sm:$0xff]
  %v326 = vld [vmem:[%s1 + $0x558] sm:$0xff]
  %v327 = vld [vmem:[%s1 + $0x560] sm:$0xff]
  %v328 = vld [vmem:[%s1 + $0x568] sm:$0xff]
  %v329 = vld [vmem:[%s1 + $0x570] sm:$0xff]
  %v330 = vld [vmem:[%s1 + $0x578] sm:$0xff]
  %v331 = vld [vmem:[%s1 + $0x580] sm:$0xff]
  %v332 = vld [vmem:[%s1 + $0x588] sm:$0xff]
  %v333 = vld [vmem:[%s1 + $0x590] sm:$0xff]
  %v334 = vld [vmem:[%s1 + $0x598] sm:$0xff]
  %v335 = vld [vmem:[%s1 + $0x5a0] sm:$0xff]
  %v336 = vld [vmem:[%s1 + $0x5a8] sm:$0xff]
  %v337 = vld [vmem:[%s1 + $0x5b0] sm:$0xff]
  %v338 = vld [vmem:[%s1 + $0x5b8] sm:$0xff]
  %v339 = vld [vmem:[%s1 + $0x5c0] sm:$0xff]
  %v340 = vld [vmem:[%s1 + $0x5c8] sm:$0xff]
  %v341 = vld [vmem:[%s1 + $0x5d0] sm:$0xff]
  %v342 = vld [vmem:[%s1 + $0x5d8] sm:$0xff]
  %v343 = vld [vmem:[%s1 + $0x5e0] sm:$0xff]
  %v344 = vld [vmem:[%s1 + $0x5e8] sm:$0xff]
  %v345 = vld [vmem:[%s1 + $0x5f0] sm:$0xff]
  %v346 = vld [vmem:[%s1 + $0x5f8] sm:$0xff]
  %v347 = vld [vmem:[%s1 + $0x600] sm:$0xff]
  %v348 = vld [vmem:[%s1 + $0x608] sm:$0xff]
  %v349 = vld [vmem:[%s1 + $0x610] sm:$0xff]
  %v350 = vld [vmem:[%s1 + $0x618] sm:$0xff]
  %v351 = vld [vmem:[%s1 + $0x620] sm:$0xff]
  %v352 = vld [vmem:[%s1 + $0x628] sm:$0xff]
  %v353 = vld [vmem:[%s1 + $0x630] sm:$0xff]
  %v354 = vld [vmem:[%s1 + $0x638] sm:$0xff]
  %v355 = vld [vmem:[%s1 + $0x640] sm:$0xff]
  %v356 = vld [vmem:[%s1 + $0x648] sm:$0xff]
  %v357 = vld [vmem:[%s1 + $0x650] sm:$0xff]
  %v358 = vld [vmem:[%s1 + $0x658] sm:$0xff]
  %v359 = vld [vmem:[%s1 + $0x660] sm:$0xff]
  %v360 = vld [vmem:[%s1 + $0x668] sm:$0xff]
  %v361 = vld [vmem:[%s1 + $0x670] sm:$0xff]
  %v362 = vld [vmem:[%s1 + $0x678] sm:$0xff]
  %v363 = vld [vmem:[%s1 + $0x680] sm:$0xff]
  %v364 = vld [vmem:[%s1 + $0x688] sm:$0xff]
  %v365 = vld [vmem:[%s1 + $0x690] sm:$0xff]
  %v366 = vld [vmem:[%s1 + $0x698] sm:$0xff]
  %v367 = vld [vmem:[%s1 + $0x6a0] sm:$0xff]
  %v368 = vld [vmem:[%s1 + $0x6a8] sm:$0xff]
  %v369 = vld [vmem:[%s1 + $0x6b0] sm:$0xff]
  %v370 = vld [vmem:[%s1 + $0x6b8] sm:$0xff]
  %v371 = vld [vmem:[%s1 + $0x6c0] sm:$0xff]
  %v372 = vld [vmem:[%s1 + $0x6c8] sm:$0xff]
  %v373 = vld [vmem:[%s1 + $0x6d0] sm:$0xff]
  %v374 = vld [vmem:[%s1 + $0x6d8] sm:$0xff]
  %v375 = vld [vmem:[%s1 + $0x6e0] sm:$0xff]
  %v376 = vld [vmem:[%s1 + $0x6e8] sm:$0xff]
  %v377 = vld [vmem:[%s1 + $0x6f0] sm:$0xff]
  %v378 = vld [vmem:[%s1 + $0x6f8] sm:$0xff]
  %v379 = vld [vmem:[%s2] sm:$0xf]
  %v381 = vlaneseq
  %v382 = vshrl.u32 %v381, 7
  %v383 = vsub.s32 0, %v382
  %v384 = vrot.slane %v379, %v383
  %v385 = vlaneseq
  %v386 = vshrl.u32 %v385, 7
  %v387 = vsub.s32 1, %v386
  %v388 = vrot.slane %v379, %v387
  %v389 = vlaneseq
  %v390 = vshrl.u32 %v389, 7
  %v391 = vsub.s32 2, %v390
  %v392 = vrot.slane %v379, %v391
  %v393 = vlaneseq
  %v394 = vshrl.u32 %v393, 7
  %v395 = vsub.s32 3, %v394
  %v396 = vrot.slane %v379, %v395
  %v529 = vunpack.c.l.b16 %v27
  %v530 = vunpack.c.h.b16 %v27
  %v531 = vunpack.c.l.b16 %v28
  %v532 = vunpack.c.h.b16 %v28
  %v533 = vunpack.c.l.b16 %v29
  %v534 = vunpack.c.h.b16 %v29
  %v535 = vunpack.c.l.b16 %v30
  %v536 = vunpack.c.l.b16 %v31
  %v537 = vunpack.c.h.b16 %v31
  %v538 = vunpack.c.l.b16 %v32
  %v539 = vunpack.c.h.b16 %v32
  %v540 = vunpack.c.l.b16 %v33
  %v541 = vunpack.c.h.b16 %v33
  %v542 = vunpack.c.l.b16 %v34
  %v543 = vunpack.c.l.b16 %v35
  %v544 = vunpack.c.h.b16 %v35
  %v545 = vunpack.c.l.b16 %v36
  %v546 = vunpack.c.h.b16 %v36
  %v547 = vunpack.c.l.b16 %v37
  %v548 = vunpack.c.h.b16 %v37
  %v549 = vunpack.c.l.b16 %v38
  %v550 = vunpack.c.l.b16 %v39
  %v551 = vunpack.c.h.b16 %v39
  %v552 = vunpack.c.l.b16 %v40
  %v553 = vunpack.c.h.b16 %v40
  %v554 = vunpack.c.l.b16 %v41
  %v555 = vunpack.c.h.b16 %v41
  %v556 = vunpack.c.l.b16 %v42
  %v557 = vunpack.c.l.b16 %v43
  %v558 = vunpack.c.h.b16 %v43
  %v559 = vunpack.c.l.b16 %v44
  %v560 = vunpack.c.h.b16 %v44
  %v561 = vunpack.c.l.b16 %v45
  %v562 = vunpack.c.h.b16 %v45
  %v563 = vunpack.c.l.b16 %v46
  %v564 = vunpack.c.l.b16 %v47
  %v565 = vunpack.c.h.b16 %v47
  %v566 = vunpack.c.l.b16 %v48
  %v567 = vunpack.c.h.b16 %v48
  %v568 = vunpack.c.l.b16 %v49
  %v569 = vunpack.c.h.b16 %v49
  %v570 = vunpack.c.l.b16 %v50
  %v571 = vunpack.c.l.b16 %v51
  %v572 = vunpack.c.h.b16 %v51
  %v573 = vunpack.c.l.b16 %v52
  %v574 = vunpack.c.h.b16 %v52
  %v575 = vunpack.c.l.b16 %v53
  %v576 = vunpack.c.h.b16 %v53
  %v577 = vunpack.c.l.b16 %v54
  %v578 = vunpack.c.l.b16 %v55
  %v579 = vunpack.c.h.b16 %v55
  %v580 = vunpack.c.l.b16 %v56
  %v581 = vunpack.c.h.b16 %v56
  %v582 = vunpack.c.l.b16 %v57
  %v583 = vunpack.c.h.b16 %v57
  %v584 = vunpack.c.l.b16 %v58
  %v585 = vunpack.c.l.b16 %v59
  %v586 = vunpack.c.h.b16 %v59
  %v587 = vunpack.c.l.b16 %v60
  %v588 = vunpack.c.h.b16 %v60
  %v589 = vunpack.c.l.b16 %v61
  %v590 = vunpack.c.h.b16 %v61
  %v591 = vunpack.c.l.b16 %v62
  %v592 = vunpack.c.l.b16 %v63
  %v593 = vunpack.c.h.b16 %v63
  %v594 = vunpack.c.l.b16 %v64
  %v595 = vunpack.c.h.b16 %v64
  %v596 = vunpack.c.l.b16 %v65
  %v597 = vunpack.c.h.b16 %v65
  %v598 = vunpack.c.l.b16 %v66
  %v599 = vunpack.c.l.b16 %v67
  %v600 = vunpack.c.h.b16 %v67
  %v601 = vunpack.c.l.b16 %v68
  %v602 = vunpack.c.h.b16 %v68
  %v603 = vunpack.c.l.b16 %v69
  %v604 = vunpack.c.h.b16 %v69
  %v605 = vunpack.c.l.b16 %v70
  %v606 = vunpack.c.l.b16 %v71
  %v607 = vunpack.c.h.b16 %v71
  %v608 = vunpack.c.l.b16 %v72
  %v609 = vunpack.c.h.b16 %v72
  %v610 = vunpack.c.l.b16 %v73
  %v611 = vunpack.c.h.b16 %v73
  %v612 = vunpack.c.l.b16 %v74
  %v613 = vunpack.c.l.b16 %v75
  %v614 = vunpack.c.h.b16 %v75
  %v615 = vunpack.c.l.b16 %v76
  %v616 = vunpack.c.h.b16 %v76
  %v617 = vunpack.c.l.b16 %v77
  %v618 = vunpack.c.h.b16 %v77
  %v619 = vunpack.c.l.b16 %v78
  %v620 = vunpack.c.l.b16 %v79
  %v621 = vunpack.c.h.b16 %v79
  %v622 = vunpack.c.l.b16 %v80
  %v623 = vunpack.c.h.b16 %v80
  %v624 = vunpack.c.l.b16 %v81
  %v625 = vunpack.c.h.b16 %v81
  %v626 = vunpack.c.l.b16 %v82
  %v627 = vunpack.c.l.b16 %v83
  %v628 = vunpack.c.h.b16 %v83
  %v629 = vunpack.c.l.b16 %v84
  %v630 = vunpack.c.h.b16 %v84
  %v631 = vunpack.c.l.b16 %v85
  %v632 = vunpack.c.h.b16 %v85
  %v633 = vunpack.c.l.b16 %v86
  %v634 = vunpack.c.l.b16 %v87
  %v635 = vunpack.c.h.b16 %v87
  %v636 = vunpack.c.l.b16 %v88
  %v637 = vunpack.c.h.b16 %v88
  %v638 = vunpack.c.l.b16 %v89
  %v639 = vunpack.c.h.b16 %v89
  %v640 = vunpack.c.l.b16 %v90
  %v641 = vunpack.c.l.b16 %v91
  %v642 = vunpack.c.h.b16 %v91
  %v643 = vunpack.c.l.b16 %v92
  %v644 = vunpack.c.h.b16 %v92
  %v645 = vunpack.c.l.b16 %v93
  %v646 = vunpack.c.h.b16 %v93
  %v647 = vunpack.c.l.b16 %v94
  %v648 = vunpack.c.l.b16 %v95
  %v649 = vunpack.c.h.b16 %v95
  %v650 = vunpack.c.l.b16 %v96
  %v651 = vunpack.c.h.b16 %v96
  %v652 = vunpack.c.l.b16 %v97
  %v653 = vunpack.c.h.b16 %v97
  %v654 = vunpack.c.l.b16 %v98
  %v655 = vunpack.c.l.b16 %v99
  %v656 = vunpack.c.h.b16 %v99
  %v657 = vunpack.c.l.b16 %v100
  %v658 = vunpack.c.h.b16 %v100
  %v659 = vunpack.c.l.b16 %v101
  %v660 = vunpack.c.h.b16 %v101
  %v661 = vunpack.c.l.b16 %v102
  %v662 = vunpack.c.l.b16 %v103
  %v663 = vunpack.c.h.b16 %v103
  %v664 = vunpack.c.l.b16 %v104
  %v665 = vunpack.c.h.b16 %v104
  %v666 = vunpack.c.l.b16 %v105
  %v667 = vunpack.c.h.b16 %v105
  %v668 = vunpack.c.l.b16 %v106
  %v669 = vunpack.c.l.b16 %v107
  %v670 = vunpack.c.h.b16 %v107
  %v671 = vunpack.c.l.b16 %v108
  %v672 = vunpack.c.h.b16 %v108
  %v673 = vunpack.c.l.b16 %v109
  %v674 = vunpack.c.h.b16 %v109
  %v675 = vunpack.c.l.b16 %v110
  %v676 = vunpack.c.l.b16 %v111
  %v677 = vunpack.c.h.b16 %v111
  %v678 = vunpack.c.l.b16 %v112
  %v679 = vunpack.c.h.b16 %v112
  %v680 = vunpack.c.l.b16 %v113
  %v681 = vunpack.c.h.b16 %v113
  %v682 = vunpack.c.l.b16 %v114
  %v683 = vunpack.c.l.b16 %v115
  %v684 = vunpack.c.h.b16 %v115
  %v685 = vunpack.c.l.b16 %v116
  %v686 = vunpack.c.h.b16 %v116
  %v687 = vunpack.c.l.b16 %v117
  %v688 = vunpack.c.h.b16 %v117
  %v689 = vunpack.c.l.b16 %v118
  %v690 = vunpack.c.l.b16 %v119
  %v691 = vunpack.c.h.b16 %v119
  %v692 = vunpack.c.l.b16 %v120
  %v693 = vunpack.c.h.b16 %v120
  %v694 = vunpack.c.l.b16 %v121
  %v695 = vunpack.c.h.b16 %v121
  %v696 = vunpack.c.l.b16 %v122
  %v697 = vunpack.c.l.b16 %v123
  %v698 = vunpack.c.h.b16 %v123
  %v699 = vunpack.c.l.b16 %v124
  %v700 = vunpack.c.h.b16 %v124
  %v701 = vunpack.c.l.b16 %v125
  %v702 = vunpack.c.h.b16 %v125
  %v703 = vunpack.c.l.b16 %v126
  %v704 = vunpack.c.l.b16 %v127
  %v705 = vunpack.c.h.b16 %v127
  %v706 = vunpack.c.l.b16 %v128
  %v707 = vunpack.c.h.b16 %v128
  %v708 = vunpack.c.l.b16 %v129
  %v709 = vunpack.c.h.b16 %v129
  %v710 = vunpack.c.l.b16 %v130
  %v711 = vunpack.c.l.b16 %v131
  %v712 = vunpack.c.h.b16 %v131
  %v713 = vunpack.c.l.b16 %v132
  %v714 = vunpack.c.h.b16 %v132
  %v715 = vunpack.c.l.b16 %v133
  %v716 = vunpack.c.h.b16 %v133
  %v717 = vunpack.c.l.b16 %v134
  %v718 = vunpack.c.l.b16 %v135
  %v719 = vunpack.c.h.b16 %v135
  %v720 = vunpack.c.l.b16 %v136
  %v721 = vunpack.c.h.b16 %v136
  %v722 = vunpack.c.l.b16 %v137
  %v723 = vunpack.c.h.b16 %v137
  %v724 = vunpack.c.l.b16 %v138
  %v725 = vunpack.c.l.b16 %v139
  %v726 = vunpack.c.h.b16 %v139
  %v727 = vunpack.c.l.b16 %v140
  %v728 = vunpack.c.h.b16 %v140
  %v729 = vunpack.c.l.b16 %v141
  %v730 = vunpack.c.h.b16 %v141
  %v731 = vunpack.c.l.b16 %v142
  %v732 = vunpack.c.l.b16 %v143
  %v733 = vunpack.c.h.b16 %v143
  %v734 = vunpack.c.l.b16 %v144
  %v735 = vunpack.c.h.b16 %v144
  %v736 = vunpack.c.l.b16 %v145
  %v737 = vunpack.c.h.b16 %v145
  %v738 = vunpack.c.l.b16 %v146
  %v739 = vunpack.c.l.b16 %v147
  %v740 = vunpack.c.h.b16 %v147
  %v741 = vunpack.c.l.b16 %v148
  %v742 = vunpack.c.h.b16 %v148
  %v743 = vunpack.c.l.b16 %v149
  %v744 = vunpack.c.h.b16 %v149
  %v745 = vunpack.c.l.b16 %v150
  %v746 = vunpack.c.l.b16 %v151
  %v747 = vunpack.c.h.b16 %v151
  %v748 = vunpack.c.l.b16 %v152
  %v749 = vunpack.c.h.b16 %v152
  %v750 = vunpack.c.l.b16 %v153
  %v751 = vunpack.c.h.b16 %v153
  %v752 = vunpack.c.l.b16 %v154
  %v753 = vpack.c.b16 %v536, %v529
  %v754 = vpack.c.b16 %v537, %v530
  %v755 = vpack.c.b16 %v538, %v531
  %v756 = vpack.c.b16 %v539, %v532
  %v757 = vpack.c.b16 %v540, %v533
  %v758 = vpack.c.b16 %v541, %v534
  %v759 = vpack.c.b16 %v542, %v535
  %v760 = vpack.c.b16 %v550, %v543
  %v761 = vpack.c.b16 %v551, %v544
  %v762 = vpack.c.b16 %v552, %v545
  %v763 = vpack.c.b16 %v553, %v546
  %v764 = vpack.c.b16 %v554, %v547
  %v765 = vpack.c.b16 %v555, %v548
  %v766 = vpack.c.b16 %v556, %v549
  %v767 = vpack.c.b16 %v564, %v557
  %v768 = vpack.c.b16 %v565, %v558
  %v769 = vpack.c.b16 %v566, %v559
  %v770 = vpack.c.b16 %v567, %v560
  %v771 = vpack.c.b16 %v568, %v561
  %v772 = vpack.c.b16 %v569, %v562
  %v773 = vpack.c.b16 %v570, %v563
  %v774 = vpack.c.b16 %v578, %v571
  %v775 = vpack.c.b16 %v579, %v572
  %v776 = vpack.c.b16 %v580, %v573
  %v777 = vpack.c.b16 %v581, %v574
  %v778 = vpack.c.b16 %v582, %v575
  %v779 = vpack.c.b16 %v583, %v576
  %v780 = vpack.c.b16 %v584, %v577
  %v781 = vpack.c.b16 %v592, %v585
  %v782 = vpack.c.b16 %v593, %v586
  %v783 = vpack.c.b16 %v594, %v587
  %v784 = vpack.c.b16 %v595, %v588
  %v785 = vpack.c.b16 %v596, %v589
  %v786 = vpack.c.b16 %v597, %v590
  %v787 = vpack.c.b16 %v598, %v591
  %v788 = vpack.c.b16 %v606, %v599
  %v789 = vpack.c.b16 %v607, %v600
  %v790 = vpack.c.b16 %v608, %v601
  %v791 = vpack.c.b16 %v609, %v602
  %v792 = vpack.c.b16 %v610, %v603
  %v793 = vpack.c.b16 %v611, %v604
  %v794 = vpack.c.b16 %v612, %v605
  %v795 = vpack.c.b16 %v620, %v613
  %v796 = vpack.c.b16 %v621, %v614
  %v797 = vpack.c.b16 %v622, %v615
  %v798 = vpack.c.b16 %v623, %v616
  %v799 = vpack.c.b16 %v624, %v617
  %v800 = vpack.c.b16 %v625, %v618
  %v801 = vpack.c.b16 %v626, %v619
  %v802 = vpack.c.b16 %v634, %v627
  %v803 = vpack.c.b16 %v635, %v628
  %v804 = vpack.c.b16 %v636, %v629
  %v805 = vpack.c.b16 %v637, %v630
  %v806 = vpack.c.b16 %v638, %v631
  %v807 = vpack.c.b16 %v639, %v632
  %v808 = vpack.c.b16 %v640, %v633
  %v809 = vpack.c.b16 %v648, %v641
  %v810 = vpack.c.b16 %v649, %v642
  %v811 = vpack.c.b16 %v650, %v643
  %v812 = vpack.c.b16 %v651, %v644
  %v813 = vpack.c.b16 %v652, %v645
  %v814 = vpack.c.b16 %v653, %v646
  %v815 = vpack.c.b16 %v654, %v647
  %v816 = vpack.c.b16 %v662, %v655
  %v817 = vpack.c.b16 %v663, %v656
  %v818 = vpack.c.b16 %v664, %v657
  %v819 = vpack.c.b16 %v665, %v658
  %v820 = vpack.c.b16 %v666, %v659
  %v821 = vpack.c.b16 %v667, %v660
  %v822 = vpack.c.b16 %v668, %v661
  %v823 = vpack.c.b16 %v676, %v669
  %v824 = vpack.c.b16 %v677, %v670
  %v825 = vpack.c.b16 %v678, %v671
  %v826 = vpack.c.b16 %v679, %v672
  %v827 = vpack.c.b16 %v680, %v673
  %v828 = vpack.c.b16 %v681, %v674
  %v829 = vpack.c.b16 %v682, %v675
  %v830 = vpack.c.b16 %v690, %v683
  %v831 = vpack.c.b16 %v691, %v684
  %v832 = vpack.c.b16 %v692, %v685
  %v833 = vpack.c.b16 %v693, %v686
  %v834 = vpack.c.b16 %v694, %v687
  %v835 = vpack.c.b16 %v695, %v688
  %v836 = vpack.c.b16 %v696, %v689
  %v837 = vpack.c.b16 %v704, %v697
  %v838 = vpack.c.b16 %v705, %v698
  %v839 = vpack.c.b16 %v706, %v699
  %v840 = vpack.c.b16 %v707, %v700
  %v841 = vpack.c.b16 %v708, %v701
  %v842 = vpack.c.b16 %v709, %v702
  %v843 = vpack.c.b16 %v710, %v703
  %v844 = vpack.c.b16 %v718, %v711
  %v845 = vpack.c.b16 %v719, %v712
  %v846 = vpack.c.b16 %v720, %v713
  %v847 = vpack.c.b16 %v721, %v714
  %v848 = vpack.c.b16 %v722, %v715
  %v849 = vpack.c.b16 %v723, %v716
  %v850 = vpack.c.b16 %v724, %v717
  %v851 = vpack.c.b16 %v732, %v725
  %v852 = vpack.c.b16 %v733, %v726
  %v853 = vpack.c.b16 %v734, %v727
  %v854 = vpack.c.b16 %v735, %v728
  %v855 = vpack.c.b16 %v736, %v729
  %v856 = vpack.c.b16 %v737, %v730
  %v857 = vpack.c.b16 %v738, %v731
  %v858 = vpack.c.b16 %v746, %v739
  %v859 = vpack.c.b16 %v747, %v740
  %v860 = vpack.c.b16 %v748, %v741
  %v861 = vpack.c.b16 %v749, %v742
  %v862 = vpack.c.b16 %v750, %v743
  %v863 = vpack.c.b16 %v751, %v744
  %v864 = vpack.c.b16 %v752, %v745
  %v1201 = vunpack.c.l.b16 %v155
  %v1202 = vunpack.c.h.b16 %v155
  %v1203 = vunpack.c.l.b16 %v156
  %v1204 = vunpack.c.h.b16 %v156
  %v1205 = vunpack.c.l.b16 %v157
  %v1206 = vunpack.c.h.b16 %v157
  %v1207 = vunpack.c.l.b16 %v158
  %v1208 = vunpack.c.h.b16 %v158
  %v1209 = vunpack.c.l.b16 %v159
  %v1210 = vunpack.c.h.b16 %v159
  %v1211 = vunpack.c.l.b16 %v160
  %v1212 = vunpack.c.h.b16 %v160
  %v1213 = vunpack.c.l.b16 %v161
  %v1214 = vunpack.c.h.b16 %v161
  %v1215 = vunpack.c.l.b16 %v162
  %v1216 = vunpack.c.h.b16 %v162
  %v1217 = vunpack.c.l.b16 %v163
  %v1218 = vunpack.c.h.b16 %v163
  %v1219 = vunpack.c.l.b16 %v164
  %v1220 = vunpack.c.h.b16 %v164
  %v1221 = vunpack.c.l.b16 %v165
  %v1222 = vunpack.c.h.b16 %v165
  %v1223 = vunpack.c.l.b16 %v166
  %v1224 = vunpack.c.h.b16 %v166
  %v1225 = vunpack.c.l.b16 %v167
  %v1226 = vunpack.c.h.b16 %v167
  %v1227 = vunpack.c.l.b16 %v168
  %v1228 = vunpack.c.h.b16 %v168
  %v1229 = vunpack.c.l.b16 %v169
  %v1230 = vunpack.c.h.b16 %v169
  %v1231 = vunpack.c.l.b16 %v170
  %v1232 = vunpack.c.h.b16 %v170
  %v1233 = vunpack.c.l.b16 %v171
  %v1234 = vunpack.c.h.b16 %v171
  %v1235 = vunpack.c.l.b16 %v172
  %v1236 = vunpack.c.h.b16 %v172
  %v1237 = vunpack.c.l.b16 %v173
  %v1238 = vunpack.c.h.b16 %v173
  %v1239 = vunpack.c.l.b16 %v174
  %v1240 = vunpack.c.h.b16 %v174
  %v1241 = vunpack.c.l.b16 %v175
  %v1242 = vunpack.c.h.b16 %v175
  %v1243 = vunpack.c.l.b16 %v176
  %v1244 = vunpack.c.h.b16 %v176
  %v1245 = vunpack.c.l.b16 %v177
  %v1246 = vunpack.c.h.b16 %v177
  %v1247 = vunpack.c.l.b16 %v178
  %v1248 = vunpack.c.h.b16 %v178
  %v1249 = vunpack.c.l.b16 %v179
  %v1250 = vunpack.c.h.b16 %v179
  %v1251 = vunpack.c.l.b16 %v180
  %v1252 = vunpack.c.h.b16 %v180
  %v1253 = vunpack.c.l.b16 %v181
  %v1254 = vunpack.c.h.b16 %v181
  %v1255 = vunpack.c.l.b16 %v182
  %v1256 = vunpack.c.h.b16 %v182
  %v1257 = vunpack.c.l.b16 %v183
  %v1258 = vunpack.c.h.b16 %v183
  %v1259 = vunpack.c.l.b16 %v184
  %v1260 = vunpack.c.h.b16 %v184
  %v1261 = vunpack.c.l.b16 %v185
  %v1262 = vunpack.c.h.b16 %v185
  %v1263 = vunpack.c.l.b16 %v186
  %v1264 = vunpack.c.h.b16 %v186
  %v1265 = vunpack.c.l.b16 %v187
  %v1266 = vunpack.c.h.b16 %v187
  %v1267 = vunpack.c.l.b16 %v188
  %v1268 = vunpack.c.h.b16 %v188
  %v1269 = vunpack.c.l.b16 %v189
  %v1270 = vunpack.c.h.b16 %v189
  %v1271 = vunpack.c.l.b16 %v190
  %v1272 = vunpack.c.h.b16 %v190
  %v1273 = vunpack.c.l.b16 %v191
  %v1274 = vunpack.c.h.b16 %v191
  %v1275 = vunpack.c.l.b16 %v192
  %v1276 = vunpack.c.h.b16 %v192
  %v1277 = vunpack.c.l.b16 %v193
  %v1278 = vunpack.c.h.b16 %v193
  %v1279 = vunpack.c.l.b16 %v194
  %v1280 = vunpack.c.h.b16 %v194
  %v1281 = vunpack.c.l.b16 %v195
  %v1282 = vunpack.c.h.b16 %v195
  %v1283 = vunpack.c.l.b16 %v196
  %v1284 = vunpack.c.h.b16 %v196
  %v1285 = vunpack.c.l.b16 %v197
  %v1286 = vunpack.c.h.b16 %v197
  %v1287 = vunpack.c.l.b16 %v198
  %v1288 = vunpack.c.h.b16 %v198
  %v1289 = vunpack.c.l.b16 %v199
  %v1290 = vunpack.c.h.b16 %v199
  %v1291 = vunpack.c.l.b16 %v200
  %v1292 = vunpack.c.h.b16 %v200
  %v1293 = vunpack.c.l.b16 %v201
  %v1294 = vunpack.c.h.b16 %v201
  %v1295 = vunpack.c.l.b16 %v202
  %v1296 = vunpack.c.h.b16 %v202
  %v1297 = vunpack.c.l.b16 %v203
  %v1298 = vunpack.c.h.b16 %v203
  %v1299 = vunpack.c.l.b16 %v204
  %v1300 = vunpack.c.h.b16 %v204
  %v1301 = vunpack.c.l.b16 %v205
  %v1302 = vunpack.c.h.b16 %v205
  %v1303 = vunpack.c.l.b16 %v206
  %v1304 = vunpack.c.h.b16 %v206
  %v1305 = vunpack.c.l.b16 %v207
  %v1306 = vunpack.c.h.b16 %v207
  %v1307 = vunpack.c.l.b16 %v208
  %v1308 = vunpack.c.h.b16 %v208
  %v1309 = vunpack.c.l.b16 %v209
  %v1310 = vunpack.c.h.b16 %v209
  %v1311 = vunpack.c.l.b16 %v210
  %v1312 = vunpack.c.h.b16 %v210
  %v1313 = vunpack.c.l.b16 %v211
  %v1314 = vunpack.c.h.b16 %v211
  %v1315 = vunpack.c.l.b16 %v212
  %v1316 = vunpack.c.h.b16 %v212
  %v1317 = vunpack.c.l.b16 %v213
  %v1318 = vunpack.c.h.b16 %v213
  %v1319 = vunpack.c.l.b16 %v214
  %v1320 = vunpack.c.h.b16 %v214
  %v1321 = vunpack.c.l.b16 %v215
  %v1322 = vunpack.c.h.b16 %v215
  %v1323 = vunpack.c.l.b16 %v216
  %v1324 = vunpack.c.h.b16 %v216
  %v1325 = vunpack.c.l.b16 %v217
  %v1326 = vunpack.c.h.b16 %v217
  %v1327 = vunpack.c.l.b16 %v218
  %v1328 = vunpack.c.h.b16 %v218
  %v1329 = vunpack.c.l.b16 %v219
  %v1330 = vunpack.c.h.b16 %v219
  %v1331 = vunpack.c.l.b16 %v220
  %v1332 = vunpack.c.h.b16 %v220
  %v1333 = vunpack.c.l.b16 %v221
  %v1334 = vunpack.c.h.b16 %v221
  %v1335 = vunpack.c.l.b16 %v222
  %v1336 = vunpack.c.h.b16 %v222
  %v1337 = vunpack.c.l.b16 %v223
  %v1338 = vunpack.c.h.b16 %v223
  %v1339 = vunpack.c.l.b16 %v224
  %v1340 = vunpack.c.h.b16 %v224
  %v1341 = vunpack.c.l.b16 %v225
  %v1342 = vunpack.c.h.b16 %v225
  %v1343 = vunpack.c.l.b16 %v226
  %v1344 = vunpack.c.h.b16 %v226
  %v1345 = vunpack.c.l.b16 %v227
  %v1346 = vunpack.c.h.b16 %v227
  %v1347 = vunpack.c.l.b16 %v228
  %v1348 = vunpack.c.h.b16 %v228
  %v1349 = vunpack.c.l.b16 %v229
  %v1350 = vunpack.c.h.b16 %v229
  %v1351 = vunpack.c.l.b16 %v230
  %v1352 = vunpack.c.h.b16 %v230
  %v1353 = vunpack.c.l.b16 %v231
  %v1354 = vunpack.c.h.b16 %v231
  %v1355 = vunpack.c.l.b16 %v232
  %v1356 = vunpack.c.h.b16 %v232
  %v1357 = vunpack.c.l.b16 %v233
  %v1358 = vunpack.c.h.b16 %v233
  %v1359 = vunpack.c.l.b16 %v234
  %v1360 = vunpack.c.h.b16 %v234
  %v1361 = vunpack.c.l.b16 %v235
  %v1362 = vunpack.c.h.b16 %v235
  %v1363 = vunpack.c.l.b16 %v236
  %v1364 = vunpack.c.h.b16 %v236
  %v1365 = vunpack.c.l.b16 %v237
  %v1366 = vunpack.c.h.b16 %v237
  %v1367 = vunpack.c.l.b16 %v238
  %v1368 = vunpack.c.h.b16 %v238
  %v1369 = vunpack.c.l.b16 %v239
  %v1370 = vunpack.c.h.b16 %v239
  %v1371 = vunpack.c.l.b16 %v240
  %v1372 = vunpack.c.h.b16 %v240
  %v1373 = vunpack.c.l.b16 %v241
  %v1374 = vunpack.c.h.b16 %v241
  %v1375 = vunpack.c.l.b16 %v242
  %v1376 = vunpack.c.h.b16 %v242
  %v1377 = vunpack.c.l.b16 %v243
  %v1378 = vunpack.c.h.b16 %v243
  %v1379 = vunpack.c.l.b16 %v244
  %v1380 = vunpack.c.h.b16 %v244
  %v1381 = vunpack.c.l.b16 %v245
  %v1382 = vunpack.c.h.b16 %v245
  %v1383 = vunpack.c.l.b16 %v246
  %v1384 = vunpack.c.h.b16 %v246
  %v1385 = vunpack.c.l.b16 %v247
  %v1386 = vunpack.c.h.b16 %v247
  %v1387 = vunpack.c.l.b16 %v248
  %v1388 = vunpack.c.h.b16 %v248
  %v1389 = vunpack.c.l.b16 %v249
  %v1390 = vunpack.c.h.b16 %v249
  %v1391 = vunpack.c.l.b16 %v250
  %v1392 = vunpack.c.h.b16 %v250
  %v1393 = vunpack.c.l.b16 %v251
  %v1394 = vunpack.c.h.b16 %v251
  %v1395 = vunpack.c.l.b16 %v252
  %v1396 = vunpack.c.h.b16 %v252
  %v1397 = vunpack.c.l.b16 %v253
  %v1398 = vunpack.c.h.b16 %v253
  %v1399 = vunpack.c.l.b16 %v254
  %v1400 = vunpack.c.h.b16 %v254
  %v1401 = vunpack.c.l.b16 %v255
  %v1402 = vunpack.c.h.b16 %v255
  %v1403 = vunpack.c.l.b16 %v256
  %v1404 = vunpack.c.h.b16 %v256
  %v1405 = vunpack.c.l.b16 %v257
  %v1406 = vunpack.c.h.b16 %v257
  %v1407 = vunpack.c.l.b16 %v258
  %v1408 = vunpack.c.h.b16 %v258
  %v1409 = vunpack.c.l.b16 %v259
  %v1410 = vunpack.c.h.b16 %v259
  %v1411 = vunpack.c.l.b16 %v260
  %v1412 = vunpack.c.h.b16 %v260
  %v1413 = vunpack.c.l.b16 %v261
  %v1414 = vunpack.c.h.b16 %v261
  %v1415 = vunpack.c.l.b16 %v262
  %v1416 = vunpack.c.h.b16 %v262
  %v1417 = vunpack.c.l.b16 %v263
  %v1418 = vunpack.c.h.b16 %v263
  %v1419 = vunpack.c.l.b16 %v264
  %v1420 = vunpack.c.h.b16 %v264
  %v1421 = vunpack.c.l.b16 %v265
  %v1422 = vunpack.c.h.b16 %v265
  %v1423 = vunpack.c.l.b16 %v266
  %v1424 = vunpack.c.h.b16 %v266
  %v1425 = vunpack.c.l.b16 %v267
  %v1426 = vunpack.c.h.b16 %v267
  %v1427 = vunpack.c.l.b16 %v268
  %v1428 = vunpack.c.h.b16 %v268
  %v1429 = vunpack.c.l.b16 %v269
  %v1430 = vunpack.c.h.b16 %v269
  %v1431 = vunpack.c.l.b16 %v270
  %v1432 = vunpack.c.h.b16 %v270
  %v1433 = vunpack.c.l.b16 %v271
  %v1434 = vunpack.c.h.b16 %v271
  %v1435 = vunpack.c.l.b16 %v272
  %v1436 = vunpack.c.h.b16 %v272
  %v1437 = vunpack.c.l.b16 %v273
  %v1438 = vunpack.c.h.b16 %v273
  %v1439 = vunpack.c.l.b16 %v274
  %v1440 = vunpack.c.h.b16 %v274
  %v1441 = vunpack.c.l.b16 %v275
  %v1442 = vunpack.c.h.b16 %v275
  %v1443 = vunpack.c.l.b16 %v276
  %v1444 = vunpack.c.h.b16 %v276
  %v1445 = vunpack.c.l.b16 %v277
  %v1446 = vunpack.c.h.b16 %v277
  %v1447 = vunpack.c.l.b16 %v278
  %v1448 = vunpack.c.h.b16 %v278
  %v1449 = vunpack.c.l.b16 %v279
  %v1450 = vunpack.c.h.b16 %v279
  %v1451 = vunpack.c.l.b16 %v280
  %v1452 = vunpack.c.h.b16 %v280
  %v1453 = vunpack.c.l.b16 %v281
  %v1454 = vunpack.c.h.b16 %v281
  %v1455 = vunpack.c.l.b16 %v282
  %v1456 = vunpack.c.h.b16 %v282
  %v1457 = vunpack.c.l.b16 %v283
  %v1458 = vunpack.c.h.b16 %v283
  %v1459 = vunpack.c.l.b16 %v284
  %v1460 = vunpack.c.h.b16 %v284
  %v1461 = vunpack.c.l.b16 %v285
  %v1462 = vunpack.c.h.b16 %v285
  %v1463 = vunpack.c.l.b16 %v286
  %v1464 = vunpack.c.h.b16 %v286
  %v1465 = vunpack.c.l.b16 %v287
  %v1466 = vunpack.c.h.b16 %v287
  %v1467 = vunpack.c.l.b16 %v288
  %v1468 = vunpack.c.h.b16 %v288
  %v1469 = vunpack.c.l.b16 %v289
  %v1470 = vunpack.c.h.b16 %v289
  %v1471 = vunpack.c.l.b16 %v290
  %v1472 = vunpack.c.h.b16 %v290
  %v1473 = vunpack.c.l.b16 %v291
  %v1474 = vunpack.c.h.b16 %v291
  %v1475 = vunpack.c.l.b16 %v292
  %v1476 = vunpack.c.h.b16 %v292
  %v1477 = vunpack.c.l.b16 %v293
  %v1478 = vunpack.c.h.b16 %v293
  %v1479 = vunpack.c.l.b16 %v294
  %v1480 = vunpack.c.h.b16 %v294
  %v1481 = vunpack.c.l.b16 %v295
  %v1482 = vunpack.c.h.b16 %v295
  %v1483 = vunpack.c.l.b16 %v296
  %v1484 = vunpack.c.h.b16 %v296
  %v1485 = vunpack.c.l.b16 %v297
  %v1486 = vunpack.c.h.b16 %v297
  %v1487 = vunpack.c.l.b16 %v298
  %v1488 = vunpack.c.h.b16 %v298
  %v1489 = vunpack.c.l.b16 %v299
  %v1490 = vunpack.c.h.b16 %v299
  %v1491 = vunpack.c.l.b16 %v300
  %v1492 = vunpack.c.h.b16 %v300
  %v1493 = vunpack.c.l.b16 %v301
  %v1494 = vunpack.c.h.b16 %v301
  %v1495 = vunpack.c.l.b16 %v302
  %v1496 = vunpack.c.h.b16 %v302
  %v1497 = vunpack.c.l.b16 %v303
  %v1498 = vunpack.c.h.b16 %v303
  %v1499 = vunpack.c.l.b16 %v304
  %v1500 = vunpack.c.h.b16 %v304
  %v1501 = vunpack.c.l.b16 %v305
  %v1502 = vunpack.c.h.b16 %v305
  %v1503 = vunpack.c.l.b16 %v306
  %v1504 = vunpack.c.h.b16 %v306
  %v1505 = vunpack.c.l.b16 %v307
  %v1506 = vunpack.c.h.b16 %v307
  %v1507 = vunpack.c.l.b16 %v308
  %v1508 = vunpack.c.h.b16 %v308
  %v1509 = vunpack.c.l.b16 %v309
  %v1510 = vunpack.c.h.b16 %v309
  %v1511 = vunpack.c.l.b16 %v310
  %v1512 = vunpack.c.h.b16 %v310
  %v1513 = vunpack.c.l.b16 %v311
  %v1514 = vunpack.c.h.b16 %v311
  %v1515 = vunpack.c.l.b16 %v312
  %v1516 = vunpack.c.h.b16 %v312
  %v1517 = vunpack.c.l.b16 %v313
  %v1518 = vunpack.c.h.b16 %v313
  %v1519 = vunpack.c.l.b16 %v314
  %v1520 = vunpack.c.h.b16 %v314
  %v1521 = vunpack.c.l.b16 %v315
  %v1522 = vunpack.c.h.b16 %v315
  %v1523 = vunpack.c.l.b16 %v316
  %v1524 = vunpack.c.h.b16 %v316
  %v1525 = vunpack.c.l.b16 %v317
  %v1526 = vunpack.c.h.b16 %v317
  %v1527 = vunpack.c.l.b16 %v318
  %v1528 = vunpack.c.h.b16 %v318
  %v1529 = vunpack.c.l.b16 %v319
  %v1530 = vunpack.c.h.b16 %v319
  %v1531 = vunpack.c.l.b16 %v320
  %v1532 = vunpack.c.h.b16 %v320
  %v1533 = vunpack.c.l.b16 %v321
  %v1534 = vunpack.c.h.b16 %v321
  %v1535 = vunpack.c.l.b16 %v322
  %v1536 = vunpack.c.h.b16 %v322
  %v1537 = vunpack.c.l.b16 %v323
  %v1538 = vunpack.c.h.b16 %v323
  %v1539 = vunpack.c.l.b16 %v324
  %v1540 = vunpack.c.h.b16 %v324
  %v1541 = vunpack.c.l.b16 %v325
  %v1542 = vunpack.c.h.b16 %v325
  %v1543 = vunpack.c.l.b16 %v326
  %v1544 = vunpack.c.h.b16 %v326
  %v1545 = vunpack.c.l.b16 %v327
  %v1546 = vunpack.c.h.b16 %v327
  %v1547 = vunpack.c.l.b16 %v328
  %v1548 = vunpack.c.h.b16 %v328
  %v1549 = vunpack.c.l.b16 %v329
  %v1550 = vunpack.c.h.b16 %v329
  %v1551 = vunpack.c.l.b16 %v330
  %v1552 = vunpack.c.h.b16 %v330
  %v1553 = vunpack.c.l.b16 %v331
  %v1554 = vunpack.c.h.b16 %v331
  %v1555 = vunpack.c.l.b16 %v332
  %v1556 = vunpack.c.h.b16 %v332
  %v1557 = vunpack.c.l.b16 %v333
  %v1558 = vunpack.c.h.b16 %v333
  %v1559 = vunpack.c.l.b16 %v334
  %v1560 = vunpack.c.h.b16 %v334
  %v1561 = vunpack.c.l.b16 %v335
  %v1562 = vunpack.c.h.b16 %v335
  %v1563 = vunpack.c.l.b16 %v336
  %v1564 = vunpack.c.h.b16 %v336
  %v1565 = vunpack.c.l.b16 %v337
  %v1566 = vunpack.c.h.b16 %v337
  %v1567 = vunpack.c.l.b16 %v338
  %v1568 = vunpack.c.h.b16 %v338
  %v1569 = vunpack.c.l.b16 %v339
  %v1570 = vunpack.c.h.b16 %v339
  %v1571 = vunpack.c.l.b16 %v340
  %v1572 = vunpack.c.h.b16 %v340
  %v1573 = vunpack.c.l.b16 %v341
  %v1574 = vunpack.c.h.b16 %v341
  %v1575 = vunpack.c.l.b16 %v342
  %v1576 = vunpack.c.h.b16 %v342
  %v1577 = vunpack.c.l.b16 %v343
  %v1578 = vunpack.c.h.b16 %v343
  %v1579 = vunpack.c.l.b16 %v344
  %v1580 = vunpack.c.h.b16 %v344
  %v1581 = vunpack.c.l.b16 %v345
  %v1582 = vunpack.c.h.b16 %v345
  %v1583 = vunpack.c.l.b16 %v346
  %v1584 = vunpack.c.h.b16 %v346
  %v1585 = vunpack.c.l.b16 %v347
  %v1586 = vunpack.c.h.b16 %v347
  %v1587 = vunpack.c.l.b16 %v348
  %v1588 = vunpack.c.h.b16 %v348
  %v1589 = vunpack.c.l.b16 %v349
  %v1590 = vunpack.c.h.b16 %v349
  %v1591 = vunpack.c.l.b16 %v350
  %v1592 = vunpack.c.h.b16 %v350
  %v1593 = vunpack.c.l.b16 %v351
  %v1594 = vunpack.c.h.b16 %v351
  %v1595 = vunpack.c.l.b16 %v352
  %v1596 = vunpack.c.h.b16 %v352
  %v1597 = vunpack.c.l.b16 %v353
  %v1598 = vunpack.c.h.b16 %v353
  %v1599 = vunpack.c.l.b16 %v354
  %v1600 = vunpack.c.h.b16 %v354
  %v1601 = vunpack.c.l.b16 %v355
  %v1602 = vunpack.c.h.b16 %v355
  %v1603 = vunpack.c.l.b16 %v356
  %v1604 = vunpack.c.h.b16 %v356
  %v1605 = vunpack.c.l.b16 %v357
  %v1606 = vunpack.c.h.b16 %v357
  %v1607 = vunpack.c.l.b16 %v358
  %v1608 = vunpack.c.h.b16 %v358
  %v1609 = vunpack.c.l.b16 %v359
  %v1610 = vunpack.c.h.b16 %v359
  %v1611 = vunpack.c.l.b16 %v360
  %v1612 = vunpack.c.h.b16 %v360
  %v1613 = vunpack.c.l.b16 %v361
  %v1614 = vunpack.c.h.b16 %v361
  %v1615 = vunpack.c.l.b16 %v362
  %v1616 = vunpack.c.h.b16 %v362
  %v1617 = vunpack.c.l.b16 %v363
  %v1618 = vunpack.c.h.b16 %v363
  %v1619 = vunpack.c.l.b16 %v364
  %v1620 = vunpack.c.h.b16 %v364
  %v1621 = vunpack.c.l.b16 %v365
  %v1622 = vunpack.c.h.b16 %v365
  %v1623 = vunpack.c.l.b16 %v366
  %v1624 = vunpack.c.h.b16 %v366
  %v1625 = vunpack.c.l.b16 %v367
  %v1626 = vunpack.c.h.b16 %v367
  %v1627 = vunpack.c.l.b16 %v368
  %v1628 = vunpack.c.h.b16 %v368
  %v1629 = vunpack.c.l.b16 %v369
  %v1630 = vunpack.c.h.b16 %v369
  %v1631 = vunpack.c.l.b16 %v370
  %v1632 = vunpack.c.h.b16 %v370
  %v1633 = vunpack.c.l.b16 %v371
  %v1634 = vunpack.c.h.b16 %v371
  %v1635 = vunpack.c.l.b16 %v372
  %v1636 = vunpack.c.h.b16 %v372
  %v1637 = vunpack.c.l.b16 %v373
  %v1638 = vunpack.c.h.b16 %v373
  %v1639 = vunpack.c.l.b16 %v374
  %v1640 = vunpack.c.h.b16 %v374
  %v1641 = vunpack.c.l.b16 %v375
  %v1642 = vunpack.c.h.b16 %v375
  %v1643 = vunpack.c.l.b16 %v376
  %v1644 = vunpack.c.h.b16 %v376
  %v1645 = vunpack.c.l.b16 %v377
  %v1646 = vunpack.c.h.b16 %v377
  %v1647 = vunpack.c.l.b16 %v378
  %v1648 = vunpack.c.h.b16 %v378
  %v1649 = vpack.c.b16 %v1205, %v1201
  %v1650 = vpack.c.b16 %v1206, %v1202
  %v1651 = vpack.c.b16 %v1207, %v1203
  %v1652 = vpack.c.b16 %v1208, %v1204
  %v1653 = vpack.c.b16 %v1213, %v1209
  %v1654 = vpack.c.b16 %v1214, %v1210
  %v1655 = vpack.c.b16 %v1215, %v1211
  %v1656 = vpack.c.b16 %v1216, %v1212
  %v1657 = vpack.c.b16 %v1221, %v1217
  %v1658 = vpack.c.b16 %v1222, %v1218
  %v1659 = vpack.c.b16 %v1223, %v1219
  %v1660 = vpack.c.b16 %v1224, %v1220
  %v1661 = vpack.c.b16 %v1229, %v1225
  %v1662 = vpack.c.b16 %v1230, %v1226
  %v1663 = vpack.c.b16 %v1231, %v1227
  %v1664 = vpack.c.b16 %v1232, %v1228
  %v1665 = vpack.c.b16 %v1237, %v1233
  %v1666 = vpack.c.b16 %v1238, %v1234
  %v1667 = vpack.c.b16 %v1239, %v1235
  %v1668 = vpack.c.b16 %v1240, %v1236
  %v1669 = vpack.c.b16 %v1245, %v1241
  %v1670 = vpack.c.b16 %v1246, %v1242
  %v1671 = vpack.c.b16 %v1247, %v1243
  %v1672 = vpack.c.b16 %v1248, %v1244
  %v1673 = vpack.c.b16 %v1253, %v1249
  %v1674 = vpack.c.b16 %v1254, %v1250
  %v1675 = vpack.c.b16 %v1255, %v1251
  %v1676 = vpack.c.b16 %v1256, %v1252
  %v1677 = vpack.c.b16 %v1261, %v1257
  %v1678 = vpack.c.b16 %v1262, %v1258
  %v1679 = vpack.c.b16 %v1263, %v1259
  %v1680 = vpack.c.b16 %v1264, %v1260
  %v1681 = vpack.c.b16 %v1269, %v1265
  %v1682 = vpack.c.b16 %v1270, %v1266
  %v1683 = vpack.c.b16 %v1271, %v1267
  %v1684 = vpack.c.b16 %v1272, %v1268
  %v1685 = vpack.c.b16 %v1277, %v1273
  %v1686 = vpack.c.b16 %v1278, %v1274
  %v1687 = vpack.c.b16 %v1279, %v1275
  %v1688 = vpack.c.b16 %v1280, %v1276
  %v1689 = vpack.c.b16 %v1285, %v1281
  %v1690 = vpack.c.b16 %v1286, %v1282
  %v1691 = vpack.c.b16 %v1287, %v1283
  %v1692 = vpack.c.b16 %v1288, %v1284
  %v1693 = vpack.c.b16 %v1293, %v1289
  %v1694 = vpack.c.b16 %v1294, %v1290
  %v1695 = vpack.c.b16 %v1295, %v1291
  %v1696 = vpack.c.b16 %v1296, %v1292
  %v1697 = vpack.c.b16 %v1301, %v1297
  %v1698 = vpack.c.b16 %v1302, %v1298
  %v1699 = vpack.c.b16 %v1303, %v1299
  %v1700 = vpack.c.b16 %v1304, %v1300
  %v1701 = vpack.c.b16 %v1309, %v1305
  %v1702 = vpack.c.b16 %v1310, %v1306
  %v1703 = vpack.c.b16 %v1311, %v1307
  %v1704 = vpack.c.b16 %v1312, %v1308
  %v1705 = vpack.c.b16 %v1317, %v1313
  %v1706 = vpack.c.b16 %v1318, %v1314
  %v1707 = vpack.c.b16 %v1319, %v1315
  %v1708 = vpack.c.b16 %v1320, %v1316
  %v1709 = vpack.c.b16 %v1325, %v1321
  %v1710 = vpack.c.b16 %v1326, %v1322
  %v1711 = vpack.c.b16 %v1327, %v1323
  %v1712 = vpack.c.b16 %v1328, %v1324
  %v1713 = vpack.c.b16 %v1333, %v1329
  %v1714 = vpack.c.b16 %v1334, %v1330
  %v1715 = vpack.c.b16 %v1335, %v1331
  %v1716 = vpack.c.b16 %v1336, %v1332
  %v1717 = vpack.c.b16 %v1341, %v1337
  %v1718 = vpack.c.b16 %v1342, %v1338
  %v1719 = vpack.c.b16 %v1343, %v1339
  %v1720 = vpack.c.b16 %v1344, %v1340
  %v1721 = vpack.c.b16 %v1349, %v1345
  %v1722 = vpack.c.b16 %v1350, %v1346
  %v1723 = vpack.c.b16 %v1351, %v1347
  %v1724 = vpack.c.b16 %v1352, %v1348
  %v1725 = vpack.c.b16 %v1357, %v1353
  %v1726 = vpack.c.b16 %v1358, %v1354
  %v1727 = vpack.c.b16 %v1359, %v1355
  %v1728 = vpack.c.b16 %v1360, %v1356
  %v1729 = vpack.c.b16 %v1365, %v1361
  %v1730 = vpack.c.b16 %v1366, %v1362
  %v1731 = vpack.c.b16 %v1367, %v1363
  %v1732 = vpack.c.b16 %v1368, %v1364
  %v1733 = vpack.c.b16 %v1373, %v1369
  %v1734 = vpack.c.b16 %v1374, %v1370
  %v1735 = vpack.c.b16 %v1375, %v1371
  %v1736 = vpack.c.b16 %v1376, %v1372
  %v1737 = vpack.c.b16 %v1381, %v1377
  %v1738 = vpack.c.b16 %v1382, %v1378
  %v1739 = vpack.c.b16 %v1383, %v1379
  %v1740 = vpack.c.b16 %v1384, %v1380
  %v1741 = vpack.c.b16 %v1389, %v1385
  %v1742 = vpack.c.b16 %v1390, %v1386
  %v1743 = vpack.c.b16 %v1391, %v1387
  %v1744 = vpack.c.b16 %v1392, %v1388
  %v1745 = vpack.c.b16 %v1397, %v1393
  %v1746 = vpack.c.b16 %v1398, %v1394
  %v1747 = vpack.c.b16 %v1399, %v1395
  %v1748 = vpack.c.b16 %v1400, %v1396
  %v1749 = vpack.c.b16 %v1405, %v1401
  %v1750 = vpack.c.b16 %v1406, %v1402
  %v1751 = vpack.c.b16 %v1407, %v1403
  %v1752 = vpack.c.b16 %v1408, %v1404
  %v1753 = vpack.c.b16 %v1413, %v1409
  %v1754 = vpack.c.b16 %v1414, %v1410
  %v1755 = vpack.c.b16 %v1415, %v1411
  %v1756 = vpack.c.b16 %v1416, %v1412
  %v1757 = vpack.c.b16 %v1421, %v1417
  %v1758 = vpack.c.b16 %v1422, %v1418
  %v1759 = vpack.c.b16 %v1423, %v1419
  %v1760 = vpack.c.b16 %v1424, %v1420
  %v1761 = vpack.c.b16 %v1429, %v1425
  %v1762 = vpack.c.b16 %v1430, %v1426
  %v1763 = vpack.c.b16 %v1431, %v1427
  %v1764 = vpack.c.b16 %v1432, %v1428
  %v1765 = vpack.c.b16 %v1437, %v1433
  %v1766 = vpack.c.b16 %v1438, %v1434
  %v1767 = vpack.c.b16 %v1439, %v1435
  %v1768 = vpack.c.b16 %v1440, %v1436
  %v1769 = vpack.c.b16 %v1445, %v1441
  %v1770 = vpack.c.b16 %v1446, %v1442
  %v1771 = vpack.c.b16 %v1447, %v1443
  %v1772 = vpack.c.b16 %v1448, %v1444
  %v1773 = vpack.c.b16 %v1453, %v1449
  %v1774 = vpack.c.b16 %v1454, %v1450
  %v1775 = vpack.c.b16 %v1455, %v1451
  %v1776 = vpack.c.b16 %v1456, %v1452
  %v1777 = vpack.c.b16 %v1461, %v1457
  %v1778 = vpack.c.b16 %v1462, %v1458
  %v1779 = vpack.c.b16 %v1463, %v1459
  %v1780 = vpack.c.b16 %v1464, %v1460
  %v1781 = vpack.c.b16 %v1469, %v1465
  %v1782 = vpack.c.b16 %v1470, %v1466
  %v1783 = vpack.c.b16 %v1471, %v1467
  %v1784 = vpack.c.b16 %v1472, %v1468
  %v1785 = vpack.c.b16 %v1477, %v1473
  %v1786 = vpack.c.b16 %v1478, %v1474
  %v1787 = vpack.c.b16 %v1479, %v1475
  %v1788 = vpack.c.b16 %v1480, %v1476
  %v1789 = vpack.c.b16 %v1485, %v1481
  %v1790 = vpack.c.b16 %v1486, %v1482
  %v1791 = vpack.c.b16 %v1487, %v1483
  %v1792 = vpack.c.b16 %v1488, %v1484
  %v1793 = vpack.c.b16 %v1493, %v1489
  %v1794 = vpack.c.b16 %v1494, %v1490
  %v1795 = vpack.c.b16 %v1495, %v1491
  %v1796 = vpack.c.b16 %v1496, %v1492
  %v1797 = vpack.c.b16 %v1501, %v1497
  %v1798 = vpack.c.b16 %v1502, %v1498
  %v1799 = vpack.c.b16 %v1503, %v1499
  %v1800 = vpack.c.b16 %v1504, %v1500
  %v1801 = vpack.c.b16 %v1509, %v1505
  %v1802 = vpack.c.b16 %v1510, %v1506
  %v1803 = vpack.c.b16 %v1511, %v1507
  %v1804 = vpack.c.b16 %v1512, %v1508
  %v1805 = vpack.c.b16 %v1517, %v1513
  %v1806 = vpack.c.b16 %v1518, %v1514
  %v1807 = vpack.c.b16 %v1519, %v1515
  %v1808 = vpack.c.b16 %v1520, %v1516
  %v1809 = vpack.c.b16 %v1525, %v1521
  %v1810 = vpack.c.b16 %v1526, %v1522
  %v1811 = vpack.c.b16 %v1527, %v1523
  %v1812 = vpack.c.b16 %v1528, %v1524
  %v1813 = vpack.c.b16 %v1533, %v1529
  %v1814 = vpack.c.b16 %v1534, %v1530
  %v1815 = vpack.c.b16 %v1535, %v1531
  %v1816 = vpack.c.b16 %v1536, %v1532
  %v1817 = vpack.c.b16 %v1541, %v1537
  %v1818 = vpack.c.b16 %v1542, %v1538
  %v1819 = vpack.c.b16 %v1543, %v1539
  %v1820 = vpack.c.b16 %v1544, %v1540
  %v1821 = vpack.c.b16 %v1549, %v1545
  %v1822 = vpack.c.b16 %v1550, %v1546
  %v1823 = vpack.c.b16 %v1551, %v1547
  %v1824 = vpack.c.b16 %v1552, %v1548
  %v1825 = vpack.c.b16 %v1557, %v1553
  %v1826 = vpack.c.b16 %v1558, %v1554
  %v1827 = vpack.c.b16 %v1559, %v1555
  %v1828 = vpack.c.b16 %v1560, %v1556
  %v1829 = vpack.c.b16 %v1565, %v1561
  %v1830 = vpack.c.b16 %v1566, %v1562
  %v1831 = vpack.c.b16 %v1567, %v1563
  %v1832 = vpack.c.b16 %v1568, %v1564
  %v1833 = vpack.c.b16 %v1573, %v1569
  %v1834 = vpack.c.b16 %v1574, %v1570
  %v1835 = vpack.c.b16 %v1575, %v1571
  %v1836 = vpack.c.b16 %v1576, %v1572
  %v1837 = vpack.c.b16 %v1581, %v1577
  %v1838 = vpack.c.b16 %v1582, %v1578
  %v1839 = vpack.c.b16 %v1583, %v1579
  %v1840 = vpack.c.b16 %v1584, %v1580
  %v1841 = vpack.c.b16 %v1589, %v1585
  %v1842 = vpack.c.b16 %v1590, %v1586
  %v1843 = vpack.c.b16 %v1591, %v1587
  %v1844 = vpack.c.b16 %v1592, %v1588
  %v1845 = vpack.c.b16 %v1597, %v1593
  %v1846 = vpack.c.b16 %v1598, %v1594
  %v1847 = vpack.c.b16 %v1599, %v1595
  %v1848 = vpack.c.b16 %v1600, %v1596
  %v1849 = vpack.c.b16 %v1605, %v1601
  %v1850 = vpack.c.b16 %v1606, %v1602
  %v1851 = vpack.c.b16 %v1607, %v1603
  %v1852 = vpack.c.b16 %v1608, %v1604
  %v1853 = vpack.c.b16 %v1613, %v1609
  %v1854 = vpack.c.b16 %v1614, %v1610
  %v1855 = vpack.c.b16 %v1615, %v1611
  %v1856 = vpack.c.b16 %v1616, %v1612
  %v1857 = vpack.c.b16 %v1621, %v1617
  %v1858 = vpack.c.b16 %v1622, %v1618
  %v1859 = vpack.c.b16 %v1623, %v1619
  %v1860 = vpack.c.b16 %v1624, %v1620
  %v1861 = vpack.c.b16 %v1629, %v1625
  %v1862 = vpack.c.b16 %v1630, %v1626
  %v1863 = vpack.c.b16 %v1631, %v1627
  %v1864 = vpack.c.b16 %v1632, %v1628
  %v1865 = vpack.c.b16 %v1637, %v1633
  %v1866 = vpack.c.b16 %v1638, %v1634
  %v1867 = vpack.c.b16 %v1639, %v1635
  %v1868 = vpack.c.b16 %v1640, %v1636
  %v1869 = vpack.c.b16 %v1645, %v1641
  %v1870 = vpack.c.b16 %v1646, %v1642
  %v1871 = vpack.c.b16 %v1647, %v1643
  %v1872 = vpack.c.b16 %v1648, %v1644
  %2097 = vmatprep.subr.bf16.mxu0 %v1678
  %2098 = vmatpush1.bf16.msra.mxu0 %v1677
  %2099 = vmatprep.subr.bf16.mxu0 %v1674
  %2100 = vmatpush1.bf16.msra.mxu0 %v1673
  %2101 = vmatprep.subr.bf16.mxu0 %v1670
  %2102 = vmatpush1.bf16.msra.mxu0 %v1669
  %2103 = vmatprep.subr.bf16.mxu0 %v1666
  %2104 = vmatpush1.bf16.msra.mxu0 %v1665
  %2105 = vmatprep.subr.bf16.mxu0 %v1662
  %2106 = vmatpush1.bf16.msra.mxu0 %v1661
  %2107 = vmatprep.subr.bf16.mxu0 %v1658
  %2108 = vmatpush1.bf16.msra.mxu0 %v1657
  %2109 = vmatprep.subr.bf16.mxu0 %v1654
  %2110 = vmatpush1.bf16.msra.mxu0 %v1653
  %2111 = vmatprep.subr.bf16.mxu0 %v1650
  %2112 = vmatpush1.bf16.msra.mxu0 %v1649
  %2113 = vmatprep.subr.bf16.mxu0 %v1710
  %2114 = vmatpush2.bf16.msra.mxu0 %v1709
  %2115 = vmatprep.subr.bf16.mxu0 %v1706
  %2116 = vmatpush2.bf16.msra.mxu0 %v1705
  %2117 = vmatprep.subr.bf16.mxu0 %v1702
  %2118 = vmatpush2.bf16.msra.mxu0 %v1701
  %2119 = vmatprep.subr.bf16.mxu0 %v1698
  %2120 = vmatpush2.bf16.msra.mxu0 %v1697
  %2121 = vmatprep.subr.bf16.mxu0 %v1694
  %2122 = vmatpush2.bf16.msra.mxu0 %v1693
  %2123 = vmatprep.subr.bf16.mxu0 %v1690
  %2124 = vmatpush2.bf16.msra.mxu0 %v1689
  %2125 = vmatprep.subr.bf16.mxu0 %v1686
  %2126 = vmatpush2.bf16.msra.mxu0 %v1685
  %2127 = vmatprep.subr.bf16.mxu0 %v1682
  %2128 = vmatpush2.bf16.msra.mxu0 %v1681
  %2129 = vmatprep.mubr.bf16.mxu0 %v754
  %2130 = vmatmul.mubr.bf16.gmra.mxu0 %v753
  %v2131 = vpop.f32.mrf.mxu0
  %v2132 = vadd.f32 %v384, %v2131
  %v2133 = vpop.f32.mrf.mxu0
  %v2134 = vadd.f32 %v388, %v2133
  %v2135 = vpop.f32.mrf.mxu0
  %v2136 = vadd.f32 %v384, %v2135
  %v2137 = vpop.f32.mrf.mxu0
  %v2138 = vadd.f32 %v388, %v2137
  %2139 = vmatprep.mubr.bf16.mxu0 %v761
  %2140 = vmatmul.mubr.bf16.gmra.mxu0 %v760
  %v2141 = vpop.f32.mrf.mxu0
  %v2142 = vadd.f32 %v384, %v2141
  %v2143 = vpop.f32.mrf.mxu0
  %v2144 = vadd.f32 %v388, %v2143
  %v2145 = vpop.f32.mrf.mxu0
  %v2146 = vadd.f32 %v384, %v2145
  %v2147 = vpop.f32.mrf.mxu0
  %v2148 = vadd.f32 %v388, %v2147
  %2149 = vmatprep.mubr.bf16.mxu0 %v768
  %2150 = vmatmul.mubr.bf16.gmra.mxu0 %v767
  %v2151 = vpop.f32.mrf.mxu0
  %v2152 = vadd.f32 %v384, %v2151
  %v2153 = vpop.f32.mrf.mxu0
  %v2154 = vadd.f32 %v388, %v2153
  %v2155 = vpop.f32.mrf.mxu0
  %v2156 = vadd.f32 %v384, %v2155
  %v2157 = vpop.f32.mrf.mxu0
  %v2158 = vadd.f32 %v388, %v2157
  %2159 = vmatprep.mubr.bf16.mxu0 %v775
  %2160 = vmatmul.mubr.bf16.gmra.mxu0 %v774
  %v2161 = vpop.f32.mrf.mxu0
  %v2162 = vadd.f32 %v384, %v2161
  %v2163 = vpop.f32.mrf.mxu0
  %v2164 = vadd.f32 %v388, %v2163
  %v2165 = vpop.f32.mrf.mxu0
  %v2166 = vadd.f32 %v384, %v2165
  %v2167 = vpop.f32.mrf.mxu0
  %v2168 = vadd.f32 %v388, %v2167
  %2169 = vmatprep.mubr.bf16.mxu0 %v782
  %2170 = vmatmul.mubr.bf16.gmra.mxu0 %v781
  %v2171 = vpop.f32.mrf.mxu0
  %v2172 = vadd.f32 %v384, %v2171
  %v2173 = vpop.f32.mrf.mxu0
  %v2174 = vadd.f32 %v388, %v2173
  %v2175 = vpop.f32.mrf.mxu0
  %v2176 = vadd.f32 %v384, %v2175
  %v2177 = vpop.f32.mrf.mxu0
  %v2178 = vadd.f32 %v388, %v2177
  %2179 = vmatprep.mubr.bf16.mxu0 %v789
  %2180 = vmatmul.mubr.bf16.gmra.mxu0 %v788
  %v2181 = vpop.f32.mrf.mxu0
  %v2182 = vadd.f32 %v384, %v2181
  %v2183 = vpop.f32.mrf.mxu0
  %v2184 = vadd.f32 %v388, %v2183
  %v2185 = vpop.f32.mrf.mxu0
  %v2186 = vadd.f32 %v384, %v2185
  %v2187 = vpop.f32.mrf.mxu0
  %v2188 = vadd.f32 %v388, %v2187
  %2189 = vmatprep.mubr.bf16.mxu0 %v796
  %2190 = vmatmul.mubr.bf16.gmra.mxu0 %v795
  %v2191 = vpop.f32.mrf.mxu0
  %v2192 = vadd.f32 %v384, %v2191
  %v2193 = vpop.f32.mrf.mxu0
  %v2194 = vadd.f32 %v388, %v2193
  %v2195 = vpop.f32.mrf.mxu0
  %v2196 = vadd.f32 %v384, %v2195
  %v2197 = vpop.f32.mrf.mxu0
  %v2198 = vadd.f32 %v388, %v2197
  %2199 = vmatprep.mubr.bf16.mxu0 %v803
  %2200 = vmatmul.mubr.bf16.gmra.mxu0 %v802
  %v2201 = vpop.f32.mrf.mxu0
  %v2202 = vadd.f32 %v384, %v2201
  %v2203 = vpop.f32.mrf.mxu0
  %v2204 = vadd.f32 %v388, %v2203
  %v2205 = vpop.f32.mrf.mxu0
  %v2206 = vadd.f32 %v384, %v2205
  %v2207 = vpop.f32.mrf.mxu0
  %v2208 = vadd.f32 %v388, %v2207
  %2209 = vmatprep.mubr.bf16.mxu0 %v810
  %2210 = vmatmul.mubr.bf16.gmra.mxu0 %v809
  %v2211 = vpop.f32.mrf.mxu0
  %v2212 = vadd.f32 %v384, %v2211
  %v2213 = vpop.f32.mrf.mxu0
  %v2214 = vadd.f32 %v388, %v2213
  %v2215 = vpop.f32.mrf.mxu0
  %v2216 = vadd.f32 %v384, %v2215
  %v2217 = vpop.f32.mrf.mxu0
  %v2218 = vadd.f32 %v388, %v2217
  %2219 = vmatprep.mubr.bf16.mxu0 %v817
  %2220 = vmatmul.mubr.bf16.gmra.mxu0 %v816
  %v2221 = vpop.f32.mrf.mxu0
  %v2222 = vadd.f32 %v384, %v2221
  %v2223 = vpop.f32.mrf.mxu0
  %v2224 = vadd.f32 %v388, %v2223
  %v2225 = vpop.f32.mrf.mxu0
  %v2226 = vadd.f32 %v384, %v2225
  %v2227 = vpop.f32.mrf.mxu0
  %v2228 = vadd.f32 %v388, %v2227
  %2229 = vmatprep.mubr.bf16.mxu0 %v824
  %2230 = vmatmul.mubr.bf16.gmra.mxu0 %v823
  %v2231 = vpop.f32.mrf.mxu0
  %v2232 = vadd.f32 %v384, %v2231
  %v2233 = vpop.f32.mrf.mxu0
  %v2234 = vadd.f32 %v388, %v2233
  %v2235 = vpop.f32.mrf.mxu0
  %v2236 = vadd.f32 %v384, %v2235
  %v2237 = vpop.f32.mrf.mxu0
  %v2238 = vadd.f32 %v388, %v2237
  %2239 = vmatprep.mubr.bf16.mxu0 %v831
  %2240 = vmatmul.mubr.bf16.gmra.mxu0 %v830
  %v2241 = vpop.f32.mrf.mxu0
  %v2242 = vadd.f32 %v384, %v2241
  %v2243 = vpop.f32.mrf.mxu0
  %v2244 = vadd.f32 %v388, %v2243
  %v2245 = vpop.f32.mrf.mxu0
  %v2246 = vadd.f32 %v384, %v2245
  %v2247 = vpop.f32.mrf.mxu0
  %v2248 = vadd.f32 %v388, %v2247
  %2249 = vmatprep.mubr.bf16.mxu0 %v838
  %2250 = vmatmul.mubr.bf16.gmra.mxu0 %v837
  %v2251 = vpop.f32.mrf.mxu0
  %v2252 = vadd.f32 %v384, %v2251
  %v2253 = vpop.f32.mrf.mxu0
  %v2254 = vadd.f32 %v388, %v2253
  %v2255 = vpop.f32.mrf.mxu0
  %v2256 = vadd.f32 %v384, %v2255
  %v2257 = vpop.f32.mrf.mxu0
  %v2258 = vadd.f32 %v388, %v2257
  %2259 = vmatprep.mubr.bf16.mxu0 %v845
  %2260 = vmatmul.mubr.bf16.gmra.mxu0 %v844
  %v2261 = vpop.f32.mrf.mxu0
  %v2262 = vadd.f32 %v384, %v2261
  %v2263 = vpop.f32.mrf.mxu0
  %v2264 = vadd.f32 %v388, %v2263
  %v2265 = vpop.f32.mrf.mxu0
  %v2266 = vadd.f32 %v384, %v2265
  %v2267 = vpop.f32.mrf.mxu0
  %v2268 = vadd.f32 %v388, %v2267
  %2269 = vmatprep.mubr.bf16.mxu0 %v852
  %2270 = vmatmul.mubr.bf16.gmra.mxu0 %v851
  %v2271 = vpop.f32.mrf.mxu0
  %v2272 = vadd.f32 %v384, %v2271
  %v2273 = vpop.f32.mrf.mxu0
  %v2274 = vadd.f32 %v388, %v2273
  %v2275 = vpop.f32.mrf.mxu0
  %v2276 = vadd.f32 %v384, %v2275
  %v2277 = vpop.f32.mrf.mxu0
  %v2278 = vadd.f32 %v388, %v2277
  %2279 = vmatprep.mubr.bf16.mxu0 %v859
  %2280 = vmatmul.mubr.bf16.gmra.mxu0 %v858
  %v2281 = vpop.f32.mrf.mxu0
  %v2282 = vadd.f32 %v384, %v2281
  %v2283 = vpop.f32.mrf.mxu0
  %v2284 = vadd.f32 %v388, %v2283
  %v2285 = vpop.f32.mrf.mxu0
  %v2286 = vadd.f32 %v384, %v2285
  %v2287 = vpop.f32.mrf.mxu0
  %v2288 = vadd.f32 %v388, %v2287
  %2289 = vdwg.mxu0
  %2290 = vmatprep.subr.bf16.mxu0 %v1742
  %2291 = vmatpush1.bf16.msra.mxu0 %v1741
  %2292 = vmatprep.subr.bf16.mxu0 %v1738
  %2293 = vmatpush1.bf16.msra.mxu0 %v1737
  %2294 = vmatprep.subr.bf16.mxu0 %v1734
  %2295 = vmatpush1.bf16.msra.mxu0 %v1733
  %2296 = vmatprep.subr.bf16.mxu0 %v1730
  %2297 = vmatpush1.bf16.msra.mxu0 %v1729
  %2298 = vmatprep.subr.bf16.mxu0 %v1726
  %2299 = vmatpush1.bf16.msra.mxu0 %v1725
  %2300 = vmatprep.subr.bf16.mxu0 %v1722
  %2301 = vmatpush1.bf16.msra.mxu0 %v1721
  %2302 = vmatprep.subr.bf16.mxu0 %v1718
  %2303 = vmatpush1.bf16.msra.mxu0 %v1717
  %2304 = vmatprep.subr.bf16.mxu0 %v1714
  %2305 = vmatpush1.bf16.msra.mxu0 %v1713
  %2306 = vmatprep.subr.bf16.mxu0 %v1774
  %2307 = vmatpush2.bf16.msra.mxu0 %v1773
  %2308 = vmatprep.subr.bf16.mxu0 %v1770
  %2309 = vmatpush2.bf16.msra.mxu0 %v1769
  %2310 = vmatprep.subr.bf16.mxu0 %v1766
  %2311 = vmatpush2.bf16.msra.mxu0 %v1765
  %2312 = vmatprep.subr.bf16.mxu0 %v1762
  %2313 = vmatpush2.bf16.msra.mxu0 %v1761
  %2314 = vmatprep.subr.bf16.mxu0 %v1758
  %2315 = vmatpush2.bf16.msra.mxu0 %v1757
  %2316 = vmatprep.subr.bf16.mxu0 %v1754
  %2317 = vmatpush2.bf16.msra.mxu0 %v1753
  %2318 = vmatprep.subr.bf16.mxu0 %v1750
  %2319 = vmatpush2.bf16.msra.mxu0 %v1749
  %2320 = vmatprep.subr.bf16.mxu0 %v1746
  %2321 = vmatpush2.bf16.msra.mxu0 %v1745
  %2322 = vmatprep.mubr.bf16.mxu0 %v756
  %2323 = vmatmul.mubr.bf16.gmra.mxu0 %v755
  %v2324 = vpop.f32.mrf.mxu0
  %v2325 = vadd.f32 %v2132, %v2324
  %v2326 = vpop.f32.mrf.mxu0
  %v2327 = vadd.f32 %v2134, %v2326
  %v2328 = vpop.f32.mrf.mxu0
  %v2329 = vadd.f32 %v2136, %v2328
  %v2330 = vpop.f32.mrf.mxu0
  %v2331 = vadd.f32 %v2138, %v2330
  %2332 = vmatprep.mubr.bf16.mxu0 %v763
  %2333 = vmatmul.mubr.bf16.gmra.mxu0 %v762
  %v2334 = vpop.f32.mrf.mxu0
  %v2335 = vadd.f32 %v2142, %v2334
  %v2336 = vpop.f32.mrf.mxu0
  %v2337 = vadd.f32 %v2144, %v2336
  %v2338 = vpop.f32.mrf.mxu0
  %v2339 = vadd.f32 %v2146, %v2338
  %v2340 = vpop.f32.mrf.mxu0
  %v2341 = vadd.f32 %v2148, %v2340
  %2342 = vmatprep.mubr.bf16.mxu0 %v770
  %2343 = vmatmul.mubr.bf16.gmra.mxu0 %v769
  %v2344 = vpop.f32.mrf.mxu0
  %v2345 = vadd.f32 %v2152, %v2344
  %v2346 = vpop.f32.mrf.mxu0
  %v2347 = vadd.f32 %v2154, %v2346
  %v2348 = vpop.f32.mrf.mxu0
  %v2349 = vadd.f32 %v2156, %v2348
  %v2350 = vpop.f32.mrf.mxu0
  %v2351 = vadd.f32 %v2158, %v2350
  %2352 = vmatprep.mubr.bf16.mxu0 %v777
  %2353 = vmatmul.mubr.bf16.gmra.mxu0 %v776
  %v2354 = vpop.f32.mrf.mxu0
  %v2355 = vadd.f32 %v2162, %v2354
  %v2356 = vpop.f32.mrf.mxu0
  %v2357 = vadd.f32 %v2164, %v2356
  %v2358 = vpop.f32.mrf.mxu0
  %v2359 = vadd.f32 %v2166, %v2358
  %v2360 = vpop.f32.mrf.mxu0
  %v2361 = vadd.f32 %v2168, %v2360
  %2362 = vmatprep.mubr.bf16.mxu0 %v784
  %2363 = vmatmul.mubr.bf16.gmra.mxu0 %v783
  %v2364 = vpop.f32.mrf.mxu0
  %v2365 = vadd.f32 %v2172, %v2364
  %v2366 = vpop.f32.mrf.mxu0
  %v2367 = vadd.f32 %v2174, %v2366
  %v2368 = vpop.f32.mrf.mxu0
  %v2369 = vadd.f32 %v2176, %v2368
  %v2370 = vpop.f32.mrf.mxu0
  %v2371 = vadd.f32 %v2178, %v2370
  %2372 = vmatprep.mubr.bf16.mxu0 %v791
  %2373 = vmatmul.mubr.bf16.gmra.mxu0 %v790
  %v2374 = vpop.f32.mrf.mxu0
  %v2375 = vadd.f32 %v2182, %v2374
  %v2376 = vpop.f32.mrf.mxu0
  %v2377 = vadd.f32 %v2184, %v2376
  %v2378 = vpop.f32.mrf.mxu0
  %v2379 = vadd.f32 %v2186, %v2378
  %v2380 = vpop.f32.mrf.mxu0
  %v2381 = vadd.f32 %v2188, %v2380
  %2382 = vmatprep.mubr.bf16.mxu0 %v798
  %2383 = vmatmul.mubr.bf16.gmra.mxu0 %v797
  %v2384 = vpop.f32.mrf.mxu0
  %v2385 = vadd.f32 %v2192, %v2384
  %v2386 = vpop.f32.mrf.mxu0
  %v2387 = vadd.f32 %v2194, %v2386
  %v2388 = vpop.f32.mrf.mxu0
  %v2389 = vadd.f32 %v2196, %v2388
  %v2390 = vpop.f32.mrf.mxu0
  %v2391 = vadd.f32 %v2198, %v2390
  %2392 = vmatprep.mubr.bf16.mxu0 %v805
  %2393 = vmatmul.mubr.bf16.gmra.mxu0 %v804
  %v2394 = vpop.f32.mrf.mxu0
  %v2395 = vadd.f32 %v2202, %v2394
  %v2396 = vpop.f32.mrf.mxu0
  %v2397 = vadd.f32 %v2204, %v2396
  %v2398 = vpop.f32.mrf.mxu0
  %v2399 = vadd.f32 %v2206, %v2398
  %v2400 = vpop.f32.mrf.mxu0
  %v2401 = vadd.f32 %v2208, %v2400
  %2402 = vmatprep.mubr.bf16.mxu0 %v812
  %2403 = vmatmul.mubr.bf16.gmra.mxu0 %v811
  %v2404 = vpop.f32.mrf.mxu0
  %v2405 = vadd.f32 %v2212, %v2404
  %v2406 = vpop.f32.mrf.mxu0
  %v2407 = vadd.f32 %v2214, %v2406
  %v2408 = vpop.f32.mrf.mxu0
  %v2409 = vadd.f32 %v2216, %v2408
  %v2410 = vpop.f32.mrf.mxu0
  %v2411 = vadd.f32 %v2218, %v2410
  %2412 = vmatprep.mubr.bf16.mxu0 %v819
  %2413 = vmatmul.mubr.bf16.gmra.mxu0 %v818
  %v2414 = vpop.f32.mrf.mxu0
  %v2415 = vadd.f32 %v2222, %v2414
  %v2416 = vpop.f32.mrf.mxu0
  %v2417 = vadd.f32 %v2224, %v2416
  %v2418 = vpop.f32.mrf.mxu0
  %v2419 = vadd.f32 %v2226, %v2418
  %v2420 = vpop.f32.mrf.mxu0
  %v2421 = vadd.f32 %v2228, %v2420
  %2422 = vmatprep.mubr.bf16.mxu0 %v826
  %2423 = vmatmul.mubr.bf16.gmra.mxu0 %v825
  %v2424 = vpop.f32.mrf.mxu0
  %v2425 = vadd.f32 %v2232, %v2424
  %v2426 = vpop.f32.mrf.mxu0
  %v2427 = vadd.f32 %v2234, %v2426
  %v2428 = vpop.f32.mrf.mxu0
  %v2429 = vadd.f32 %v2236, %v2428
  %v2430 = vpop.f32.mrf.mxu0
  %v2431 = vadd.f32 %v2238, %v2430
  %2432 = vmatprep.mubr.bf16.mxu0 %v833
  %2433 = vmatmul.mubr.bf16.gmra.mxu0 %v832
  %v2434 = vpop.f32.mrf.mxu0
  %v2435 = vadd.f32 %v2242, %v2434
  %v2436 = vpop.f32.mrf.mxu0
  %v2437 = vadd.f32 %v2244, %v2436
  %v2438 = vpop.f32.mrf.mxu0
  %v2439 = vadd.f32 %v2246, %v2438
  %v2440 = vpop.f32.mrf.mxu0
  %v2441 = vadd.f32 %v2248, %v2440
  %2442 = vmatprep.mubr.bf16.mxu0 %v840
  %2443 = vmatmul.mubr.bf16.gmra.mxu0 %v839
  %v2444 = vpop.f32.mrf.mxu0
  %v2445 = vadd.f32 %v2252, %v2444
  %v2446 = vpop.f32.mrf.mxu0
  %v2447 = vadd.f32 %v2254, %v2446
  %v2448 = vpop.f32.mrf.mxu0
  %v2449 = vadd.f32 %v2256, %v2448
  %v2450 = vpop.f32.mrf.mxu0
  %v2451 = vadd.f32 %v2258, %v2450
  %2452 = vmatprep.mubr.bf16.mxu0 %v847
  %2453 = vmatmul.mubr.bf16.gmra.mxu0 %v846
  %v2454 = vpop.f32.mrf.mxu0
  %v2455 = vadd.f32 %v2262, %v2454
  %v2456 = vpop.f32.mrf.mxu0
  %v2457 = vadd.f32 %v2264, %v2456
  %v2458 = vpop.f32.mrf.mxu0
  %v2459 = vadd.f32 %v2266, %v2458
  %v2460 = vpop.f32.mrf.mxu0
  %v2461 = vadd.f32 %v2268, %v2460
  %2462 = vmatprep.mubr.bf16.mxu0 %v854
  %2463 = vmatmul.mubr.bf16.gmra.mxu0 %v853
  %v2464 = vpop.f32.mrf.mxu0
  %v2465 = vadd.f32 %v2272, %v2464
  %v2466 = vpop.f32.mrf.mxu0
  %v2467 = vadd.f32 %v2274, %v2466
  %v2468 = vpop.f32.mrf.mxu0
  %v2469 = vadd.f32 %v2276, %v2468
  %v2470 = vpop.f32.mrf.mxu0
  %v2471 = vadd.f32 %v2278, %v2470
  %2472 = vmatprep.mubr.bf16.mxu0 %v861
  %2473 = vmatmul.mubr.bf16.gmra.mxu0 %v860
  %v2474 = vpop.f32.mrf.mxu0
  %v2475 = vadd.f32 %v2282, %v2474
  %v2476 = vpop.f32.mrf.mxu0
  %v2477 = vadd.f32 %v2284, %v2476
  %v2478 = vpop.f32.mrf.mxu0
  %v2479 = vadd.f32 %v2286, %v2478
  %v2480 = vpop.f32.mrf.mxu0
  %v2481 = vadd.f32 %v2288, %v2480
  %2482 = vdwg.mxu0
  %2483 = vmatprep.subr.bf16.mxu0 %v1806
  %2484 = vmatpush1.bf16.msra.mxu0 %v1805
  %2485 = vmatprep.subr.bf16.mxu0 %v1802
  %2486 = vmatpush1.bf16.msra.mxu0 %v1801
  %2487 = vmatprep.subr.bf16.mxu0 %v1798
  %2488 = vmatpush1.bf16.msra.mxu0 %v1797
  %2489 = vmatprep.subr.bf16.mxu0 %v1794
  %2490 = vmatpush1.bf16.msra.mxu0 %v1793
  %2491 = vmatprep.subr.bf16.mxu0 %v1790
  %2492 = vmatpush1.bf16.msra.mxu0 %v1789
  %2493 = vmatprep.subr.bf16.mxu0 %v1786
  %2494 = vmatpush1.bf16.msra.mxu0 %v1785
  %2495 = vmatprep.subr.bf16.mxu0 %v1782
  %2496 = vmatpush1.bf16.msra.mxu0 %v1781
  %2497 = vmatprep.subr.bf16.mxu0 %v1778
  %2498 = vmatpush1.bf16.msra.mxu0 %v1777
  %2499 = vmatprep.subr.bf16.mxu0 %v1838
  %2500 = vmatpush2.bf16.msra.mxu0 %v1837
  %2501 = vmatprep.subr.bf16.mxu0 %v1834
  %2502 = vmatpush2.bf16.msra.mxu0 %v1833
  %2503 = vmatprep.subr.bf16.mxu0 %v1830
  %2504 = vmatpush2.bf16.msra.mxu0 %v1829
  %2505 = vmatprep.subr.bf16.mxu0 %v1826
  %2506 = vmatpush2.bf16.msra.mxu0 %v1825
  %2507 = vmatprep.subr.bf16.mxu0 %v1822
  %2508 = vmatpush2.bf16.msra.mxu0 %v1821
  %2509 = vmatprep.subr.bf16.mxu0 %v1818
  %2510 = vmatpush2.bf16.msra.mxu0 %v1817
  %2511 = vmatprep.subr.bf16.mxu0 %v1814
  %2512 = vmatpush2.bf16.msra.mxu0 %v1813
  %2513 = vmatprep.subr.bf16.mxu0 %v1810
  %2514 = vmatpush2.bf16.msra.mxu0 %v1809
  %2515 = vmatprep.mubr.bf16.mxu0 %v758
  %2516 = vmatmul.mubr.bf16.gmra.mxu0 %v757
  %v2517 = vpop.f32.mrf.mxu0
  %v2518 = vadd.f32 %v2325, %v2517
  %v2519 = vpop.f32.mrf.mxu0
  %v2520 = vadd.f32 %v2327, %v2519
  %v2521 = vpop.f32.mrf.mxu0
  %v2522 = vadd.f32 %v2329, %v2521
  %v2523 = vpop.f32.mrf.mxu0
  %v2524 = vadd.f32 %v2331, %v2523
  %2525 = vmatprep.mubr.bf16.mxu0 %v765
  %2526 = vmatmul.mubr.bf16.gmra.mxu0 %v764
  %v2527 = vpop.f32.mrf.mxu0
  %v2528 = vadd.f32 %v2335, %v2527
  %v2529 = vpop.f32.mrf.mxu0
  %v2530 = vadd.f32 %v2337, %v2529
  %v2531 = vpop.f32.mrf.mxu0
  %v2532 = vadd.f32 %v2339, %v2531
  %v2533 = vpop.f32.mrf.mxu0
  %v2534 = vadd.f32 %v2341, %v2533
  %2535 = vmatprep.mubr.bf16.mxu0 %v772
  %2536 = vmatmul.mubr.bf16.gmra.mxu0 %v771
  %v2537 = vpop.f32.mrf.mxu0
  %v2538 = vadd.f32 %v2345, %v2537
  %v2539 = vpop.f32.mrf.mxu0
  %v2540 = vadd.f32 %v2347, %v2539
  %v2541 = vpop.f32.mrf.mxu0
  %v2542 = vadd.f32 %v2349, %v2541
  %v2543 = vpop.f32.mrf.mxu0
  %v2544 = vadd.f32 %v2351, %v2543
  %2545 = vmatprep.mubr.bf16.mxu0 %v779
  %2546 = vmatmul.mubr.bf16.gmra.mxu0 %v778
  %v2547 = vpop.f32.mrf.mxu0
  %v2548 = vadd.f32 %v2355, %v2547
  %v2549 = vpop.f32.mrf.mxu0
  %v2550 = vadd.f32 %v2357, %v2549
  %v2551 = vpop.f32.mrf.mxu0
  %v2552 = vadd.f32 %v2359, %v2551
  %v2553 = vpop.f32.mrf.mxu0
  %v2554 = vadd.f32 %v2361, %v2553
  %2555 = vmatprep.mubr.bf16.mxu0 %v786
  %2556 = vmatmul.mubr.bf16.gmra.mxu0 %v785
  %v2557 = vpop.f32.mrf.mxu0
  %v2558 = vadd.f32 %v2365, %v2557
  %v2559 = vpop.f32.mrf.mxu0
  %v2560 = vadd.f32 %v2367, %v2559
  %v2561 = vpop.f32.mrf.mxu0
  %v2562 = vadd.f32 %v2369, %v2561
  %v2563 = vpop.f32.mrf.mxu0
  %v2564 = vadd.f32 %v2371, %v2563
  %2565 = vmatprep.mubr.bf16.mxu0 %v793
  %2566 = vmatmul.mubr.bf16.gmra.mxu0 %v792
  %v2567 = vpop.f32.mrf.mxu0
  %v2568 = vadd.f32 %v2375, %v2567
  %v2569 = vpop.f32.mrf.mxu0
  %v2570 = vadd.f32 %v2377, %v2569
  %v2571 = vpop.f32.mrf.mxu0
  %v2572 = vadd.f32 %v2379, %v2571
  %v2573 = vpop.f32.mrf.mxu0
  %v2574 = vadd.f32 %v2381, %v2573
  %2575 = vmatprep.mubr.bf16.mxu0 %v800
  %2576 = vmatmul.mubr.bf16.gmra.mxu0 %v799
  %v2577 = vpop.f32.mrf.mxu0
  %v2578 = vadd.f32 %v2385, %v2577
  %v2579 = vpop.f32.mrf.mxu0
  %v2580 = vadd.f32 %v2387, %v2579
  %v2581 = vpop.f32.mrf.mxu0
  %v2582 = vadd.f32 %v2389, %v2581
  %v2583 = vpop.f32.mrf.mxu0
  %v2584 = vadd.f32 %v2391, %v2583
  %2585 = vmatprep.mubr.bf16.mxu0 %v807
  %2586 = vmatmul.mubr.bf16.gmra.mxu0 %v806
  %v2587 = vpop.f32.mrf.mxu0
  %v2588 = vadd.f32 %v2395, %v2587
  %v2589 = vpop.f32.mrf.mxu0
  %v2590 = vadd.f32 %v2397, %v2589
  %v2591 = vpop.f32.mrf.mxu0
  %v2592 = vadd.f32 %v2399, %v2591
  %v2593 = vpop.f32.mrf.mxu0
  %v2594 = vadd.f32 %v2401, %v2593
  %2595 = vmatprep.mubr.bf16.mxu0 %v814
  %2596 = vmatmul.mubr.bf16.gmra.mxu0 %v813
  %v2597 = vpop.f32.mrf.mxu0
  %v2598 = vadd.f32 %v2405, %v2597
  %v2599 = vpop.f32.mrf.mxu0
  %v2600 = vadd.f32 %v2407, %v2599
  %v2601 = vpop.f32.mrf.mxu0
  %v2602 = vadd.f32 %v2409, %v2601
  %v2603 = vpop.f32.mrf.mxu0
  %v2604 = vadd.f32 %v2411, %v2603
  %2605 = vmatprep.mubr.bf16.mxu0 %v821
  %2606 = vmatmul.mubr.bf16.gmra.mxu0 %v820
  %v2607 = vpop.f32.mrf.mxu0
  %v2608 = vadd.f32 %v2415, %v2607
  %v2609 = vpop.f32.mrf.mxu0
  %v2610 = vadd.f32 %v2417, %v2609
  %v2611 = vpop.f32.mrf.mxu0
  %v2612 = vadd.f32 %v2419, %v2611
  %v2613 = vpop.f32.mrf.mxu0
  %v2614 = vadd.f32 %v2421, %v2613
  %2615 = vmatprep.mubr.bf16.mxu0 %v828
  %2616 = vmatmul.mubr.bf16.gmra.mxu0 %v827
  %v2617 = vpop.f32.mrf.mxu0
  %v2618 = vadd.f32 %v2425, %v2617
  %v2619 = vpop.f32.mrf.mxu0
  %v2620 = vadd.f32 %v2427, %v2619
  %v2621 = vpop.f32.mrf.mxu0
  %v2622 = vadd.f32 %v2429, %v2621
  %v2623 = vpop.f32.mrf.mxu0
  %v2624 = vadd.f32 %v2431, %v2623
  %2625 = vmatprep.mubr.bf16.mxu0 %v835
  %2626 = vmatmul.mubr.bf16.gmra.mxu0 %v834
  %v2627 = vpop.f32.mrf.mxu0
  %v2628 = vadd.f32 %v2435, %v2627
  %v2629 = vpop.f32.mrf.mxu0
  %v2630 = vadd.f32 %v2437, %v2629
  %v2631 = vpop.f32.mrf.mxu0
  %v2632 = vadd.f32 %v2439, %v2631
  %v2633 = vpop.f32.mrf.mxu0
  %v2634 = vadd.f32 %v2441, %v2633
  %2635 = vmatprep.mubr.bf16.mxu0 %v842
  %2636 = vmatmul.mubr.bf16.gmra.mxu0 %v841
  %v2637 = vpop.f32.mrf.mxu0
  %v2638 = vadd.f32 %v2445, %v2637
  %v2639 = vpop.f32.mrf.mxu0
  %v2640 = vadd.f32 %v2447, %v2639
  %v2641 = vpop.f32.mrf.mxu0
  %v2642 = vadd.f32 %v2449, %v2641
  %v2643 = vpop.f32.mrf.mxu0
  %v2644 = vadd.f32 %v2451, %v2643
  %2645 = vmatprep.mubr.bf16.mxu0 %v849
  %2646 = vmatmul.mubr.bf16.gmra.mxu0 %v848
  %v2647 = vpop.f32.mrf.mxu0
  %v2648 = vadd.f32 %v2455, %v2647
  %v2649 = vpop.f32.mrf.mxu0
  %v2650 = vadd.f32 %v2457, %v2649
  %v2651 = vpop.f32.mrf.mxu0
  %v2652 = vadd.f32 %v2459, %v2651
  %v2653 = vpop.f32.mrf.mxu0
  %v2654 = vadd.f32 %v2461, %v2653
  %2655 = vmatprep.mubr.bf16.mxu0 %v856
  %2656 = vmatmul.mubr.bf16.gmra.mxu0 %v855
  %v2657 = vpop.f32.mrf.mxu0
  %v2658 = vadd.f32 %v2465, %v2657
  %v2659 = vpop.f32.mrf.mxu0
  %v2660 = vadd.f32 %v2467, %v2659
  %v2661 = vpop.f32.mrf.mxu0
  %v2662 = vadd.f32 %v2469, %v2661
  %v2663 = vpop.f32.mrf.mxu0
  %v2664 = vadd.f32 %v2471, %v2663
  %2665 = vmatprep.mubr.bf16.mxu0 %v863
  %2666 = vmatmul.mubr.bf16.gmra.mxu0 %v862
  %v2667 = vpop.f32.mrf.mxu0
  %v2668 = vadd.f32 %v2475, %v2667
  %v2669 = vpop.f32.mrf.mxu0
  %v2670 = vadd.f32 %v2477, %v2669
  %v2671 = vpop.f32.mrf.mxu0
  %v2672 = vadd.f32 %v2479, %v2671
  %v2673 = vpop.f32.mrf.mxu0
  %v2674 = vadd.f32 %v2481, %v2673
  %2675 = vdwg.mxu0
  %2676 = vmatprep.subr.bf16.mxu0 %v1870
  %2677 = vmatpush1.bf16.msra.mxu0 %v1869
  %2678 = vmatprep.subr.bf16.mxu0 %v1866
  %2679 = vmatpush1.bf16.msra.mxu0 %v1865
  %2680 = vmatprep.subr.bf16.mxu0 %v1862
  %2681 = vmatpush1.bf16.msra.mxu0 %v1861
  %2682 = vmatprep.subr.bf16.mxu0 %v1858
  %2683 = vmatpush1.bf16.msra.mxu0 %v1857
  %2684 = vmatprep.subr.bf16.mxu0 %v1854
  %2685 = vmatpush1.bf16.msra.mxu0 %v1853
  %2686 = vmatprep.subr.bf16.mxu0 %v1850
  %2687 = vmatpush1.bf16.msra.mxu0 %v1849
  %2688 = vmatprep.subr.bf16.mxu0 %v1846
  %2689 = vmatpush1.bf16.msra.mxu0 %v1845
  %2690 = vmatprep.subr.bf16.mxu0 %v1842
  %2691 = vmatpush1.bf16.msra.mxu0 %v1841
  %2692 = vmatprep.subr.bf16.mxu0 0
  %2693 = vmatpush2.bf16.msra.mxu0 0
  %2694 = vmatprep.subr.bf16.mxu0 0
  %2695 = vmatpush2.bf16.msra.mxu0 0
  %2696 = vmatprep.subr.bf16.mxu0 0
  %2697 = vmatpush2.bf16.msra.mxu0 0
  %2698 = vmatprep.subr.bf16.mxu0 0
  %2699 = vmatpush2.bf16.msra.mxu0 0
  %2700 = vmatprep.subr.bf16.mxu0 0
  %2701 = vmatpush2.bf16.msra.mxu0 0
  %2702 = vmatprep.subr.bf16.mxu0 0
  %2703 = vmatpush2.bf16.msra.mxu0 0
  %2704 = vmatprep.subr.bf16.mxu0 0
  %2705 = vmatpush2.bf16.msra.mxu0 0
  %2706 = vmatprep.subr.bf16.mxu0 0
  %2707 = vmatpush2.bf16.msra.mxu0 0
  %2708 = vmatprep.mubr.bf16.mxu0 0
  %2709 = vmatmul.mubr.bf16.gmra.mxu0 %v759
  %v2710 = vpop.f32.mrf.mxu0
  %v2711 = vadd.f32 %v2518, %v2710
  %v2712 = vpop.f32.mrf.mxu0
  %v2713 = vadd.f32 %v2520, %v2712
  %v2714 = vpop.f32.mrf.mxu0
  %v2715 = vadd.f32 %v2522, %v2714
  %v2716 = vpop.f32.mrf.mxu0
  %v2717 = vadd.f32 %v2524, %v2716
  %2718 = vmatprep.mubr.bf16.mxu0 0
  %2719 = vmatmul.mubr.bf16.gmra.mxu0 %v766
  %v2720 = vpop.f32.mrf.mxu0
  %v2721 = vadd.f32 %v2528, %v2720
  %v2722 = vpop.f32.mrf.mxu0
  %v2723 = vadd.f32 %v2530, %v2722
  %v2724 = vpop.f32.mrf.mxu0
  %v2725 = vadd.f32 %v2532, %v2724
  %v2726 = vpop.f32.mrf.mxu0
  %v2727 = vadd.f32 %v2534, %v2726
  %2728 = vmatprep.mubr.bf16.mxu0 0
  %2729 = vmatmul.mubr.bf16.gmra.mxu0 %v773
  %v2730 = vpop.f32.mrf.mxu0
  %v2731 = vadd.f32 %v2538, %v2730
  %v2732 = vpop.f32.mrf.mxu0
  %v2733 = vadd.f32 %v2540, %v2732
  %v2734 = vpop.f32.mrf.mxu0
  %v2735 = vadd.f32 %v2542, %v2734
  %v2736 = vpop.f32.mrf.mxu0
  %v2737 = vadd.f32 %v2544, %v2736
  %2738 = vmatprep.mubr.bf16.mxu0 0
  %2739 = vmatmul.mubr.bf16.gmra.mxu0 %v780
  %v2740 = vpop.f32.mrf.mxu0
  %v2741 = vadd.f32 %v2548, %v2740
  %v2742 = vpop.f32.mrf.mxu0
  %v2743 = vadd.f32 %v2550, %v2742
  %v2744 = vpop.f32.mrf.mxu0
  %v2745 = vadd.f32 %v2552, %v2744
  %v2746 = vpop.f32.mrf.mxu0
  %v2747 = vadd.f32 %v2554, %v2746
  %2748 = vmatprep.mubr.bf16.mxu0 0
  %2749 = vmatmul.mubr.bf16.gmra.mxu0 %v787
  %v2750 = vpop.f32.mrf.mxu0
  %v2751 = vadd.f32 %v2558, %v2750
  %v2752 = vpop.f32.mrf.mxu0
  %v2753 = vadd.f32 %v2560, %v2752
  %v2754 = vpop.f32.mrf.mxu0
  %v2755 = vadd.f32 %v2562, %v2754
  %v2756 = vpop.f32.mrf.mxu0
  %v2757 = vadd.f32 %v2564, %v2756
  %2758 = vmatprep.mubr.bf16.mxu0 0
  %2759 = vmatmul.mubr.bf16.gmra.mxu0 %v794
  %v2760 = vpop.f32.mrf.mxu0
  %v2761 = vadd.f32 %v2568, %v2760
  %v2762 = vpop.f32.mrf.mxu0
  %v2763 = vadd.f32 %v2570, %v2762
  %v2764 = vpop.f32.mrf.mxu0
  %v2765 = vadd.f32 %v2572, %v2764
  %v2766 = vpop.f32.mrf.mxu0
  %v2767 = vadd.f32 %v2574, %v2766
  %2768 = vmatprep.mubr.bf16.mxu0 0
  %2769 = vmatmul.mubr.bf16.gmra.mxu0 %v801
  %v2770 = vpop.f32.mrf.mxu0
  %v2771 = vadd.f32 %v2578, %v2770
  %v2772 = vpop.f32.mrf.mxu0
  %v2773 = vadd.f32 %v2580, %v2772
  %v2774 = vpop.f32.mrf.mxu0
  %v2775 = vadd.f32 %v2582, %v2774
  %v2776 = vpop.f32.mrf.mxu0
  %v2777 = vadd.f32 %v2584, %v2776
  %2778 = vmatprep.mubr.bf16.mxu0 0
  %2779 = vmatmul.mubr.bf16.gmra.mxu0 %v808
  %v2780 = vpop.f32.mrf.mxu0
  %v2781 = vadd.f32 %v2588, %v2780
  %v2782 = vpop.f32.mrf.mxu0
  %v2783 = vadd.f32 %v2590, %v2782
  %v2784 = vpop.f32.mrf.mxu0
  %v2785 = vadd.f32 %v2592, %v2784
  %v2786 = vpop.f32.mrf.mxu0
  %v2787 = vadd.f32 %v2594, %v2786
  %2788 = vmatprep.mubr.bf16.mxu0 0
  %2789 = vmatmul.mubr.bf16.gmra.mxu0 %v815
  %v2790 = vpop.f32.mrf.mxu0
  %v2791 = vadd.f32 %v2598, %v2790
  %v2792 = vpop.f32.mrf.mxu0
  %v2793 = vadd.f32 %v2600, %v2792
  %v2794 = vpop.f32.mrf.mxu0
  %v2795 = vadd.f32 %v2602, %v2794
  %v2796 = vpop.f32.mrf.mxu0
  %v2797 = vadd.f32 %v2604, %v2796
  %2798 = vmatprep.mubr.bf16.mxu0 0
  %2799 = vmatmul.mubr.bf16.gmra.mxu0 %v822
  %v2800 = vpop.f32.mrf.mxu0
  %v2801 = vadd.f32 %v2608, %v2800
  %v2802 = vpop.f32.mrf.mxu0
  %v2803 = vadd.f32 %v2610, %v2802
  %v2804 = vpop.f32.mrf.mxu0
  %v2805 = vadd.f32 %v2612, %v2804
  %v2806 = vpop.f32.mrf.mxu0
  %v2807 = vadd.f32 %v2614, %v2806
  %2808 = vmatprep.mubr.bf16.mxu0 0
  %2809 = vmatmul.mubr.bf16.gmra.mxu0 %v829
  %v2810 = vpop.f32.mrf.mxu0
  %v2811 = vadd.f32 %v2618, %v2810
  %v2812 = vpop.f32.mrf.mxu0
  %v2813 = vadd.f32 %v2620, %v2812
  %v2814 = vpop.f32.mrf.mxu0
  %v2815 = vadd.f32 %v2622, %v2814
  %v2816 = vpop.f32.mrf.mxu0
  %v2817 = vadd.f32 %v2624, %v2816
  %2818 = vmatprep.mubr.bf16.mxu0 0
  %2819 = vmatmul.mubr.bf16.gmra.mxu0 %v836
  %v2820 = vpop.f32.mrf.mxu0
  %v2821 = vadd.f32 %v2628, %v2820
  %v2822 = vpop.f32.mrf.mxu0
  %v2823 = vadd.f32 %v2630, %v2822
  %v2824 = vpop.f32.mrf.mxu0
  %v2825 = vadd.f32 %v2632, %v2824
  %v2826 = vpop.f32.mrf.mxu0
  %v2827 = vadd.f32 %v2634, %v2826
  %2828 = vmatprep.mubr.bf16.mxu0 0
  %2829 = vmatmul.mubr.bf16.gmra.mxu0 %v843
  %v2830 = vpop.f32.mrf.mxu0
  %v2831 = vadd.f32 %v2638, %v2830
  %v2832 = vpop.f32.mrf.mxu0
  %v2833 = vadd.f32 %v2640, %v2832
  %v2834 = vpop.f32.mrf.mxu0
  %v2835 = vadd.f32 %v2642, %v2834
  %v2836 = vpop.f32.mrf.mxu0
  %v2837 = vadd.f32 %v2644, %v2836
  %2838 = vmatprep.mubr.bf16.mxu0 0
  %2839 = vmatmul.mubr.bf16.gmra.mxu0 %v850
  %v2840 = vpop.f32.mrf.mxu0
  %v2841 = vadd.f32 %v2648, %v2840
  %v2842 = vpop.f32.mrf.mxu0
  %v2843 = vadd.f32 %v2650, %v2842
  %v2844 = vpop.f32.mrf.mxu0
  %v2845 = vadd.f32 %v2652, %v2844
  %v2846 = vpop.f32.mrf.mxu0
  %v2847 = vadd.f32 %v2654, %v2846
  %2848 = vmatprep.mubr.bf16.mxu0 0
  %2849 = vmatmul.mubr.bf16.gmra.mxu0 %v857
  %v2850 = vpop.f32.mrf.mxu0
  %v2851 = vadd.f32 %v2658, %v2850
  %v2852 = vpop.f32.mrf.mxu0
  %v2853 = vadd.f32 %v2660, %v2852
  %v2854 = vpop.f32.mrf.mxu0
  %v2855 = vadd.f32 %v2662, %v2854
  %v2856 = vpop.f32.mrf.mxu0
  %v2857 = vadd.f32 %v2664, %v2856
  %2858 = vmatprep.mubr.bf16.mxu0 0
  %2859 = vmatmul.mubr.bf16.gmra.mxu0 %v864
  %v2860 = vpop.f32.mrf.mxu0
  %v2861 = vadd.f32 %v2668, %v2860
  %v2862 = vpop.f32.mrf.mxu0
  %v2863 = vadd.f32 %v2670, %v2862
  %v2864 = vpop.f32.mrf.mxu0
  %v2865 = vadd.f32 %v2672, %v2864
  %v2866 = vpop.f32.mrf.mxu0
  %v2867 = vadd.f32 %v2674, %v2866
  %2868 = vdwg.mxu0
  %2869 = vmatprep.subr.bf16.mxu0 %v1680
  %2870 = vmatpush1.bf16.msra.mxu0 %v1679
  %2871 = vmatprep.subr.bf16.mxu0 %v1676
  %2872 = vmatpush1.bf16.msra.mxu0 %v1675
  %2873 = vmatprep.subr.bf16.mxu0 %v1672
  %2874 = vmatpush1.bf16.msra.mxu0 %v1671
  %2875 = vmatprep.subr.bf16.mxu0 %v1668
  %2876 = vmatpush1.bf16.msra.mxu0 %v1667
  %2877 = vmatprep.subr.bf16.mxu0 %v1664
  %2878 = vmatpush1.bf16.msra.mxu0 %v1663
  %2879 = vmatprep.subr.bf16.mxu0 %v1660
  %2880 = vmatpush1.bf16.msra.mxu0 %v1659
  %2881 = vmatprep.subr.bf16.mxu0 %v1656
  %2882 = vmatpush1.bf16.msra.mxu0 %v1655
  %2883 = vmatprep.subr.bf16.mxu0 %v1652
  %2884 = vmatpush1.bf16.msra.mxu0 %v1651
  %2885 = vmatprep.subr.bf16.mxu0 %v1712
  %2886 = vmatpush2.bf16.msra.mxu0 %v1711
  %2887 = vmatprep.subr.bf16.mxu0 %v1708
  %2888 = vmatpush2.bf16.msra.mxu0 %v1707
  %2889 = vmatprep.subr.bf16.mxu0 %v1704
  %2890 = vmatpush2.bf16.msra.mxu0 %v1703
  %2891 = vmatprep.subr.bf16.mxu0 %v1700
  %2892 = vmatpush2.bf16.msra.mxu0 %v1699
  %2893 = vmatprep.subr.bf16.mxu0 %v1696
  %2894 = vmatpush2.bf16.msra.mxu0 %v1695
  %2895 = vmatprep.subr.bf16.mxu0 %v1692
  %2896 = vmatpush2.bf16.msra.mxu0 %v1691
  %2897 = vmatprep.subr.bf16.mxu0 %v1688
  %2898 = vmatpush2.bf16.msra.mxu0 %v1687
  %2899 = vmatprep.subr.bf16.mxu0 %v1684
  %2900 = vmatpush2.bf16.msra.mxu0 %v1683
  %2901 = vmatprep.mubr.bf16.mxu0 %v754
  %2902 = vmatmul.mubr.bf16.gmra.mxu0 %v753
  %v2903 = vpop.f32.mrf.mxu0
  %v2904 = vadd.f32 %v392, %v2903
  %v2905 = vpop.f32.mrf.mxu0
  %v2906 = vadd.f32 %v396, %v2905
  %v2907 = vpop.f32.mrf.mxu0
  %v2908 = vadd.f32 %v392, %v2907
  %v2909 = vpop.f32.mrf.mxu0
  %v2910 = vadd.f32 %v396, %v2909
  %2911 = vmatprep.mubr.bf16.mxu0 %v761
  %2912 = vmatmul.mubr.bf16.gmra.mxu0 %v760
  %v2913 = vpop.f32.mrf.mxu0
  %v2914 = vadd.f32 %v392, %v2913
  %v2915 = vpop.f32.mrf.mxu0
  %v2916 = vadd.f32 %v396, %v2915
  %v2917 = vpop.f32.mrf.mxu0
  %v2918 = vadd.f32 %v392, %v2917
  %v2919 = vpop.f32.mrf.mxu0
  %v2920 = vadd.f32 %v396, %v2919
  %2921 = vmatprep.mubr.bf16.mxu0 %v768
  %2922 = vmatmul.mubr.bf16.gmra.mxu0 %v767
  %v2923 = vpop.f32.mrf.mxu0
  %v2924 = vadd.f32 %v392, %v2923
  %v2925 = vpop.f32.mrf.mxu0
  %v2926 = vadd.f32 %v396, %v2925
  %v2927 = vpop.f32.mrf.mxu0
  %v2928 = vadd.f32 %v392, %v2927
  %v2929 = vpop.f32.mrf.mxu0
  %v2930 = vadd.f32 %v396, %v2929
  %2931 = vmatprep.mubr.bf16.mxu0 %v775
  %2932 = vmatmul.mubr.bf16.gmra.mxu0 %v774
  %v2933 = vpop.f32.mrf.mxu0
  %v2934 = vadd.f32 %v392, %v2933
  %v2935 = vpop.f32.mrf.mxu0
  %v2936 = vadd.f32 %v396, %v2935
  %v2937 = vpop.f32.mrf.mxu0
  %v2938 = vadd.f32 %v392, %v2937
  %v2939 = vpop.f32.mrf.mxu0
  %v2940 = vadd.f32 %v396, %v2939
  %2941 = vmatprep.mubr.bf16.mxu0 %v782
  %2942 = vmatmul.mubr.bf16.gmra.mxu0 %v781
  %v2943 = vpop.f32.mrf.mxu0
  %v2944 = vadd.f32 %v392, %v2943
  %v2945 = vpop.f32.mrf.mxu0
  %v2946 = vadd.f32 %v396, %v2945
  %v2947 = vpop.f32.mrf.mxu0
  %v2948 = vadd.f32 %v392, %v2947
  %v2949 = vpop.f32.mrf.mxu0
  %v2950 = vadd.f32 %v396, %v2949
  %2951 = vmatprep.mubr.bf16.mxu0 %v789
  %2952 = vmatmul.mubr.bf16.gmra.mxu0 %v788
  %v2953 = vpop.f32.mrf.mxu0
  %v2954 = vadd.f32 %v392, %v2953
  %v2955 = vpop.f32.mrf.mxu0
  %v2956 = vadd.f32 %v396, %v2955
  %v2957 = vpop.f32.mrf.mxu0
  %v2958 = vadd.f32 %v392, %v2957
  %v2959 = vpop.f32.mrf.mxu0
  %v2960 = vadd.f32 %v396, %v2959
  %2961 = vmatprep.mubr.bf16.mxu0 %v796
  %2962 = vmatmul.mubr.bf16.gmra.mxu0 %v795
  %v2963 = vpop.f32.mrf.mxu0
  %v2964 = vadd.f32 %v392, %v2963
  %v2965 = vpop.f32.mrf.mxu0
  %v2966 = vadd.f32 %v396, %v2965
  %v2967 = vpop.f32.mrf.mxu0
  %v2968 = vadd.f32 %v392, %v2967
  %v2969 = vpop.f32.mrf.mxu0
  %v2970 = vadd.f32 %v396, %v2969
  %2971 = vmatprep.mubr.bf16.mxu0 %v803
  %2972 = vmatmul.mubr.bf16.gmra.mxu0 %v802
  %v2973 = vpop.f32.mrf.mxu0
  %v2974 = vadd.f32 %v392, %v2973
  %v2975 = vpop.f32.mrf.mxu0
  %v2976 = vadd.f32 %v396, %v2975
  %v2977 = vpop.f32.mrf.mxu0
  %v2978 = vadd.f32 %v392, %v2977
  %v2979 = vpop.f32.mrf.mxu0
  %v2980 = vadd.f32 %v396, %v2979
  %2981 = vmatprep.mubr.bf16.mxu0 %v810
  %2982 = vmatmul.mubr.bf16.gmra.mxu0 %v809
  %v2983 = vpop.f32.mrf.mxu0
  %v2984 = vadd.f32 %v392, %v2983
  %v2985 = vpop.f32.mrf.mxu0
  %v2986 = vadd.f32 %v396, %v2985
  %v2987 = vpop.f32.mrf.mxu0
  %v2988 = vadd.f32 %v392, %v2987
  %v2989 = vpop.f32.mrf.mxu0
  %v2990 = vadd.f32 %v396, %v2989
  %2991 = vmatprep.mubr.bf16.mxu0 %v817
  %2992 = vmatmul.mubr.bf16.gmra.mxu0 %v816
  %v2993 = vpop.f32.mrf.mxu0
  %v2994 = vadd.f32 %v392, %v2993
  %v2995 = vpop.f32.mrf.mxu0
  %v2996 = vadd.f32 %v396, %v2995
  %v2997 = vpop.f32.mrf.mxu0
  %v2998 = vadd.f32 %v392, %v2997
  %v2999 = vpop.f32.mrf.mxu0
  %v3000 = vadd.f32 %v396, %v2999
  %3001 = vmatprep.mubr.bf16.mxu0 %v824
  %3002 = vmatmul.mubr.bf16.gmra.mxu0 %v823
  %v3003 = vpop.f32.mrf.mxu0
  %v3004 = vadd.f32 %v392, %v3003
  %v3005 = vpop.f32.mrf.mxu0
  %v3006 = vadd.f32 %v396, %v3005
  %v3007 = vpop.f32.mrf.mxu0
  %v3008 = vadd.f32 %v392, %v3007
  %v3009 = vpop.f32.mrf.mxu0
  %v3010 = vadd.f32 %v396, %v3009
  %3011 = vmatprep.mubr.bf16.mxu0 %v831
  %3012 = vmatmul.mubr.bf16.gmra.mxu0 %v830
  %v3013 = vpop.f32.mrf.mxu0
  %v3014 = vadd.f32 %v392, %v3013
  %v3015 = vpop.f32.mrf.mxu0
  %v3016 = vadd.f32 %v396, %v3015
  %v3017 = vpop.f32.mrf.mxu0
  %v3018 = vadd.f32 %v392, %v3017
  %v3019 = vpop.f32.mrf.mxu0
  %v3020 = vadd.f32 %v396, %v3019
  %3021 = vmatprep.mubr.bf16.mxu0 %v838
  %3022 = vmatmul.mubr.bf16.gmra.mxu0 %v837
  %v3023 = vpop.f32.mrf.mxu0
  %v3024 = vadd.f32 %v392, %v3023
  %v3025 = vpop.f32.mrf.mxu0
  %v3026 = vadd.f32 %v396, %v3025
  %v3027 = vpop.f32.mrf.mxu0
  %v3028 = vadd.f32 %v392, %v3027
  %v3029 = vpop.f32.mrf.mxu0
  %v3030 = vadd.f32 %v396, %v3029
  %3031 = vmatprep.mubr.bf16.mxu0 %v845
  %3032 = vmatmul.mubr.bf16.gmra.mxu0 %v844
  %v3033 = vpop.f32.mrf.mxu0
  %v3034 = vadd.f32 %v392, %v3033
  %v3035 = vpop.f32.mrf.mxu0
  %v3036 = vadd.f32 %v396, %v3035
  %v3037 = vpop.f32.mrf.mxu0
  %v3038 = vadd.f32 %v392, %v3037
  %v3039 = vpop.f32.mrf.mxu0
  %v3040 = vadd.f32 %v396, %v3039
  %3041 = vmatprep.mubr.bf16.mxu0 %v852
  %3042 = vmatmul.mubr.bf16.gmra.mxu0 %v851
  %v3043 = vpop.f32.mrf.mxu0
  %v3044 = vadd.f32 %v392, %v3043
  %v3045 = vpop.f32.mrf.mxu0
  %v3046 = vadd.f32 %v396, %v3045
  %v3047 = vpop.f32.mrf.mxu0
  %v3048 = vadd.f32 %v392, %v3047
  %v3049 = vpop.f32.mrf.mxu0
  %v3050 = vadd.f32 %v396, %v3049
  %3051 = vmatprep.mubr.bf16.mxu0 %v859
  %3052 = vmatmul.mubr.bf16.gmra.mxu0 %v858
  %v3053 = vpop.f32.mrf.mxu0
  %v3054 = vadd.f32 %v392, %v3053
  %v3055 = vpop.f32.mrf.mxu0
  %v3056 = vadd.f32 %v396, %v3055
  %v3057 = vpop.f32.mrf.mxu0
  %v3058 = vadd.f32 %v392, %v3057
  %v3059 = vpop.f32.mrf.mxu0
  %v3060 = vadd.f32 %v396, %v3059
  %3061 = vdwg.mxu0
  %3062 = vmatprep.subr.bf16.mxu0 %v1744
  %3063 = vmatpush1.bf16.msra.mxu0 %v1743
  %3064 = vmatprep.subr.bf16.mxu0 %v1740
  %3065 = vmatpush1.bf16.msra.mxu0 %v1739
  %3066 = vmatprep.subr.bf16.mxu0 %v1736
  %3067 = vmatpush1.bf16.msra.mxu0 %v1735
  %3068 = vmatprep.subr.bf16.mxu0 %v1732
  %3069 = vmatpush1.bf16.msra.mxu0 %v1731
  %3070 = vmatprep.subr.bf16.mxu0 %v1728
  %3071 = vmatpush1.bf16.msra.mxu0 %v1727
  %3072 = vmatprep.subr.bf16.mxu0 %v1724
  %3073 = vmatpush1.bf16.msra.mxu0 %v1723
  %3074 = vmatprep.subr.bf16.mxu0 %v1720
  %3075 = vmatpush1.bf16.msra.mxu0 %v1719
  %3076 = vmatprep.subr.bf16.mxu0 %v1716
  %3077 = vmatpush1.bf16.msra.mxu0 %v1715
  %3078 = vmatprep.subr.bf16.mxu0 %v1776
  %3079 = vmatpush2.bf16.msra.mxu0 %v1775
  %3080 = vmatprep.subr.bf16.mxu0 %v1772
  %3081 = vmatpush2.bf16.msra.mxu0 %v1771
  %3082 = vmatprep.subr.bf16.mxu0 %v1768
  %3083 = vmatpush2.bf16.msra.mxu0 %v1767
  %3084 = vmatprep.subr.bf16.mxu0 %v1764
  %3085 = vmatpush2.bf16.msra.mxu0 %v1763
  %3086 = vmatprep.subr.bf16.mxu0 %v1760
  %3087 = vmatpush2.bf16.msra.mxu0 %v1759
  %3088 = vmatprep.subr.bf16.mxu0 %v1756
  %3089 = vmatpush2.bf16.msra.mxu0 %v1755
  %3090 = vmatprep.subr.bf16.mxu0 %v1752
  %3091 = vmatpush2.bf16.msra.mxu0 %v1751
  %3092 = vmatprep.subr.bf16.mxu0 %v1748
  %3093 = vmatpush2.bf16.msra.mxu0 %v1747
  %3094 = vmatprep.mubr.bf16.mxu0 %v756
  %3095 = vmatmul.mubr.bf16.gmra.mxu0 %v755
  %v3096 = vpop.f32.mrf.mxu0
  %v3097 = vadd.f32 %v2904, %v3096
  %v3098 = vpop.f32.mrf.mxu0
  %v3099 = vadd.f32 %v2906, %v3098
  %v3100 = vpop.f32.mrf.mxu0
  %v3101 = vadd.f32 %v2908, %v3100
  %v3102 = vpop.f32.mrf.mxu0
  %v3103 = vadd.f32 %v2910, %v3102
  %3104 = vmatprep.mubr.bf16.mxu0 %v763
  %3105 = vmatmul.mubr.bf16.gmra.mxu0 %v762
  %v3106 = vpop.f32.mrf.mxu0
  %v3107 = vadd.f32 %v2914, %v3106
  %v3108 = vpop.f32.mrf.mxu0
  %v3109 = vadd.f32 %v2916, %v3108
  %v3110 = vpop.f32.mrf.mxu0
  %v3111 = vadd.f32 %v2918, %v3110
  %v3112 = vpop.f32.mrf.mxu0
  %v3113 = vadd.f32 %v2920, %v3112
  %3114 = vmatprep.mubr.bf16.mxu0 %v770
  %3115 = vmatmul.mubr.bf16.gmra.mxu0 %v769
  %v3116 = vpop.f32.mrf.mxu0
  %v3117 = vadd.f32 %v2924, %v3116
  %v3118 = vpop.f32.mrf.mxu0
  %v3119 = vadd.f32 %v2926, %v3118
  %v3120 = vpop.f32.mrf.mxu0
  %v3121 = vadd.f32 %v2928, %v3120
  %v3122 = vpop.f32.mrf.mxu0
  %v3123 = vadd.f32 %v2930, %v3122
  %3124 = vmatprep.mubr.bf16.mxu0 %v777
  %3125 = vmatmul.mubr.bf16.gmra.mxu0 %v776
  %v3126 = vpop.f32.mrf.mxu0
  %v3127 = vadd.f32 %v2934, %v3126
  %v3128 = vpop.f32.mrf.mxu0
  %v3129 = vadd.f32 %v2936, %v3128
  %v3130 = vpop.f32.mrf.mxu0
  %v3131 = vadd.f32 %v2938, %v3130
  %v3132 = vpop.f32.mrf.mxu0
  %v3133 = vadd.f32 %v2940, %v3132
  %3134 = vmatprep.mubr.bf16.mxu0 %v784
  %3135 = vmatmul.mubr.bf16.gmra.mxu0 %v783
  %v3136 = vpop.f32.mrf.mxu0
  %v3137 = vadd.f32 %v2944, %v3136
  %v3138 = vpop.f32.mrf.mxu0
  %v3139 = vadd.f32 %v2946, %v3138
  %v3140 = vpop.f32.mrf.mxu0
  %v3141 = vadd.f32 %v2948, %v3140
  %v3142 = vpop.f32.mrf.mxu0
  %v3143 = vadd.f32 %v2950, %v3142
  %3144 = vmatprep.mubr.bf16.mxu0 %v791
  %3145 = vmatmul.mubr.bf16.gmra.mxu0 %v790
  %v3146 = vpop.f32.mrf.mxu0
  %v3147 = vadd.f32 %v2954, %v3146
  %v3148 = vpop.f32.mrf.mxu0
  %v3149 = vadd.f32 %v2956, %v3148
  %v3150 = vpop.f32.mrf.mxu0
  %v3151 = vadd.f32 %v2958, %v3150
  %v3152 = vpop.f32.mrf.mxu0
  %v3153 = vadd.f32 %v2960, %v3152
  %3154 = vmatprep.mubr.bf16.mxu0 %v798
  %3155 = vmatmul.mubr.bf16.gmra.mxu0 %v797
  %v3156 = vpop.f32.mrf.mxu0
  %v3157 = vadd.f32 %v2964, %v3156
  %v3158 = vpop.f32.mrf.mxu0
  %v3159 = vadd.f32 %v2966, %v3158
  %v3160 = vpop.f32.mrf.mxu0
  %v3161 = vadd.f32 %v2968, %v3160
  %v3162 = vpop.f32.mrf.mxu0
  %v3163 = vadd.f32 %v2970, %v3162
  %3164 = vmatprep.mubr.bf16.mxu0 %v805
  %3165 = vmatmul.mubr.bf16.gmra.mxu0 %v804
  %v3166 = vpop.f32.mrf.mxu0
  %v3167 = vadd.f32 %v2974, %v3166
  %v3168 = vpop.f32.mrf.mxu0
  %v3169 = vadd.f32 %v2976, %v3168
  %v3170 = vpop.f32.mrf.mxu0
  %v3171 = vadd.f32 %v2978, %v3170
  %v3172 = vpop.f32.mrf.mxu0
  %v3173 = vadd.f32 %v2980, %v3172
  %3174 = vmatprep.mubr.bf16.mxu0 %v812
  %3175 = vmatmul.mubr.bf16.gmra.mxu0 %v811
  %v3176 = vpop.f32.mrf.mxu0
  %v3177 = vadd.f32 %v2984, %v3176
  %v3178 = vpop.f32.mrf.mxu0
  %v3179 = vadd.f32 %v2986, %v3178
  %v3180 = vpop.f32.mrf.mxu0
  %v3181 = vadd.f32 %v2988, %v3180
  %v3182 = vpop.f32.mrf.mxu0
  %v3183 = vadd.f32 %v2990, %v3182
  %3184 = vmatprep.mubr.bf16.mxu0 %v819
  %3185 = vmatmul.mubr.bf16.gmra.mxu0 %v818
  %v3186 = vpop.f32.mrf.mxu0
  %v3187 = vadd.f32 %v2994, %v3186
  %v3188 = vpop.f32.mrf.mxu0
  %v3189 = vadd.f32 %v2996, %v3188
  %v3190 = vpop.f32.mrf.mxu0
  %v3191 = vadd.f32 %v2998, %v3190
  %v3192 = vpop.f32.mrf.mxu0
  %v3193 = vadd.f32 %v3000, %v3192
  %3194 = vmatprep.mubr.bf16.mxu0 %v826
  %3195 = vmatmul.mubr.bf16.gmra.mxu0 %v825
  %v3196 = vpop.f32.mrf.mxu0
  %v3197 = vadd.f32 %v3004, %v3196
  %v3198 = vpop.f32.mrf.mxu0
  %v3199 = vadd.f32 %v3006, %v3198
  %v3200 = vpop.f32.mrf.mxu0
  %v3201 = vadd.f32 %v3008, %v3200
  %v3202 = vpop.f32.mrf.mxu0
  %v3203 = vadd.f32 %v3010, %v3202
  %3204 = vmatprep.mubr.bf16.mxu0 %v833
  %3205 = vmatmul.mubr.bf16.gmra.mxu0 %v832
  %v3206 = vpop.f32.mrf.mxu0
  %v3207 = vadd.f32 %v3014, %v3206
  %v3208 = vpop.f32.mrf.mxu0
  %v3209 = vadd.f32 %v3016, %v3208
  %v3210 = vpop.f32.mrf.mxu0
  %v3211 = vadd.f32 %v3018, %v3210
  %v3212 = vpop.f32.mrf.mxu0
  %v3213 = vadd.f32 %v3020, %v3212
  %3214 = vmatprep.mubr.bf16.mxu0 %v840
  %3215 = vmatmul.mubr.bf16.gmra.mxu0 %v839
  %v3216 = vpop.f32.mrf.mxu0
  %v3217 = vadd.f32 %v3024, %v3216
  %v3218 = vpop.f32.mrf.mxu0
  %v3219 = vadd.f32 %v3026, %v3218
  %v3220 = vpop.f32.mrf.mxu0
  %v3221 = vadd.f32 %v3028, %v3220
  %v3222 = vpop.f32.mrf.mxu0
  %v3223 = vadd.f32 %v3030, %v3222
  %3224 = vmatprep.mubr.bf16.mxu0 %v847
  %3225 = vmatmul.mubr.bf16.gmra.mxu0 %v846
  %v3226 = vpop.f32.mrf.mxu0
  %v3227 = vadd.f32 %v3034, %v3226
  %v3228 = vpop.f32.mrf.mxu0
  %v3229 = vadd.f32 %v3036, %v3228
  %v3230 = vpop.f32.mrf.mxu0
  %v3231 = vadd.f32 %v3038, %v3230
  %v3232 = vpop.f32.mrf.mxu0
  %v3233 = vadd.f32 %v3040, %v3232
  %3234 = vmatprep.mubr.bf16.mxu0 %v854
  %3235 = vmatmul.mubr.bf16.gmra.mxu0 %v853
  %v3236 = vpop.f32.mrf.mxu0
  %v3237 = vadd.f32 %v3044, %v3236
  %v3238 = vpop.f32.mrf.mxu0
  %v3239 = vadd.f32 %v3046, %v3238
  %v3240 = vpop.f32.mrf.mxu0
  %v3241 = vadd.f32 %v3048, %v3240
  %v3242 = vpop.f32.mrf.mxu0
  %v3243 = vadd.f32 %v3050, %v3242
  %3244 = vmatprep.mubr.bf16.mxu0 %v861
  %3245 = vmatmul.mubr.bf16.gmra.mxu0 %v860
  %v3246 = vpop.f32.mrf.mxu0
  %v3247 = vadd.f32 %v3054, %v3246
  %v3248 = vpop.f32.mrf.mxu0
  %v3249 = vadd.f32 %v3056, %v3248
  %v3250 = vpop.f32.mrf.mxu0
  %v3251 = vadd.f32 %v3058, %v3250
  %v3252 = vpop.f32.mrf.mxu0
  %v3253 = vadd.f32 %v3060, %v3252
  %3254 = vdwg.mxu0
  %3255 = vmatprep.subr.bf16.mxu0 %v1808
  %3256 = vmatpush1.bf16.msra.mxu0 %v1807
  %3257 = vmatprep.subr.bf16.mxu0 %v1804
  %3258 = vmatpush1.bf16.msra.mxu0 %v1803
  %3259 = vmatprep.subr.bf16.mxu0 %v1800
  %3260 = vmatpush1.bf16.msra.mxu0 %v1799
  %3261 = vmatprep.subr.bf16.mxu0 %v1796
  %3262 = vmatpush1.bf16.msra.mxu0 %v1795
  %3263 = vmatprep.subr.bf16.mxu0 %v1792
  %3264 = vmatpush1.bf16.msra.mxu0 %v1791
  %3265 = vmatprep.subr.bf16.mxu0 %v1788
  %3266 = vmatpush1.bf16.msra.mxu0 %v1787
  %3267 = vmatprep.subr.bf16.mxu0 %v1784
  %3268 = vmatpush1.bf16.msra.mxu0 %v1783
  %3269 = vmatprep.subr.bf16.mxu0 %v1780
  %3270 = vmatpush1.bf16.msra.mxu0 %v1779
  %3271 = vmatprep.subr.bf16.mxu0 %v1840
  %3272 = vmatpush2.bf16.msra.mxu0 %v1839
  %3273 = vmatprep.subr.bf16.mxu0 %v1836
  %3274 = vmatpush2.bf16.msra.mxu0 %v1835
  %3275 = vmatprep.subr.bf16.mxu0 %v1832
  %3276 = vmatpush2.bf16.msra.mxu0 %v1831
  %3277 = vmatprep.subr.bf16.mxu0 %v1828
  %3278 = vmatpush2.bf16.msra.mxu0 %v1827
  %3279 = vmatprep.subr.bf16.mxu0 %v1824
  %3280 = vmatpush2.bf16.msra.mxu0 %v1823
  %3281 = vmatprep.subr.bf16.mxu0 %v1820
  %3282 = vmatpush2.bf16.msra.mxu0 %v1819
  %3283 = vmatprep.subr.bf16.mxu0 %v1816
  %3284 = vmatpush2.bf16.msra.mxu0 %v1815
  %3285 = vmatprep.subr.bf16.mxu0 %v1812
  %3286 = vmatpush2.bf16.msra.mxu0 %v1811
  %3287 = vmatprep.mubr.bf16.mxu0 %v758
  %3288 = vmatmul.mubr.bf16.gmra.mxu0 %v757
  %v3289 = vpop.f32.mrf.mxu0
  %v3290 = vadd.f32 %v3097, %v3289
  %v3291 = vpop.f32.mrf.mxu0
  %v3292 = vadd.f32 %v3099, %v3291
  %v3293 = vpop.f32.mrf.mxu0
  %v3294 = vadd.f32 %v3101, %v3293
  %v3295 = vpop.f32.mrf.mxu0
  %v3296 = vadd.f32 %v3103, %v3295
  %3297 = vmatprep.mubr.bf16.mxu0 %v765
  %3298 = vmatmul.mubr.bf16.gmra.mxu0 %v764
  %v3299 = vpop.f32.mrf.mxu0
  %v3300 = vadd.f32 %v3107, %v3299
  %v3301 = vpop.f32.mrf.mxu0
  %v3302 = vadd.f32 %v3109, %v3301
  %v3303 = vpop.f32.mrf.mxu0
  %v3304 = vadd.f32 %v3111, %v3303
  %v3305 = vpop.f32.mrf.mxu0
  %v3306 = vadd.f32 %v3113, %v3305
  %3307 = vmatprep.mubr.bf16.mxu0 %v772
  %3308 = vmatmul.mubr.bf16.gmra.mxu0 %v771
  %v3309 = vpop.f32.mrf.mxu0
  %v3310 = vadd.f32 %v3117, %v3309
  %v3311 = vpop.f32.mrf.mxu0
  %v3312 = vadd.f32 %v3119, %v3311
  %v3313 = vpop.f32.mrf.mxu0
  %v3314 = vadd.f32 %v3121, %v3313
  %v3315 = vpop.f32.mrf.mxu0
  %v3316 = vadd.f32 %v3123, %v3315
  %3317 = vmatprep.mubr.bf16.mxu0 %v779
  %3318 = vmatmul.mubr.bf16.gmra.mxu0 %v778
  %v3319 = vpop.f32.mrf.mxu0
  %v3320 = vadd.f32 %v3127, %v3319
  %v3321 = vpop.f32.mrf.mxu0
  %v3322 = vadd.f32 %v3129, %v3321
  %v3323 = vpop.f32.mrf.mxu0
  %v3324 = vadd.f32 %v3131, %v3323
  %v3325 = vpop.f32.mrf.mxu0
  %v3326 = vadd.f32 %v3133, %v3325
  %3327 = vmatprep.mubr.bf16.mxu0 %v786
  %3328 = vmatmul.mubr.bf16.gmra.mxu0 %v785
  %v3329 = vpop.f32.mrf.mxu0
  %v3330 = vadd.f32 %v3137, %v3329
  %v3331 = vpop.f32.mrf.mxu0
  %v3332 = vadd.f32 %v3139, %v3331
  %v3333 = vpop.f32.mrf.mxu0
  %v3334 = vadd.f32 %v3141, %v3333
  %v3335 = vpop.f32.mrf.mxu0
  %v3336 = vadd.f32 %v3143, %v3335
  %3337 = vmatprep.mubr.bf16.mxu0 %v793
  %3338 = vmatmul.mubr.bf16.gmra.mxu0 %v792
  %v3339 = vpop.f32.mrf.mxu0
  %v3340 = vadd.f32 %v3147, %v3339
  %v3341 = vpop.f32.mrf.mxu0
  %v3342 = vadd.f32 %v3149, %v3341
  %v3343 = vpop.f32.mrf.mxu0
  %v3344 = vadd.f32 %v3151, %v3343
  %v3345 = vpop.f32.mrf.mxu0
  %v3346 = vadd.f32 %v3153, %v3345
  %3347 = vmatprep.mubr.bf16.mxu0 %v800
  %3348 = vmatmul.mubr.bf16.gmra.mxu0 %v799
  %v3349 = vpop.f32.mrf.mxu0
  %v3350 = vadd.f32 %v3157, %v3349
  %v3351 = vpop.f32.mrf.mxu0
  %v3352 = vadd.f32 %v3159, %v3351
  %v3353 = vpop.f32.mrf.mxu0
  %v3354 = vadd.f32 %v3161, %v3353
  %v3355 = vpop.f32.mrf.mxu0
  %v3356 = vadd.f32 %v3163, %v3355
  %3357 = vmatprep.mubr.bf16.mxu0 %v807
  %3358 = vmatmul.mubr.bf16.gmra.mxu0 %v806
  %v3359 = vpop.f32.mrf.mxu0
  %v3360 = vadd.f32 %v3167, %v3359
  %v3361 = vpop.f32.mrf.mxu0
  %v3362 = vadd.f32 %v3169, %v3361
  %v3363 = vpop.f32.mrf.mxu0
  %v3364 = vadd.f32 %v3171, %v3363
  %v3365 = vpop.f32.mrf.mxu0
  %v3366 = vadd.f32 %v3173, %v3365
  %3367 = vmatprep.mubr.bf16.mxu0 %v814
  %3368 = vmatmul.mubr.bf16.gmra.mxu0 %v813
  %v3369 = vpop.f32.mrf.mxu0
  %v3370 = vadd.f32 %v3177, %v3369
  %v3371 = vpop.f32.mrf.mxu0
  %v3372 = vadd.f32 %v3179, %v3371
  %v3373 = vpop.f32.mrf.mxu0
  %v3374 = vadd.f32 %v3181, %v3373
  %v3375 = vpop.f32.mrf.mxu0
  %v3376 = vadd.f32 %v3183, %v3375
  %3377 = vmatprep.mubr.bf16.mxu0 %v821
  %3378 = vmatmul.mubr.bf16.gmra.mxu0 %v820
  %v3379 = vpop.f32.mrf.mxu0
  %v3380 = vadd.f32 %v3187, %v3379
  %v3381 = vpop.f32.mrf.mxu0
  %v3382 = vadd.f32 %v3189, %v3381
  %v3383 = vpop.f32.mrf.mxu0
  %v3384 = vadd.f32 %v3191, %v3383
  %v3385 = vpop.f32.mrf.mxu0
  %v3386 = vadd.f32 %v3193, %v3385
  %3387 = vmatprep.mubr.bf16.mxu0 %v828
  %3388 = vmatmul.mubr.bf16.gmra.mxu0 %v827
  %v3389 = vpop.f32.mrf.mxu0
  %v3390 = vadd.f32 %v3197, %v3389
  %v3391 = vpop.f32.mrf.mxu0
  %v3392 = vadd.f32 %v3199, %v3391
  %v3393 = vpop.f32.mrf.mxu0
  %v3394 = vadd.f32 %v3201, %v3393
  %v3395 = vpop.f32.mrf.mxu0
  %v3396 = vadd.f32 %v3203, %v3395
  %3397 = vmatprep.mubr.bf16.mxu0 %v835
  %3398 = vmatmul.mubr.bf16.gmra.mxu0 %v834
  %v3399 = vpop.f32.mrf.mxu0
  %v3400 = vadd.f32 %v3207, %v3399
  %v3401 = vpop.f32.mrf.mxu0
  %v3402 = vadd.f32 %v3209, %v3401
  %v3403 = vpop.f32.mrf.mxu0
  %v3404 = vadd.f32 %v3211, %v3403
  %v3405 = vpop.f32.mrf.mxu0
  %v3406 = vadd.f32 %v3213, %v3405
  %3407 = vmatprep.mubr.bf16.mxu0 %v842
  %3408 = vmatmul.mubr.bf16.gmra.mxu0 %v841
  %v3409 = vpop.f32.mrf.mxu0
  %v3410 = vadd.f32 %v3217, %v3409
  %v3411 = vpop.f32.mrf.mxu0
  %v3412 = vadd.f32 %v3219, %v3411
  %v3413 = vpop.f32.mrf.mxu0
  %v3414 = vadd.f32 %v3221, %v3413
  %v3415 = vpop.f32.mrf.mxu0
  %v3416 = vadd.f32 %v3223, %v3415
  %3417 = vmatprep.mubr.bf16.mxu0 %v849
  %3418 = vmatmul.mubr.bf16.gmra.mxu0 %v848
  %v3419 = vpop.f32.mrf.mxu0
  %v3420 = vadd.f32 %v3227, %v3419
  %v3421 = vpop.f32.mrf.mxu0
  %v3422 = vadd.f32 %v3229, %v3421
  %v3423 = vpop.f32.mrf.mxu0
  %v3424 = vadd.f32 %v3231, %v3423
  %v3425 = vpop.f32.mrf.mxu0
  %v3426 = vadd.f32 %v3233, %v3425
  %3427 = vmatprep.mubr.bf16.mxu0 %v856
  %3428 = vmatmul.mubr.bf16.gmra.mxu0 %v855
  %v3429 = vpop.f32.mrf.mxu0
  %v3430 = vadd.f32 %v3237, %v3429
  %v3431 = vpop.f32.mrf.mxu0
  %v3432 = vadd.f32 %v3239, %v3431
  %v3433 = vpop.f32.mrf.mxu0
  %v3434 = vadd.f32 %v3241, %v3433
  %v3435 = vpop.f32.mrf.mxu0
  %v3436 = vadd.f32 %v3243, %v3435
  %3437 = vmatprep.mubr.bf16.mxu0 %v863
  %3438 = vmatmul.mubr.bf16.gmra.mxu0 %v862
  %v3439 = vpop.f32.mrf.mxu0
  %v3440 = vadd.f32 %v3247, %v3439
  %v3441 = vpop.f32.mrf.mxu0
  %v3442 = vadd.f32 %v3249, %v3441
  %v3443 = vpop.f32.mrf.mxu0
  %v3444 = vadd.f32 %v3251, %v3443
  %v3445 = vpop.f32.mrf.mxu0
  %v3446 = vadd.f32 %v3253, %v3445
  %3447 = vdwg.mxu0
  %3448 = vmatprep.subr.bf16.mxu0 %v1872
  %3449 = vmatpush1.bf16.msra.mxu0 %v1871
  %3450 = vmatprep.subr.bf16.mxu0 %v1868
  %3451 = vmatpush1.bf16.msra.mxu0 %v1867
  %3452 = vmatprep.subr.bf16.mxu0 %v1864
  %3453 = vmatpush1.bf16.msra.mxu0 %v1863
  %3454 = vmatprep.subr.bf16.mxu0 %v1860
  %3455 = vmatpush1.bf16.msra.mxu0 %v1859
  %3456 = vmatprep.subr.bf16.mxu0 %v1856
  %3457 = vmatpush1.bf16.msra.mxu0 %v1855
  %3458 = vmatprep.subr.bf16.mxu0 %v1852
  %3459 = vmatpush1.bf16.msra.mxu0 %v1851
  %3460 = vmatprep.subr.bf16.mxu0 %v1848
  %3461 = vmatpush1.bf16.msra.mxu0 %v1847
  %3462 = vmatprep.subr.bf16.mxu0 %v1844
  %3463 = vmatpush1.bf16.msra.mxu0 %v1843
  %3464 = vmatprep.subr.bf16.mxu0 0
  %3465 = vmatpush2.bf16.msra.mxu0 0
  %3466 = vmatprep.subr.bf16.mxu0 0
  %3467 = vmatpush2.bf16.msra.mxu0 0
  %3468 = vmatprep.subr.bf16.mxu0 0
  %3469 = vmatpush2.bf16.msra.mxu0 0
  %3470 = vmatprep.subr.bf16.mxu0 0
  %3471 = vmatpush2.bf16.msra.mxu0 0
  %3472 = vmatprep.subr.bf16.mxu0 0
  %3473 = vmatpush2.bf16.msra.mxu0 0
  %3474 = vmatprep.subr.bf16.mxu0 0
  %3475 = vmatpush2.bf16.msra.mxu0 0
  %3476 = vmatprep.subr.bf16.mxu0 0
  %3477 = vmatpush2.bf16.msra.mxu0 0
  %3478 = vmatprep.subr.bf16.mxu0 0
  %3479 = vmatpush2.bf16.msra.mxu0 0
  %3480 = vmatprep.mubr.bf16.mxu0 0
  %3481 = vmatmul.mubr.bf16.gmra.mxu0 %v759
  %v3482 = vpop.f32.mrf.mxu0
  %v3483 = vadd.f32 %v3290, %v3482
  %v3484 = vpop.f32.mrf.mxu0
  %v3485 = vadd.f32 %v3292, %v3484
  %v3486 = vpop.f32.mrf.mxu0
  %v3487 = vadd.f32 %v3294, %v3486
  %v3488 = vpop.f32.mrf.mxu0
  %v3489 = vadd.f32 %v3296, %v3488
  %3490 = vmatprep.mubr.bf16.mxu0 0
  %3491 = vmatmul.mubr.bf16.gmra.mxu0 %v766
  %v3492 = vpop.f32.mrf.mxu0
  %v3493 = vadd.f32 %v3300, %v3492
  %v3494 = vpop.f32.mrf.mxu0
  %v3495 = vadd.f32 %v3302, %v3494
  %v3496 = vpop.f32.mrf.mxu0
  %v3497 = vadd.f32 %v3304, %v3496
  %v3498 = vpop.f32.mrf.mxu0
  %v3499 = vadd.f32 %v3306, %v3498
  %3500 = vmatprep.mubr.bf16.mxu0 0
  %3501 = vmatmul.mubr.bf16.gmra.mxu0 %v773
  %v3502 = vpop.f32.mrf.mxu0
  %v3503 = vadd.f32 %v3310, %v3502
  %v3504 = vpop.f32.mrf.mxu0
  %v3505 = vadd.f32 %v3312, %v3504
  %v3506 = vpop.f32.mrf.mxu0
  %v3507 = vadd.f32 %v3314, %v3506
  %v3508 = vpop.f32.mrf.mxu0
  %v3509 = vadd.f32 %v3316, %v3508
  %3510 = vmatprep.mubr.bf16.mxu0 0
  %3511 = vmatmul.mubr.bf16.gmra.mxu0 %v780
  %v3512 = vpop.f32.mrf.mxu0
  %v3513 = vadd.f32 %v3320, %v3512
  %v3514 = vpop.f32.mrf.mxu0
  %v3515 = vadd.f32 %v3322, %v3514
  %v3516 = vpop.f32.mrf.mxu0
  %v3517 = vadd.f32 %v3324, %v3516
  %v3518 = vpop.f32.mrf.mxu0
  %v3519 = vadd.f32 %v3326, %v3518
  %3520 = vmatprep.mubr.bf16.mxu0 0
  %3521 = vmatmul.mubr.bf16.gmra.mxu0 %v787
  %v3522 = vpop.f32.mrf.mxu0
  %v3523 = vadd.f32 %v3330, %v3522
  %v3524 = vpop.f32.mrf.mxu0
  %v3525 = vadd.f32 %v3332, %v3524
  %v3526 = vpop.f32.mrf.mxu0
  %v3527 = vadd.f32 %v3334, %v3526
  %v3528 = vpop.f32.mrf.mxu0
  %v3529 = vadd.f32 %v3336, %v3528
  %3530 = vmatprep.mubr.bf16.mxu0 0
  %3531 = vmatmul.mubr.bf16.gmra.mxu0 %v794
  %v3532 = vpop.f32.mrf.mxu0
  %v3533 = vadd.f32 %v3340, %v3532
  %v3534 = vpop.f32.mrf.mxu0
  %v3535 = vadd.f32 %v3342, %v3534
  %v3536 = vpop.f32.mrf.mxu0
  %v3537 = vadd.f32 %v3344, %v3536
  %v3538 = vpop.f32.mrf.mxu0
  %v3539 = vadd.f32 %v3346, %v3538
  %3540 = vmatprep.mubr.bf16.mxu0 0
  %3541 = vmatmul.mubr.bf16.gmra.mxu0 %v801
  %v3542 = vpop.f32.mrf.mxu0
  %v3543 = vadd.f32 %v3350, %v3542
  %v3544 = vpop.f32.mrf.mxu0
  %v3545 = vadd.f32 %v3352, %v3544
  %v3546 = vpop.f32.mrf.mxu0
  %v3547 = vadd.f32 %v3354, %v3546
  %v3548 = vpop.f32.mrf.mxu0
  %v3549 = vadd.f32 %v3356, %v3548
  %3550 = vmatprep.mubr.bf16.mxu0 0
  %3551 = vmatmul.mubr.bf16.gmra.mxu0 %v808
  %v3552 = vpop.f32.mrf.mxu0
  %v3553 = vadd.f32 %v3360, %v3552
  %v3554 = vpop.f32.mrf.mxu0
  %v3555 = vadd.f32 %v3362, %v3554
  %v3556 = vpop.f32.mrf.mxu0
  %v3557 = vadd.f32 %v3364, %v3556
  %v3558 = vpop.f32.mrf.mxu0
  %v3559 = vadd.f32 %v3366, %v3558
  %3560 = vmatprep.mubr.bf16.mxu0 0
  %3561 = vmatmul.mubr.bf16.gmra.mxu0 %v815
  %v3562 = vpop.f32.mrf.mxu0
  %v3563 = vadd.f32 %v3370, %v3562
  %v3564 = vpop.f32.mrf.mxu0
  %v3565 = vadd.f32 %v3372, %v3564
  %v3566 = vpop.f32.mrf.mxu0
  %v3567 = vadd.f32 %v3374, %v3566
  %v3568 = vpop.f32.mrf.mxu0
  %v3569 = vadd.f32 %v3376, %v3568
  %3570 = vmatprep.mubr.bf16.mxu0 0
  %3571 = vmatmul.mubr.bf16.gmra.mxu0 %v822
  %v3572 = vpop.f32.mrf.mxu0
  %v3573 = vadd.f32 %v3380, %v3572
  %v3574 = vpop.f32.mrf.mxu0
  %v3575 = vadd.f32 %v3382, %v3574
  %v3576 = vpop.f32.mrf.mxu0
  %v3577 = vadd.f32 %v3384, %v3576
  %v3578 = vpop.f32.mrf.mxu0
  %v3579 = vadd.f32 %v3386, %v3578
  %3580 = vmatprep.mubr.bf16.mxu0 0
  %3581 = vmatmul.mubr.bf16.gmra.mxu0 %v829
  %v3582 = vpop.f32.mrf.mxu0
  %v3583 = vadd.f32 %v3390, %v3582
  %v3584 = vpop.f32.mrf.mxu0
  %v3585 = vadd.f32 %v3392, %v3584
  %v3586 = vpop.f32.mrf.mxu0
  %v3587 = vadd.f32 %v3394, %v3586
  %v3588 = vpop.f32.mrf.mxu0
  %v3589 = vadd.f32 %v3396, %v3588
  %3590 = vmatprep.mubr.bf16.mxu0 0
  %3591 = vmatmul.mubr.bf16.gmra.mxu0 %v836
  %v3592 = vpop.f32.mrf.mxu0
  %v3593 = vadd.f32 %v3400, %v3592
  %v3594 = vpop.f32.mrf.mxu0
  %v3595 = vadd.f32 %v3402, %v3594
  %v3596 = vpop.f32.mrf.mxu0
  %v3597 = vadd.f32 %v3404, %v3596
  %v3598 = vpop.f32.mrf.mxu0
  %v3599 = vadd.f32 %v3406, %v3598
  %3600 = vmatprep.mubr.bf16.mxu0 0
  %3601 = vmatmul.mubr.bf16.gmra.mxu0 %v843
  %v3602 = vpop.f32.mrf.mxu0
  %v3603 = vadd.f32 %v3410, %v3602
  %v3604 = vpop.f32.mrf.mxu0
  %v3605 = vadd.f32 %v3412, %v3604
  %v3606 = vpop.f32.mrf.mxu0
  %v3607 = vadd.f32 %v3414, %v3606
  %v3608 = vpop.f32.mrf.mxu0
  %v3609 = vadd.f32 %v3416, %v3608
  %3610 = vmatprep.mubr.bf16.mxu0 0
  %3611 = vmatmul.mubr.bf16.gmra.mxu0 %v850
  %v3612 = vpop.f32.mrf.mxu0
  %v3613 = vadd.f32 %v3420, %v3612
  %v3614 = vpop.f32.mrf.mxu0
  %v3615 = vadd.f32 %v3422, %v3614
  %v3616 = vpop.f32.mrf.mxu0
  %v3617 = vadd.f32 %v3424, %v3616
  %v3618 = vpop.f32.mrf.mxu0
  %v3619 = vadd.f32 %v3426, %v3618
  %3620 = vmatprep.mubr.bf16.mxu0 0
  %3621 = vmatmul.mubr.bf16.gmra.mxu0 %v857
  %v3622 = vpop.f32.mrf.mxu0
  %v3623 = vadd.f32 %v3430, %v3622
  %v3624 = vpop.f32.mrf.mxu0
  %v3625 = vadd.f32 %v3432, %v3624
  %v3626 = vpop.f32.mrf.mxu0
  %v3627 = vadd.f32 %v3434, %v3626
  %v3628 = vpop.f32.mrf.mxu0
  %v3629 = vadd.f32 %v3436, %v3628
  %3630 = vmatprep.mubr.bf16.mxu0 0
  %3631 = vmatmul.mubr.bf16.gmra.mxu0 %v864
  %v3632 = vpop.f32.mrf.mxu0
  %v3633 = vadd.f32 %v3440, %v3632
  %v3634 = vpop.f32.mrf.mxu0
  %v3635 = vadd.f32 %v3442, %v3634
  %v3636 = vpop.f32.mrf.mxu0
  %v3637 = vadd.f32 %v3444, %v3636
  %v3638 = vpop.f32.mrf.mxu0
  %v3639 = vadd.f32 %v3446, %v3638
  %3640 = vdwg.mxu0
  %v3641 = vmax.f32 %v2711, 0.0
  %v3642 = vmax.f32 %v2713, 0.0
  %v3643 = vmax.f32 %v3483, 0.0
  %v3644 = vmax.f32 %v3485, 0.0
  %v3645 = vmax.f32 %v2715, 0.0
  %v3646 = vmax.f32 %v2717, 0.0
  %v3647 = vmax.f32 %v3487, 0.0
  %v3648 = vmax.f32 %v3489, 0.0
  %v3649 = vmax.f32 %v2721, 0.0
  %v3650 = vmax.f32 %v2723, 0.0
  %v3651 = vmax.f32 %v3493, 0.0
  %v3652 = vmax.f32 %v3495, 0.0
  %v3653 = vmax.f32 %v2725, 0.0
  %v3654 = vmax.f32 %v2727, 0.0
  %v3655 = vmax.f32 %v3497, 0.0
  %v3656 = vmax.f32 %v3499, 0.0
  %v3657 = vmax.f32 %v2731, 0.0
  %v3658 = vmax.f32 %v2733, 0.0
  %v3659 = vmax.f32 %v3503, 0.0
  %v3660 = vmax.f32 %v3505, 0.0
  %v3661 = vmax.f32 %v2735, 0.0
  %v3662 = vmax.f32 %v2737, 0.0
  %v3663 = vmax.f32 %v3507, 0.0
  %v3664 = vmax.f32 %v3509, 0.0
  %v3665 = vmax.f32 %v2741, 0.0
  %v3666 = vmax.f32 %v2743, 0.0
  %v3667 = vmax.f32 %v3513, 0.0
  %v3668 = vmax.f32 %v3515, 0.0
  %v3669 = vmax.f32 %v2745, 0.0
  %v3670 = vmax.f32 %v2747, 0.0
  %v3671 = vmax.f32 %v3517, 0.0
  %v3672 = vmax.f32 %v3519, 0.0
  %v3673 = vmax.f32 %v2751, 0.0
  %v3674 = vmax.f32 %v2753, 0.0
  %v3675 = vmax.f32 %v3523, 0.0
  %v3676 = vmax.f32 %v3525, 0.0
  %v3677 = vmax.f32 %v2755, 0.0
  %v3678 = vmax.f32 %v2757, 0.0
  %v3679 = vmax.f32 %v3527, 0.0
  %v3680 = vmax.f32 %v3529, 0.0
  %v3681 = vmax.f32 %v2761, 0.0
  %v3682 = vmax.f32 %v2763, 0.0
  %v3683 = vmax.f32 %v3533, 0.0
  %v3684 = vmax.f32 %v3535, 0.0
  %v3685 = vmax.f32 %v2765, 0.0
  %v3686 = vmax.f32 %v2767, 0.0
  %v3687 = vmax.f32 %v3537, 0.0
  %v3688 = vmax.f32 %v3539, 0.0
  %v3689 = vmax.f32 %v2771, 0.0
  %v3690 = vmax.f32 %v2773, 0.0
  %v3691 = vmax.f32 %v3543, 0.0
  %v3692 = vmax.f32 %v3545, 0.0
  %v3693 = vmax.f32 %v2775, 0.0
  %v3694 = vmax.f32 %v2777, 0.0
  %v3695 = vmax.f32 %v3547, 0.0
  %v3696 = vmax.f32 %v3549, 0.0
  %v3697 = vmax.f32 %v2781, 0.0
  %v3698 = vmax.f32 %v2783, 0.0
  %v3699 = vmax.f32 %v3553, 0.0
  %v3700 = vmax.f32 %v3555, 0.0
  %v3701 = vmax.f32 %v2785, 0.0
  %v3702 = vmax.f32 %v2787, 0.0
  %v3703 = vmax.f32 %v3557, 0.0
  %v3704 = vmax.f32 %v3559, 0.0
  %v3705 = vmax.f32 %v2791, 0.0
  %v3706 = vmax.f32 %v2793, 0.0
  %v3707 = vmax.f32 %v3563, 0.0
  %v3708 = vmax.f32 %v3565, 0.0
  %v3709 = vmax.f32 %v2795, 0.0
  %v3710 = vmax.f32 %v2797, 0.0
  %v3711 = vmax.f32 %v3567, 0.0
  %v3712 = vmax.f32 %v3569, 0.0
  %v3713 = vmax.f32 %v2801, 0.0
  %v3714 = vmax.f32 %v2803, 0.0
  %v3715 = vmax.f32 %v3573, 0.0
  %v3716 = vmax.f32 %v3575, 0.0
  %v3717 = vmax.f32 %v2805, 0.0
  %v3718 = vmax.f32 %v2807, 0.0
  %v3719 = vmax.f32 %v3577, 0.0
  %v3720 = vmax.f32 %v3579, 0.0
  %v3721 = vmax.f32 %v2811, 0.0
  %v3722 = vmax.f32 %v2813, 0.0
  %v3723 = vmax.f32 %v3583, 0.0
  %v3724 = vmax.f32 %v3585, 0.0
  %v3725 = vmax.f32 %v2815, 0.0
  %v3726 = vmax.f32 %v2817, 0.0
  %v3727 = vmax.f32 %v3587, 0.0
  %v3728 = vmax.f32 %v3589, 0.0
  %v3729 = vmax.f32 %v2821, 0.0
  %v3730 = vmax.f32 %v2823, 0.0
  %v3731 = vmax.f32 %v3593, 0.0
  %v3732 = vmax.f32 %v3595, 0.0
  %v3733 = vmax.f32 %v2825, 0.0
  %v3734 = vmax.f32 %v2827, 0.0
  %v3735 = vmax.f32 %v3597, 0.0
  %v3736 = vmax.f32 %v3599, 0.0
  %v3737 = vmax.f32 %v2831, 0.0
  %v3738 = vmax.f32 %v2833, 0.0
  %v3739 = vmax.f32 %v3603, 0.0
  %v3740 = vmax.f32 %v3605, 0.0
  %v3741 = vmax.f32 %v2835, 0.0
  %v3742 = vmax.f32 %v2837, 0.0
  %v3743 = vmax.f32 %v3607, 0.0
  %v3744 = vmax.f32 %v3609, 0.0
  %v3745 = vmax.f32 %v2841, 0.0
  %v3746 = vmax.f32 %v2843, 0.0
  %v3747 = vmax.f32 %v3613, 0.0
  %v3748 = vmax.f32 %v3615, 0.0
  %v3749 = vmax.f32 %v2845, 0.0
  %v3750 = vmax.f32 %v2847, 0.0
  %v3751 = vmax.f32 %v3617, 0.0
  %v3752 = vmax.f32 %v3619, 0.0
  %v3753 = vmax.f32 %v2851, 0.0
  %v3754 = vmax.f32 %v2853, 0.0
  %v3755 = vmax.f32 %v3623, 0.0
  %v3756 = vmax.f32 %v3625, 0.0
  %v3757 = vmax.f32 %v2855, 0.0
  %v3758 = vmax.f32 %v2857, 0.0
  %v3759 = vmax.f32 %v3627, 0.0
  %v3760 = vmax.f32 %v3629, 0.0
  %v3761 = vmax.f32 %v2861, 0.0
  %v3762 = vmax.f32 %v2863, 0.0
  %v3763 = vmax.f32 %v3633, 0.0
  %v3764 = vmax.f32 %v3635, 0.0
  %v3765 = vmax.f32 %v2865, 0.0
  %v3766 = vmax.f32 %v2867, 0.0
  %v3767 = vmax.f32 %v3637, 0.0
  %v3768 = vmax.f32 %v3639, 0.0
  %v3769 = vpack.c.bf16 %v3645, %v3641
  %v3770 = vpack.c.bf16 %v3646, %v3642
  %v3771 = vpack.c.bf16 %v3647, %v3643
  %v3772 = vpack.c.bf16 %v3648, %v3644
  %v3773 = vpack.c.bf16 %v3653, %v3649
  %v3774 = vpack.c.bf16 %v3654, %v3650
  %v3775 = vpack.c.bf16 %v3655, %v3651
  %v3776 = vpack.c.bf16 %v3656, %v3652
  %v3777 = vpack.c.bf16 %v3661, %v3657
  %v3778 = vpack.c.bf16 %v3662, %v3658
  %v3779 = vpack.c.bf16 %v3663, %v3659
  %v3780 = vpack.c.bf16 %v3664, %v3660
  %v3781 = vpack.c.bf16 %v3669, %v3665
  %v3782 = vpack.c.bf16 %v3670, %v3666
  %v3783 = vpack.c.bf16 %v3671, %v3667
  %v3784 = vpack.c.bf16 %v3672, %v3668
  %v3785 = vpack.c.bf16 %v3677, %v3673
  %v3786 = vpack.c.bf16 %v3678, %v3674
  %v3787 = vpack.c.bf16 %v3679, %v3675
  %v3788 = vpack.c.bf16 %v3680, %v3676
  %v3789 = vpack.c.bf16 %v3685, %v3681
  %v3790 = vpack.c.bf16 %v3686, %v3682
  %v3791 = vpack.c.bf16 %v3687, %v3683
  %v3792 = vpack.c.bf16 %v3688, %v3684
  %v3793 = vpack.c.bf16 %v3693, %v3689
  %v3794 = vpack.c.bf16 %v3694, %v3690
  %v3795 = vpack.c.bf16 %v3695, %v3691
  %v3796 = vpack.c.bf16 %v3696, %v3692
  %v3797 = vpack.c.bf16 %v3701, %v3697
  %v3798 = vpack.c.bf16 %v3702, %v3698
  %v3799 = vpack.c.bf16 %v3703, %v3699
  %v3800 = vpack.c.bf16 %v3704, %v3700
  %v3801 = vpack.c.bf16 %v3709, %v3705
  %v3802 = vpack.c.bf16 %v3710, %v3706
  %v3803 = vpack.c.bf16 %v3711, %v3707
  %v3804 = vpack.c.bf16 %v3712, %v3708
  %v3805 = vpack.c.bf16 %v3717, %v3713
  %v3806 = vpack.c.bf16 %v3718, %v3714
  %v3807 = vpack.c.bf16 %v3719, %v3715
  %v3808 = vpack.c.bf16 %v3720, %v3716
  %v3809 = vpack.c.bf16 %v3725, %v3721
  %v3810 = vpack.c.bf16 %v3726, %v3722
  %v3811 = vpack.c.bf16 %v3727, %v3723
  %v3812 = vpack.c.bf16 %v3728, %v3724
  %v3813 = vpack.c.bf16 %v3733, %v3729
  %v3814 = vpack.c.bf16 %v3734, %v3730
  %v3815 = vpack.c.bf16 %v3735, %v3731
  %v3816 = vpack.c.bf16 %v3736, %v3732
  %v3817 = vpack.c.bf16 %v3741, %v3737
  %v3818 = vpack.c.bf16 %v3742, %v3738
  %v3819 = vpack.c.bf16 %v3743, %v3739
  %v3820 = vpack.c.bf16 %v3744, %v3740
  %v3821 = vpack.c.bf16 %v3749, %v3745
  %v3822 = vpack.c.bf16 %v3750, %v3746
  %v3823 = vpack.c.bf16 %v3751, %v3747
  %v3824 = vpack.c.bf16 %v3752, %v3748
  %v3825 = vpack.c.bf16 %v3757, %v3753
  %v3826 = vpack.c.bf16 %v3758, %v3754
  %v3827 = vpack.c.bf16 %v3759, %v3755
  %v3828 = vpack.c.bf16 %v3760, %v3756
  %v3829 = vpack.c.bf16 %v3765, %v3761
  %v3830 = vpack.c.bf16 %v3766, %v3762
  %v3831 = vpack.c.bf16 %v3767, %v3763
  %v3832 = vpack.c.bf16 %v3768, %v3764
  %v3833 = vld [vmem:[%s3] sm:$0xff]
  %v3834 = vld [vmem:[%s3 + $0x8] sm:$0xff]
  %v3835 = vld [vmem:[%s3 + $0x10] sm:$0xff]
  %v3836 = vld [vmem:[%s3 + $0x18] sm:$0xff]
  %v3837 = vld [vmem:[%s3 + $0x20] sm:$0xff]
  %v3838 = vld [vmem:[%s3 + $0x28] sm:$0xff]
  %v3839 = vld [vmem:[%s3 + $0x30] sm:$0xff]
  %v3840 = vld [vmem:[%s3 + $0x38] sm:$0xff]
  %v3841 = vld [vmem:[%s3 + $0x40] sm:$0xff]
  %v3842 = vld [vmem:[%s3 + $0x48] sm:$0xff]
  %v3843 = vld [vmem:[%s3 + $0x50] sm:$0xff]
  %v3844 = vld [vmem:[%s3 + $0x58] sm:$0xff]
  %v3845 = vld [vmem:[%s3 + $0x60] sm:$0xff]
  %v3846 = vld [vmem:[%s3 + $0x68] sm:$0xff]
  %v3847 = vld [vmem:[%s3 + $0x70] sm:$0xff]
  %v3848 = vld [vmem:[%s3 + $0x78] sm:$0xff]
  %v3849 = vld [vmem:[%s3 + $0x80] sm:$0xff]
  %v3850 = vld [vmem:[%s3 + $0x88] sm:$0xff]
  %v3851 = vld [vmem:[%s3 + $0x90] sm:$0xff]
  %v3852 = vld [vmem:[%s3 + $0x98] sm:$0xff]
  %v3853 = vld [vmem:[%s3 + $0xa0] sm:$0xff]
  %v3854 = vld [vmem:[%s3 + $0xa8] sm:$0xff]
  %v3855 = vld [vmem:[%s3 + $0xb0] sm:$0xff]
  %v3856 = vld [vmem:[%s3 + $0xb8] sm:$0xff]
  %v3857 = vld [vmem:[%s3 + $0xc0] sm:$0xff]
  %v3858 = vld [vmem:[%s3 + $0xc8] sm:$0xff]
  %v3859 = vld [vmem:[%s3 + $0xd0] sm:$0xff]
  %v3860 = vld [vmem:[%s3 + $0xd8] sm:$0xff]
  %v3861 = vld [vmem:[%s3 + $0xe0] sm:$0xff]
  %v3862 = vld [vmem:[%s3 + $0xe8] sm:$0xff]
  %v3863 = vld [vmem:[%s3 + $0xf0] sm:$0xff]
  %v3864 = vld [vmem:[%s3 + $0xf8] sm:$0xff]
  %v3865 = vld [vmem:[%s3 + $0x100] sm:$0xff]
  %v3866 = vld [vmem:[%s3 + $0x108] sm:$0xff]
  %v3867 = vld [vmem:[%s3 + $0x110] sm:$0xff]
  %v3868 = vld [vmem:[%s3 + $0x118] sm:$0xff]
  %v3869 = vld [vmem:[%s3 + $0x120] sm:$0xff]
  %v3870 = vld [vmem:[%s3 + $0x128] sm:$0xff]
  %v3871 = vld [vmem:[%s3 + $0x130] sm:$0xff]
  %v3872 = vld [vmem:[%s3 + $0x138] sm:$0xff]
  %v3873 = vld [vmem:[%s3 + $0x140] sm:$0xff]
  %v3874 = vld [vmem:[%s3 + $0x148] sm:$0xff]
  %v3875 = vld [vmem:[%s3 + $0x150] sm:$0xff]
  %v3876 = vld [vmem:[%s3 + $0x158] sm:$0xff]
  %v3877 = vld [vmem:[%s3 + $0x160] sm:$0xff]
  %v3878 = vld [vmem:[%s3 + $0x168] sm:$0xff]
  %v3879 = vld [vmem:[%s3 + $0x170] sm:$0xff]
  %v3880 = vld [vmem:[%s3 + $0x178] sm:$0xff]
  %v3881 = vld [vmem:[%s3 + $0x180] sm:$0xff]
  %v3882 = vld [vmem:[%s3 + $0x188] sm:$0xff]
  %v3883 = vld [vmem:[%s3 + $0x190] sm:$0xff]
  %v3884 = vld [vmem:[%s3 + $0x198] sm:$0xff]
  %v3885 = vld [vmem:[%s3 + $0x1a0] sm:$0xff]
  %v3886 = vld [vmem:[%s3 + $0x1a8] sm:$0xff]
  %v3887 = vld [vmem:[%s3 + $0x1b0] sm:$0xff]
  %v3888 = vld [vmem:[%s3 + $0x1b8] sm:$0xff]
  %v3889 = vld [vmem:[%s3 + $0x1c0] sm:$0xff]
  %v3890 = vld [vmem:[%s3 + $0x1c8] sm:$0xff]
  %v3891 = vld [vmem:[%s3 + $0x1d0] sm:$0xff]
  %v3892 = vld [vmem:[%s3 + $0x1d8] sm:$0xff]
  %v3893 = vld [vmem:[%s3 + $0x1e0] sm:$0xff]
  %v3894 = vld [vmem:[%s3 + $0x1e8] sm:$0xff]
  %v3895 = vld [vmem:[%s3 + $0x1f0] sm:$0xff]
  %v3896 = vld [vmem:[%s3 + $0x1f8] sm:$0xff]
  %v3897 = vld [vmem:[%s3 + $0x200] sm:$0xff]
  %v3898 = vld [vmem:[%s3 + $0x208] sm:$0xff]
  %v3899 = vld [vmem:[%s3 + $0x210] sm:$0xff]
  %v3900 = vld [vmem:[%s3 + $0x218] sm:$0xff]
  %v3901 = vld [vmem:[%s3 + $0x220] sm:$0xff]
  %v3902 = vld [vmem:[%s3 + $0x228] sm:$0xff]
  %v3903 = vld [vmem:[%s3 + $0x230] sm:$0xff]
  %v3904 = vld [vmem:[%s3 + $0x238] sm:$0xff]
  %v3905 = vld [vmem:[%s3 + $0x240] sm:$0xff]
  %v3906 = vld [vmem:[%s3 + $0x248] sm:$0xff]
  %v3907 = vld [vmem:[%s3 + $0x250] sm:$0xff]
  %v3908 = vld [vmem:[%s3 + $0x258] sm:$0xff]
  %v3909 = vld [vmem:[%s3 + $0x260] sm:$0xff]
  %v3910 = vld [vmem:[%s3 + $0x268] sm:$0xff]
  %v3911 = vld [vmem:[%s3 + $0x270] sm:$0xff]
  %v3912 = vld [vmem:[%s3 + $0x278] sm:$0xff]
  %v3913 = vld [vmem:[%s3 + $0x280] sm:$0xff]
  %v3914 = vld [vmem:[%s3 + $0x288] sm:$0xff]
  %v3915 = vld [vmem:[%s3 + $0x290] sm:$0xff]
  %v3916 = vld [vmem:[%s3 + $0x298] sm:$0xff]
  %v3917 = vld [vmem:[%s3 + $0x2a0] sm:$0xff]
  %v3918 = vld [vmem:[%s3 + $0x2a8] sm:$0xff]
  %v3919 = vld [vmem:[%s3 + $0x2b0] sm:$0xff]
  %v3920 = vld [vmem:[%s3 + $0x2b8] sm:$0xff]
  %v3921 = vld [vmem:[%s3 + $0x2c0] sm:$0xff]
  %v3922 = vld [vmem:[%s3 + $0x2c8] sm:$0xff]
  %v3923 = vld [vmem:[%s3 + $0x2d0] sm:$0xff]
  %v3924 = vld [vmem:[%s3 + $0x2d8] sm:$0xff]
  %v3925 = vld [vmem:[%s3 + $0x2e0] sm:$0xff]
  %v3926 = vld [vmem:[%s3 + $0x2e8] sm:$0xff]
  %v3927 = vld [vmem:[%s3 + $0x2f0] sm:$0xff]
  %v3928 = vld [vmem:[%s3 + $0x2f8] sm:$0xff]
  %v3929 = vld [vmem:[%s3 + $0x300] sm:$0xff]
  %v3930 = vld [vmem:[%s3 + $0x308] sm:$0xff]
  %v3931 = vld [vmem:[%s3 + $0x310] sm:$0xff]
  %v3932 = vld [vmem:[%s3 + $0x318] sm:$0xff]
  %v3933 = vld [vmem:[%s3 + $0x320] sm:$0xff]
  %v3934 = vld [vmem:[%s3 + $0x328] sm:$0xff]
  %v3935 = vld [vmem:[%s3 + $0x330] sm:$0xff]
  %v3936 = vld [vmem:[%s3 + $0x338] sm:$0xff]
  %v3937 = vld [vmem:[%s3 + $0x340] sm:$0xff]
  %v3938 = vld [vmem:[%s3 + $0x348] sm:$0xff]
  %v3939 = vld [vmem:[%s3 + $0x350] sm:$0xff]
  %v3940 = vld [vmem:[%s3 + $0x358] sm:$0xff]
  %v3941 = vld [vmem:[%s3 + $0x360] sm:$0xff]
  %v3942 = vld [vmem:[%s3 + $0x368] sm:$0xff]
  %v3943 = vld [vmem:[%s3 + $0x370] sm:$0xff]
  %v3944 = vld [vmem:[%s3 + $0x378] sm:$0xff]
  %v3945 = vld [vmem:[%s3 + $0x380] sm:$0xff]
  %v3946 = vld [vmem:[%s3 + $0x388] sm:$0xff]
  %v3947 = vld [vmem:[%s3 + $0x390] sm:$0xff]
  %v3948 = vld [vmem:[%s3 + $0x398] sm:$0xff]
  %v3949 = vld [vmem:[%s3 + $0x3a0] sm:$0xff]
  %v3950 = vld [vmem:[%s3 + $0x3a8] sm:$0xff]
  %v3951 = vld [vmem:[%s3 + $0x3b0] sm:$0xff]
  %v3952 = vld [vmem:[%s3 + $0x3b8] sm:$0xff]
  %v3953 = vld [vmem:[%s3 + $0x3c0] sm:$0xff]
  %v3954 = vld [vmem:[%s3 + $0x3c8] sm:$0xff]
  %v3955 = vld [vmem:[%s3 + $0x3d0] sm:$0xff]
  %v3956 = vld [vmem:[%s3 + $0x3d8] sm:$0xff]
  %v3957 = vld [vmem:[%s3 + $0x3e0] sm:$0xff]
  %v3958 = vld [vmem:[%s3 + $0x3e8] sm:$0xff]
  %v3959 = vld [vmem:[%s3 + $0x3f0] sm:$0xff]
  %v3960 = vld [vmem:[%s3 + $0x3f8] sm:$0xff]
  %v3961 = vld [vmem:[%s4] sm:$0xf]
  %v3963 = vlaneseq
  %v3964 = vshrl.u32 %v3963, 7
  %v3965 = vsub.s32 0, %v3964
  %v3966 = vrot.slane %v3961, %v3965
  %v3967 = vlaneseq
  %v3968 = vshrl.u32 %v3967, 7
  %v3969 = vsub.s32 1, %v3968
  %v3970 = vrot.slane %v3961, %v3969
  %v3971 = vlaneseq
  %v3972 = vshrl.u32 %v3971, 7
  %v3973 = vsub.s32 2, %v3972
  %v3974 = vrot.slane %v3961, %v3973
  %v3975 = vlaneseq
  %v3976 = vshrl.u32 %v3975, 7
  %v3977 = vsub.s32 3, %v3976
  %v3978 = vrot.slane %v3961, %v3977
  %v4111 = vunpack.c.l.b16 %v3833
  %v4112 = vunpack.c.h.b16 %v3833
  %v4113 = vunpack.c.l.b16 %v3834
  %v4114 = vunpack.c.h.b16 %v3834
  %v4115 = vunpack.c.l.b16 %v3835
  %v4116 = vunpack.c.h.b16 %v3835
  %v4117 = vunpack.c.l.b16 %v3836
  %v4118 = vunpack.c.h.b16 %v3836
  %v4119 = vunpack.c.l.b16 %v3837
  %v4120 = vunpack.c.h.b16 %v3837
  %v4121 = vunpack.c.l.b16 %v3838
  %v4122 = vunpack.c.h.b16 %v3838
  %v4123 = vunpack.c.l.b16 %v3839
  %v4124 = vunpack.c.h.b16 %v3839
  %v4125 = vunpack.c.l.b16 %v3840
  %v4126 = vunpack.c.h.b16 %v3840
  %v4127 = vunpack.c.l.b16 %v3841
  %v4128 = vunpack.c.h.b16 %v3841
  %v4129 = vunpack.c.l.b16 %v3842
  %v4130 = vunpack.c.h.b16 %v3842
  %v4131 = vunpack.c.l.b16 %v3843
  %v4132 = vunpack.c.h.b16 %v3843
  %v4133 = vunpack.c.l.b16 %v3844
  %v4134 = vunpack.c.h.b16 %v3844
  %v4135 = vunpack.c.l.b16 %v3845
  %v4136 = vunpack.c.h.b16 %v3845
  %v4137 = vunpack.c.l.b16 %v3846
  %v4138 = vunpack.c.h.b16 %v3846
  %v4139 = vunpack.c.l.b16 %v3847
  %v4140 = vunpack.c.h.b16 %v3847
  %v4141 = vunpack.c.l.b16 %v3848
  %v4142 = vunpack.c.h.b16 %v3848
  %v4143 = vunpack.c.l.b16 %v3849
  %v4144 = vunpack.c.h.b16 %v3849
  %v4145 = vunpack.c.l.b16 %v3850
  %v4146 = vunpack.c.h.b16 %v3850
  %v4147 = vunpack.c.l.b16 %v3851
  %v4148 = vunpack.c.h.b16 %v3851
  %v4149 = vunpack.c.l.b16 %v3852
  %v4150 = vunpack.c.h.b16 %v3852
  %v4151 = vunpack.c.l.b16 %v3853
  %v4152 = vunpack.c.h.b16 %v3853
  %v4153 = vunpack.c.l.b16 %v3854
  %v4154 = vunpack.c.h.b16 %v3854
  %v4155 = vunpack.c.l.b16 %v3855
  %v4156 = vunpack.c.h.b16 %v3855
  %v4157 = vunpack.c.l.b16 %v3856
  %v4158 = vunpack.c.h.b16 %v3856
  %v4159 = vunpack.c.l.b16 %v3857
  %v4160 = vunpack.c.h.b16 %v3857
  %v4161 = vunpack.c.l.b16 %v3858
  %v4162 = vunpack.c.h.b16 %v3858
  %v4163 = vunpack.c.l.b16 %v3859
  %v4164 = vunpack.c.h.b16 %v3859
  %v4165 = vunpack.c.l.b16 %v3860
  %v4166 = vunpack.c.h.b16 %v3860
  %v4167 = vunpack.c.l.b16 %v3861
  %v4168 = vunpack.c.h.b16 %v3861
  %v4169 = vunpack.c.l.b16 %v3862
  %v4170 = vunpack.c.h.b16 %v3862
  %v4171 = vunpack.c.l.b16 %v3863
  %v4172 = vunpack.c.h.b16 %v3863
  %v4173 = vunpack.c.l.b16 %v3864
  %v4174 = vunpack.c.h.b16 %v3864
  %v4175 = vunpack.c.l.b16 %v3865
  %v4176 = vunpack.c.h.b16 %v3865
  %v4177 = vunpack.c.l.b16 %v3866
  %v4178 = vunpack.c.h.b16 %v3866
  %v4179 = vunpack.c.l.b16 %v3867
  %v4180 = vunpack.c.h.b16 %v3867
  %v4181 = vunpack.c.l.b16 %v3868
  %v4182 = vunpack.c.h.b16 %v3868
  %v4183 = vunpack.c.l.b16 %v3869
  %v4184 = vunpack.c.h.b16 %v3869
  %v4185 = vunpack.c.l.b16 %v3870
  %v4186 = vunpack.c.h.b16 %v3870
  %v4187 = vunpack.c.l.b16 %v3871
  %v4188 = vunpack.c.h.b16 %v3871
  %v4189 = vunpack.c.l.b16 %v3872
  %v4190 = vunpack.c.h.b16 %v3872
  %v4191 = vunpack.c.l.b16 %v3873
  %v4192 = vunpack.c.h.b16 %v3873
  %v4193 = vunpack.c.l.b16 %v3874
  %v4194 = vunpack.c.h.b16 %v3874
  %v4195 = vunpack.c.l.b16 %v3875
  %v4196 = vunpack.c.h.b16 %v3875
  %v4197 = vunpack.c.l.b16 %v3876
  %v4198 = vunpack.c.h.b16 %v3876
  %v4199 = vunpack.c.l.b16 %v3877
  %v4200 = vunpack.c.h.b16 %v3877
  %v4201 = vunpack.c.l.b16 %v3878
  %v4202 = vunpack.c.h.b16 %v3878
  %v4203 = vunpack.c.l.b16 %v3879
  %v4204 = vunpack.c.h.b16 %v3879
  %v4205 = vunpack.c.l.b16 %v3880
  %v4206 = vunpack.c.h.b16 %v3880
  %v4207 = vunpack.c.l.b16 %v3881
  %v4208 = vunpack.c.h.b16 %v3881
  %v4209 = vunpack.c.l.b16 %v3882
  %v4210 = vunpack.c.h.b16 %v3882
  %v4211 = vunpack.c.l.b16 %v3883
  %v4212 = vunpack.c.h.b16 %v3883
  %v4213 = vunpack.c.l.b16 %v3884
  %v4214 = vunpack.c.h.b16 %v3884
  %v4215 = vunpack.c.l.b16 %v3885
  %v4216 = vunpack.c.h.b16 %v3885
  %v4217 = vunpack.c.l.b16 %v3886
  %v4218 = vunpack.c.h.b16 %v3886
  %v4219 = vunpack.c.l.b16 %v3887
  %v4220 = vunpack.c.h.b16 %v3887
  %v4221 = vunpack.c.l.b16 %v3888
  %v4222 = vunpack.c.h.b16 %v3888
  %v4223 = vunpack.c.l.b16 %v3889
  %v4224 = vunpack.c.h.b16 %v3889
  %v4225 = vunpack.c.l.b16 %v3890
  %v4226 = vunpack.c.h.b16 %v3890
  %v4227 = vunpack.c.l.b16 %v3891
  %v4228 = vunpack.c.h.b16 %v3891
  %v4229 = vunpack.c.l.b16 %v3892
  %v4230 = vunpack.c.h.b16 %v3892
  %v4231 = vunpack.c.l.b16 %v3893
  %v4232 = vunpack.c.h.b16 %v3893
  %v4233 = vunpack.c.l.b16 %v3894
  %v4234 = vunpack.c.h.b16 %v3894
  %v4235 = vunpack.c.l.b16 %v3895
  %v4236 = vunpack.c.h.b16 %v3895
  %v4237 = vunpack.c.l.b16 %v3896
  %v4238 = vunpack.c.h.b16 %v3896
  %v4239 = vunpack.c.l.b16 %v3897
  %v4240 = vunpack.c.h.b16 %v3897
  %v4241 = vunpack.c.l.b16 %v3898
  %v4242 = vunpack.c.h.b16 %v3898
  %v4243 = vunpack.c.l.b16 %v3899
  %v4244 = vunpack.c.h.b16 %v3899
  %v4245 = vunpack.c.l.b16 %v3900
  %v4246 = vunpack.c.h.b16 %v3900
  %v4247 = vunpack.c.l.b16 %v3901
  %v4248 = vunpack.c.h.b16 %v3901
  %v4249 = vunpack.c.l.b16 %v3902
  %v4250 = vunpack.c.h.b16 %v3902
  %v4251 = vunpack.c.l.b16 %v3903
  %v4252 = vunpack.c.h.b16 %v3903
  %v4253 = vunpack.c.l.b16 %v3904
  %v4254 = vunpack.c.h.b16 %v3904
  %v4255 = vunpack.c.l.b16 %v3905
  %v4256 = vunpack.c.h.b16 %v3905
  %v4257 = vunpack.c.l.b16 %v3906
  %v4258 = vunpack.c.h.b16 %v3906
  %v4259 = vunpack.c.l.b16 %v3907
  %v4260 = vunpack.c.h.b16 %v3907
  %v4261 = vunpack.c.l.b16 %v3908
  %v4262 = vunpack.c.h.b16 %v3908
  %v4263 = vunpack.c.l.b16 %v3909
  %v4264 = vunpack.c.h.b16 %v3909
  %v4265 = vunpack.c.l.b16 %v3910
  %v4266 = vunpack.c.h.b16 %v3910
  %v4267 = vunpack.c.l.b16 %v3911
  %v4268 = vunpack.c.h.b16 %v3911
  %v4269 = vunpack.c.l.b16 %v3912
  %v4270 = vunpack.c.h.b16 %v3912
  %v4271 = vunpack.c.l.b16 %v3913
  %v4272 = vunpack.c.h.b16 %v3913
  %v4273 = vunpack.c.l.b16 %v3914
  %v4274 = vunpack.c.h.b16 %v3914
  %v4275 = vunpack.c.l.b16 %v3915
  %v4276 = vunpack.c.h.b16 %v3915
  %v4277 = vunpack.c.l.b16 %v3916
  %v4278 = vunpack.c.h.b16 %v3916
  %v4279 = vunpack.c.l.b16 %v3917
  %v4280 = vunpack.c.h.b16 %v3917
  %v4281 = vunpack.c.l.b16 %v3918
  %v4282 = vunpack.c.h.b16 %v3918
  %v4283 = vunpack.c.l.b16 %v3919
  %v4284 = vunpack.c.h.b16 %v3919
  %v4285 = vunpack.c.l.b16 %v3920
  %v4286 = vunpack.c.h.b16 %v3920
  %v4287 = vunpack.c.l.b16 %v3921
  %v4288 = vunpack.c.h.b16 %v3921
  %v4289 = vunpack.c.l.b16 %v3922
  %v4290 = vunpack.c.h.b16 %v3922
  %v4291 = vunpack.c.l.b16 %v3923
  %v4292 = vunpack.c.h.b16 %v3923
  %v4293 = vunpack.c.l.b16 %v3924
  %v4294 = vunpack.c.h.b16 %v3924
  %v4295 = vunpack.c.l.b16 %v3925
  %v4296 = vunpack.c.h.b16 %v3925
  %v4297 = vunpack.c.l.b16 %v3926
  %v4298 = vunpack.c.h.b16 %v3926
  %v4299 = vunpack.c.l.b16 %v3927
  %v4300 = vunpack.c.h.b16 %v3927
  %v4301 = vunpack.c.l.b16 %v3928
  %v4302 = vunpack.c.h.b16 %v3928
  %v4303 = vunpack.c.l.b16 %v3929
  %v4304 = vunpack.c.h.b16 %v3929
  %v4305 = vunpack.c.l.b16 %v3930
  %v4306 = vunpack.c.h.b16 %v3930
  %v4307 = vunpack.c.l.b16 %v3931
  %v4308 = vunpack.c.h.b16 %v3931
  %v4309 = vunpack.c.l.b16 %v3932
  %v4310 = vunpack.c.h.b16 %v3932
  %v4311 = vunpack.c.l.b16 %v3933
  %v4312 = vunpack.c.h.b16 %v3933
  %v4313 = vunpack.c.l.b16 %v3934
  %v4314 = vunpack.c.h.b16 %v3934
  %v4315 = vunpack.c.l.b16 %v3935
  %v4316 = vunpack.c.h.b16 %v3935
  %v4317 = vunpack.c.l.b16 %v3936
  %v4318 = vunpack.c.h.b16 %v3936
  %v4319 = vunpack.c.l.b16 %v3937
  %v4320 = vunpack.c.h.b16 %v3937
  %v4321 = vunpack.c.l.b16 %v3938
  %v4322 = vunpack.c.h.b16 %v3938
  %v4323 = vunpack.c.l.b16 %v3939
  %v4324 = vunpack.c.h.b16 %v3939
  %v4325 = vunpack.c.l.b16 %v3940
  %v4326 = vunpack.c.h.b16 %v3940
  %v4327 = vunpack.c.l.b16 %v3941
  %v4328 = vunpack.c.h.b16 %v3941
  %v4329 = vunpack.c.l.b16 %v3942
  %v4330 = vunpack.c.h.b16 %v3942
  %v4331 = vunpack.c.l.b16 %v3943
  %v4332 = vunpack.c.h.b16 %v3943
  %v4333 = vunpack.c.l.b16 %v3944
  %v4334 = vunpack.c.h.b16 %v3944
  %v4335 = vunpack.c.l.b16 %v3945
  %v4336 = vunpack.c.h.b16 %v3945
  %v4337 = vunpack.c.l.b16 %v3946
  %v4338 = vunpack.c.h.b16 %v3946
  %v4339 = vunpack.c.l.b16 %v3947
  %v4340 = vunpack.c.h.b16 %v3947
  %v4341 = vunpack.c.l.b16 %v3948
  %v4342 = vunpack.c.h.b16 %v3948
  %v4343 = vunpack.c.l.b16 %v3949
  %v4344 = vunpack.c.h.b16 %v3949
  %v4345 = vunpack.c.l.b16 %v3950
  %v4346 = vunpack.c.h.b16 %v3950
  %v4347 = vunpack.c.l.b16 %v3951
  %v4348 = vunpack.c.h.b16 %v3951
  %v4349 = vunpack.c.l.b16 %v3952
  %v4350 = vunpack.c.h.b16 %v3952
  %v4351 = vunpack.c.l.b16 %v3953
  %v4352 = vunpack.c.h.b16 %v3953
  %v4353 = vunpack.c.l.b16 %v3954
  %v4354 = vunpack.c.h.b16 %v3954
  %v4355 = vunpack.c.l.b16 %v3955
  %v4356 = vunpack.c.h.b16 %v3955
  %v4357 = vunpack.c.l.b16 %v3956
  %v4358 = vunpack.c.h.b16 %v3956
  %v4359 = vunpack.c.l.b16 %v3957
  %v4360 = vunpack.c.h.b16 %v3957
  %v4361 = vunpack.c.l.b16 %v3958
  %v4362 = vunpack.c.h.b16 %v3958
  %v4363 = vunpack.c.l.b16 %v3959
  %v4364 = vunpack.c.h.b16 %v3959
  %v4365 = vunpack.c.l.b16 %v3960
  %v4366 = vunpack.c.h.b16 %v3960
  %v4367 = vpack.c.b16 %v4115, %v4111
  %v4368 = vpack.c.b16 %v4116, %v4112
  %v4369 = vpack.c.b16 %v4117, %v4113
  %v4370 = vpack.c.b16 %v4118, %v4114
  %v4371 = vpack.c.b16 %v4123, %v4119
  %v4372 = vpack.c.b16 %v4124, %v4120
  %v4373 = vpack.c.b16 %v4125, %v4121
  %v4374 = vpack.c.b16 %v4126, %v4122
  %v4375 = vpack.c.b16 %v4131, %v4127
  %v4376 = vpack.c.b16 %v4132, %v4128
  %v4377 = vpack.c.b16 %v4133, %v4129
  %v4378 = vpack.c.b16 %v4134, %v4130
  %v4379 = vpack.c.b16 %v4139, %v4135
  %v4380 = vpack.c.b16 %v4140, %v4136
  %v4381 = vpack.c.b16 %v4141, %v4137
  %v4382 = vpack.c.b16 %v4142, %v4138
  %v4383 = vpack.c.b16 %v4147, %v4143
  %v4384 = vpack.c.b16 %v4148, %v4144
  %v4385 = vpack.c.b16 %v4149, %v4145
  %v4386 = vpack.c.b16 %v4150, %v4146
  %v4387 = vpack.c.b16 %v4155, %v4151
  %v4388 = vpack.c.b16 %v4156, %v4152
  %v4389 = vpack.c.b16 %v4157, %v4153
  %v4390 = vpack.c.b16 %v4158, %v4154
  %v4391 = vpack.c.b16 %v4163, %v4159
  %v4392 = vpack.c.b16 %v4164, %v4160
  %v4393 = vpack.c.b16 %v4165, %v4161
  %v4394 = vpack.c.b16 %v4166, %v4162
  %v4395 = vpack.c.b16 %v4171, %v4167
  %v4396 = vpack.c.b16 %v4172, %v4168
  %v4397 = vpack.c.b16 %v4173, %v4169
  %v4398 = vpack.c.b16 %v4174, %v4170
  %v4399 = vpack.c.b16 %v4179, %v4175
  %v4400 = vpack.c.b16 %v4180, %v4176
  %v4401 = vpack.c.b16 %v4181, %v4177
  %v4402 = vpack.c.b16 %v4182, %v4178
  %v4403 = vpack.c.b16 %v4187, %v4183
  %v4404 = vpack.c.b16 %v4188, %v4184
  %v4405 = vpack.c.b16 %v4189, %v4185
  %v4406 = vpack.c.b16 %v4190, %v4186
  %v4407 = vpack.c.b16 %v4195, %v4191
  %v4408 = vpack.c.b16 %v4196, %v4192
  %v4409 = vpack.c.b16 %v4197, %v4193
  %v4410 = vpack.c.b16 %v4198, %v4194
  %v4411 = vpack.c.b16 %v4203, %v4199
  %v4412 = vpack.c.b16 %v4204, %v4200
  %v4413 = vpack.c.b16 %v4205, %v4201
  %v4414 = vpack.c.b16 %v4206, %v4202
  %v4415 = vpack.c.b16 %v4211, %v4207
  %v4416 = vpack.c.b16 %v4212, %v4208
  %v4417 = vpack.c.b16 %v4213, %v4209
  %v4418 = vpack.c.b16 %v4214, %v4210
  %v4419 = vpack.c.b16 %v4219, %v4215
  %v4420 = vpack.c.b16 %v4220, %v4216
  %v4421 = vpack.c.b16 %v4221, %v4217
  %v4422 = vpack.c.b16 %v4222, %v4218
  %v4423 = vpack.c.b16 %v4227, %v4223
  %v4424 = vpack.c.b16 %v4228, %v4224
  %v4425 = vpack.c.b16 %v4229, %v4225
  %v4426 = vpack.c.b16 %v4230, %v4226
  %v4427 = vpack.c.b16 %v4235, %v4231
  %v4428 = vpack.c.b16 %v4236, %v4232
  %v4429 = vpack.c.b16 %v4237, %v4233
  %v4430 = vpack.c.b16 %v4238, %v4234
  %v4431 = vpack.c.b16 %v4243, %v4239
  %v4432 = vpack.c.b16 %v4244, %v4240
  %v4433 = vpack.c.b16 %v4245, %v4241
  %v4434 = vpack.c.b16 %v4246, %v4242
  %v4435 = vpack.c.b16 %v4251, %v4247
  %v4436 = vpack.c.b16 %v4252, %v4248
  %v4437 = vpack.c.b16 %v4253, %v4249
  %v4438 = vpack.c.b16 %v4254, %v4250
  %v4439 = vpack.c.b16 %v4259, %v4255
  %v4440 = vpack.c.b16 %v4260, %v4256
  %v4441 = vpack.c.b16 %v4261, %v4257
  %v4442 = vpack.c.b16 %v4262, %v4258
  %v4443 = vpack.c.b16 %v4267, %v4263
  %v4444 = vpack.c.b16 %v4268, %v4264
  %v4445 = vpack.c.b16 %v4269, %v4265
  %v4446 = vpack.c.b16 %v4270, %v4266
  %v4447 = vpack.c.b16 %v4275, %v4271
  %v4448 = vpack.c.b16 %v4276, %v4272
  %v4449 = vpack.c.b16 %v4277, %v4273
  %v4450 = vpack.c.b16 %v4278, %v4274
  %v4451 = vpack.c.b16 %v4283, %v4279
  %v4452 = vpack.c.b16 %v4284, %v4280
  %v4453 = vpack.c.b16 %v4285, %v4281
  %v4454 = vpack.c.b16 %v4286, %v4282
  %v4455 = vpack.c.b16 %v4291, %v4287
  %v4456 = vpack.c.b16 %v4292, %v4288
  %v4457 = vpack.c.b16 %v4293, %v4289
  %v4458 = vpack.c.b16 %v4294, %v4290
  %v4459 = vpack.c.b16 %v4299, %v4295
  %v4460 = vpack.c.b16 %v4300, %v4296
  %v4461 = vpack.c.b16 %v4301, %v4297
  %v4462 = vpack.c.b16 %v4302, %v4298
  %v4463 = vpack.c.b16 %v4307, %v4303
  %v4464 = vpack.c.b16 %v4308, %v4304
  %v4465 = vpack.c.b16 %v4309, %v4305
  %v4466 = vpack.c.b16 %v4310, %v4306
  %v4467 = vpack.c.b16 %v4315, %v4311
  %v4468 = vpack.c.b16 %v4316, %v4312
  %v4469 = vpack.c.b16 %v4317, %v4313
  %v4470 = vpack.c.b16 %v4318, %v4314
  %v4471 = vpack.c.b16 %v4323, %v4319
  %v4472 = vpack.c.b16 %v4324, %v4320
  %v4473 = vpack.c.b16 %v4325, %v4321
  %v4474 = vpack.c.b16 %v4326, %v4322
  %v4475 = vpack.c.b16 %v4331, %v4327
  %v4476 = vpack.c.b16 %v4332, %v4328
  %v4477 = vpack.c.b16 %v4333, %v4329
  %v4478 = vpack.c.b16 %v4334, %v4330
  %v4479 = vpack.c.b16 %v4339, %v4335
  %v4480 = vpack.c.b16 %v4340, %v4336
  %v4481 = vpack.c.b16 %v4341, %v4337
  %v4482 = vpack.c.b16 %v4342, %v4338
  %v4483 = vpack.c.b16 %v4347, %v4343
  %v4484 = vpack.c.b16 %v4348, %v4344
  %v4485 = vpack.c.b16 %v4349, %v4345
  %v4486 = vpack.c.b16 %v4350, %v4346
  %v4487 = vpack.c.b16 %v4355, %v4351
  %v4488 = vpack.c.b16 %v4356, %v4352
  %v4489 = vpack.c.b16 %v4357, %v4353
  %v4490 = vpack.c.b16 %v4358, %v4354
  %v4491 = vpack.c.b16 %v4363, %v4359
  %v4492 = vpack.c.b16 %v4364, %v4360
  %v4493 = vpack.c.b16 %v4365, %v4361
  %v4494 = vpack.c.b16 %v4366, %v4362
  %4623 = vmatprep.subr.bf16.mxu0 %v4396
  %4624 = vmatpush1.bf16.msra.mxu0 %v4395
  %4625 = vmatprep.subr.bf16.mxu0 %v4392
  %4626 = vmatpush1.bf16.msra.mxu0 %v4391
  %4627 = vmatprep.subr.bf16.mxu0 %v4388
  %4628 = vmatpush1.bf16.msra.mxu0 %v4387
  %4629 = vmatprep.subr.bf16.mxu0 %v4384
  %4630 = vmatpush1.bf16.msra.mxu0 %v4383
  %4631 = vmatprep.subr.bf16.mxu0 %v4380
  %4632 = vmatpush1.bf16.msra.mxu0 %v4379
  %4633 = vmatprep.subr.bf16.mxu0 %v4376
  %4634 = vmatpush1.bf16.msra.mxu0 %v4375
  %4635 = vmatprep.subr.bf16.mxu0 %v4372
  %4636 = vmatpush1.bf16.msra.mxu0 %v4371
  %4637 = vmatprep.subr.bf16.mxu0 %v4368
  %4638 = vmatpush1.bf16.msra.mxu0 %v4367
  %4639 = vmatprep.subr.bf16.mxu0 %v4428
  %4640 = vmatpush2.bf16.msra.mxu0 %v4427
  %4641 = vmatprep.subr.bf16.mxu0 %v4424
  %4642 = vmatpush2.bf16.msra.mxu0 %v4423
  %4643 = vmatprep.subr.bf16.mxu0 %v4420
  %4644 = vmatpush2.bf16.msra.mxu0 %v4419
  %4645 = vmatprep.subr.bf16.mxu0 %v4416
  %4646 = vmatpush2.bf16.msra.mxu0 %v4415
  %4647 = vmatprep.subr.bf16.mxu0 %v4412
  %4648 = vmatpush2.bf16.msra.mxu0 %v4411
  %4649 = vmatprep.subr.bf16.mxu0 %v4408
  %4650 = vmatpush2.bf16.msra.mxu0 %v4407
  %4651 = vmatprep.subr.bf16.mxu0 %v4404
  %4652 = vmatpush2.bf16.msra.mxu0 %v4403
  %4653 = vmatprep.subr.bf16.mxu0 %v4400
  %4654 = vmatpush2.bf16.msra.mxu0 %v4399
  %4655 = vmatprep.mubr.bf16.mxu0 %v3770
  %4656 = vmatmul.mubr.bf16.gmra.mxu0 %v3769
  %v4657 = vpop.f32.mrf.mxu0
  %v4658 = vadd.f32 %v3966, %v4657
  %v4659 = vpop.f32.mrf.mxu0
  %v4660 = vadd.f32 %v3970, %v4659
  %v4661 = vpop.f32.mrf.mxu0
  %v4662 = vadd.f32 %v3966, %v4661
  %v4663 = vpop.f32.mrf.mxu0
  %v4664 = vadd.f32 %v3970, %v4663
  %4665 = vmatprep.mubr.bf16.mxu0 %v3774
  %4666 = vmatmul.mubr.bf16.gmra.mxu0 %v3773
  %v4667 = vpop.f32.mrf.mxu0
  %v4668 = vadd.f32 %v3966, %v4667
  %v4669 = vpop.f32.mrf.mxu0
  %v4670 = vadd.f32 %v3970, %v4669
  %v4671 = vpop.f32.mrf.mxu0
  %v4672 = vadd.f32 %v3966, %v4671
  %v4673 = vpop.f32.mrf.mxu0
  %v4674 = vadd.f32 %v3970, %v4673
  %4675 = vmatprep.mubr.bf16.mxu0 %v3778
  %4676 = vmatmul.mubr.bf16.gmra.mxu0 %v3777
  %v4677 = vpop.f32.mrf.mxu0
  %v4678 = vadd.f32 %v3966, %v4677
  %v4679 = vpop.f32.mrf.mxu0
  %v4680 = vadd.f32 %v3970, %v4679
  %v4681 = vpop.f32.mrf.mxu0
  %v4682 = vadd.f32 %v3966, %v4681
  %v4683 = vpop.f32.mrf.mxu0
  %v4684 = vadd.f32 %v3970, %v4683
  %4685 = vmatprep.mubr.bf16.mxu0 %v3782
  %4686 = vmatmul.mubr.bf16.gmra.mxu0 %v3781
  %v4687 = vpop.f32.mrf.mxu0
  %v4688 = vadd.f32 %v3966, %v4687
  %v4689 = vpop.f32.mrf.mxu0
  %v4690 = vadd.f32 %v3970, %v4689
  %v4691 = vpop.f32.mrf.mxu0
  %v4692 = vadd.f32 %v3966, %v4691
  %v4693 = vpop.f32.mrf.mxu0
  %v4694 = vadd.f32 %v3970, %v4693
  %4695 = vmatprep.mubr.bf16.mxu0 %v3786
  %4696 = vmatmul.mubr.bf16.gmra.mxu0 %v3785
  %v4697 = vpop.f32.mrf.mxu0
  %v4698 = vadd.f32 %v3966, %v4697
  %v4699 = vpop.f32.mrf.mxu0
  %v4700 = vadd.f32 %v3970, %v4699
  %v4701 = vpop.f32.mrf.mxu0
  %v4702 = vadd.f32 %v3966, %v4701
  %v4703 = vpop.f32.mrf.mxu0
  %v4704 = vadd.f32 %v3970, %v4703
  %4705 = vmatprep.mubr.bf16.mxu0 %v3790
  %4706 = vmatmul.mubr.bf16.gmra.mxu0 %v3789
  %v4707 = vpop.f32.mrf.mxu0
  %v4708 = vadd.f32 %v3966, %v4707
  %v4709 = vpop.f32.mrf.mxu0
  %v4710 = vadd.f32 %v3970, %v4709
  %v4711 = vpop.f32.mrf.mxu0
  %v4712 = vadd.f32 %v3966, %v4711
  %v4713 = vpop.f32.mrf.mxu0
  %v4714 = vadd.f32 %v3970, %v4713
  %4715 = vmatprep.mubr.bf16.mxu0 %v3794
  %4716 = vmatmul.mubr.bf16.gmra.mxu0 %v3793
  %v4717 = vpop.f32.mrf.mxu0
  %v4718 = vadd.f32 %v3966, %v4717
  %v4719 = vpop.f32.mrf.mxu0
  %v4720 = vadd.f32 %v3970, %v4719
  %v4721 = vpop.f32.mrf.mxu0
  %v4722 = vadd.f32 %v3966, %v4721
  %v4723 = vpop.f32.mrf.mxu0
  %v4724 = vadd.f32 %v3970, %v4723
  %4725 = vmatprep.mubr.bf16.mxu0 %v3798
  %4726 = vmatmul.mubr.bf16.gmra.mxu0 %v3797
  %v4727 = vpop.f32.mrf.mxu0
  %v4728 = vadd.f32 %v3966, %v4727
  %v4729 = vpop.f32.mrf.mxu0
  %v4730 = vadd.f32 %v3970, %v4729
  %v4731 = vpop.f32.mrf.mxu0
  %v4732 = vadd.f32 %v3966, %v4731
  %v4733 = vpop.f32.mrf.mxu0
  %v4734 = vadd.f32 %v3970, %v4733
  %4735 = vmatprep.mubr.bf16.mxu0 %v3802
  %4736 = vmatmul.mubr.bf16.gmra.mxu0 %v3801
  %v4737 = vpop.f32.mrf.mxu0
  %v4738 = vadd.f32 %v3966, %v4737
  %v4739 = vpop.f32.mrf.mxu0
  %v4740 = vadd.f32 %v3970, %v4739
  %v4741 = vpop.f32.mrf.mxu0
  %v4742 = vadd.f32 %v3966, %v4741
  %v4743 = vpop.f32.mrf.mxu0
  %v4744 = vadd.f32 %v3970, %v4743
  %4745 = vmatprep.mubr.bf16.mxu0 %v3806
  %4746 = vmatmul.mubr.bf16.gmra.mxu0 %v3805
  %v4747 = vpop.f32.mrf.mxu0
  %v4748 = vadd.f32 %v3966, %v4747
  %v4749 = vpop.f32.mrf.mxu0
  %v4750 = vadd.f32 %v3970, %v4749
  %v4751 = vpop.f32.mrf.mxu0
  %v4752 = vadd.f32 %v3966, %v4751
  %v4753 = vpop.f32.mrf.mxu0
  %v4754 = vadd.f32 %v3970, %v4753
  %4755 = vmatprep.mubr.bf16.mxu0 %v3810
  %4756 = vmatmul.mubr.bf16.gmra.mxu0 %v3809
  %v4757 = vpop.f32.mrf.mxu0
  %v4758 = vadd.f32 %v3966, %v4757
  %v4759 = vpop.f32.mrf.mxu0
  %v4760 = vadd.f32 %v3970, %v4759
  %v4761 = vpop.f32.mrf.mxu0
  %v4762 = vadd.f32 %v3966, %v4761
  %v4763 = vpop.f32.mrf.mxu0
  %v4764 = vadd.f32 %v3970, %v4763
  %4765 = vmatprep.mubr.bf16.mxu0 %v3814
  %4766 = vmatmul.mubr.bf16.gmra.mxu0 %v3813
  %v4767 = vpop.f32.mrf.mxu0
  %v4768 = vadd.f32 %v3966, %v4767
  %v4769 = vpop.f32.mrf.mxu0
  %v4770 = vadd.f32 %v3970, %v4769
  %v4771 = vpop.f32.mrf.mxu0
  %v4772 = vadd.f32 %v3966, %v4771
  %v4773 = vpop.f32.mrf.mxu0
  %v4774 = vadd.f32 %v3970, %v4773
  %4775 = vmatprep.mubr.bf16.mxu0 %v3818
  %4776 = vmatmul.mubr.bf16.gmra.mxu0 %v3817
  %v4777 = vpop.f32.mrf.mxu0
  %v4778 = vadd.f32 %v3966, %v4777
  %v4779 = vpop.f32.mrf.mxu0
  %v4780 = vadd.f32 %v3970, %v4779
  %v4781 = vpop.f32.mrf.mxu0
  %v4782 = vadd.f32 %v3966, %v4781
  %v4783 = vpop.f32.mrf.mxu0
  %v4784 = vadd.f32 %v3970, %v4783
  %4785 = vmatprep.mubr.bf16.mxu0 %v3822
  %4786 = vmatmul.mubr.bf16.gmra.mxu0 %v3821
  %v4787 = vpop.f32.mrf.mxu0
  %v4788 = vadd.f32 %v3966, %v4787
  %v4789 = vpop.f32.mrf.mxu0
  %v4790 = vadd.f32 %v3970, %v4789
  %v4791 = vpop.f32.mrf.mxu0
  %v4792 = vadd.f32 %v3966, %v4791
  %v4793 = vpop.f32.mrf.mxu0
  %v4794 = vadd.f32 %v3970, %v4793
  %4795 = vmatprep.mubr.bf16.mxu0 %v3826
  %4796 = vmatmul.mubr.bf16.gmra.mxu0 %v3825
  %v4797 = vpop.f32.mrf.mxu0
  %v4798 = vadd.f32 %v3966, %v4797
  %v4799 = vpop.f32.mrf.mxu0
  %v4800 = vadd.f32 %v3970, %v4799
  %v4801 = vpop.f32.mrf.mxu0
  %v4802 = vadd.f32 %v3966, %v4801
  %v4803 = vpop.f32.mrf.mxu0
  %v4804 = vadd.f32 %v3970, %v4803
  %4805 = vmatprep.mubr.bf16.mxu0 %v3830
  %4806 = vmatmul.mubr.bf16.gmra.mxu0 %v3829
  %v4807 = vpop.f32.mrf.mxu0
  %v4808 = vadd.f32 %v3966, %v4807
  %v4809 = vpop.f32.mrf.mxu0
  %v4810 = vadd.f32 %v3970, %v4809
  %v4811 = vpop.f32.mrf.mxu0
  %v4812 = vadd.f32 %v3966, %v4811
  %v4813 = vpop.f32.mrf.mxu0
  %v4814 = vadd.f32 %v3970, %v4813
  %4815 = vdwg.mxu0
  %4816 = vmatprep.subr.bf16.mxu0 %v4460
  %4817 = vmatpush1.bf16.msra.mxu0 %v4459
  %4818 = vmatprep.subr.bf16.mxu0 %v4456
  %4819 = vmatpush1.bf16.msra.mxu0 %v4455
  %4820 = vmatprep.subr.bf16.mxu0 %v4452
  %4821 = vmatpush1.bf16.msra.mxu0 %v4451
  %4822 = vmatprep.subr.bf16.mxu0 %v4448
  %4823 = vmatpush1.bf16.msra.mxu0 %v4447
  %4824 = vmatprep.subr.bf16.mxu0 %v4444
  %4825 = vmatpush1.bf16.msra.mxu0 %v4443
  %4826 = vmatprep.subr.bf16.mxu0 %v4440
  %4827 = vmatpush1.bf16.msra.mxu0 %v4439
  %4828 = vmatprep.subr.bf16.mxu0 %v4436
  %4829 = vmatpush1.bf16.msra.mxu0 %v4435
  %4830 = vmatprep.subr.bf16.mxu0 %v4432
  %4831 = vmatpush1.bf16.msra.mxu0 %v4431
  %4832 = vmatprep.subr.bf16.mxu0 %v4492
  %4833 = vmatpush2.bf16.msra.mxu0 %v4491
  %4834 = vmatprep.subr.bf16.mxu0 %v4488
  %4835 = vmatpush2.bf16.msra.mxu0 %v4487
  %4836 = vmatprep.subr.bf16.mxu0 %v4484
  %4837 = vmatpush2.bf16.msra.mxu0 %v4483
  %4838 = vmatprep.subr.bf16.mxu0 %v4480
  %4839 = vmatpush2.bf16.msra.mxu0 %v4479
  %4840 = vmatprep.subr.bf16.mxu0 %v4476
  %4841 = vmatpush2.bf16.msra.mxu0 %v4475
  %4842 = vmatprep.subr.bf16.mxu0 %v4472
  %4843 = vmatpush2.bf16.msra.mxu0 %v4471
  %4844 = vmatprep.subr.bf16.mxu0 %v4468
  %4845 = vmatpush2.bf16.msra.mxu0 %v4467
  %4846 = vmatprep.subr.bf16.mxu0 %v4464
  %4847 = vmatpush2.bf16.msra.mxu0 %v4463
  %4848 = vmatprep.mubr.bf16.mxu0 %v3772
  %4849 = vmatmul.mubr.bf16.gmra.mxu0 %v3771
  %v4850 = vpop.f32.mrf.mxu0
  %v4851 = vadd.f32 %v4658, %v4850
  %v4852 = vpop.f32.mrf.mxu0
  %v4853 = vadd.f32 %v4660, %v4852
  %v4854 = vpop.f32.mrf.mxu0
  %v4855 = vadd.f32 %v4662, %v4854
  %v4856 = vpop.f32.mrf.mxu0
  %v4857 = vadd.f32 %v4664, %v4856
  %4858 = vmatprep.mubr.bf16.mxu0 %v3776
  %4859 = vmatmul.mubr.bf16.gmra.mxu0 %v3775
  %v4860 = vpop.f32.mrf.mxu0
  %v4861 = vadd.f32 %v4668, %v4860
  %v4862 = vpop.f32.mrf.mxu0
  %v4863 = vadd.f32 %v4670, %v4862
  %v4864 = vpop.f32.mrf.mxu0
  %v4865 = vadd.f32 %v4672, %v4864
  %v4866 = vpop.f32.mrf.mxu0
  %v4867 = vadd.f32 %v4674, %v4866
  %4868 = vmatprep.mubr.bf16.mxu0 %v3780
  %4869 = vmatmul.mubr.bf16.gmra.mxu0 %v3779
  %v4870 = vpop.f32.mrf.mxu0
  %v4871 = vadd.f32 %v4678, %v4870
  %v4872 = vpop.f32.mrf.mxu0
  %v4873 = vadd.f32 %v4680, %v4872
  %v4874 = vpop.f32.mrf.mxu0
  %v4875 = vadd.f32 %v4682, %v4874
  %v4876 = vpop.f32.mrf.mxu0
  %v4877 = vadd.f32 %v4684, %v4876
  %4878 = vmatprep.mubr.bf16.mxu0 %v3784
  %4879 = vmatmul.mubr.bf16.gmra.mxu0 %v3783
  %v4880 = vpop.f32.mrf.mxu0
  %v4881 = vadd.f32 %v4688, %v4880
  %v4882 = vpop.f32.mrf.mxu0
  %v4883 = vadd.f32 %v4690, %v4882
  %v4884 = vpop.f32.mrf.mxu0
  %v4885 = vadd.f32 %v4692, %v4884
  %v4886 = vpop.f32.mrf.mxu0
  %v4887 = vadd.f32 %v4694, %v4886
  %4888 = vmatprep.mubr.bf16.mxu0 %v3788
  %4889 = vmatmul.mubr.bf16.gmra.mxu0 %v3787
  %v4890 = vpop.f32.mrf.mxu0
  %v4891 = vadd.f32 %v4698, %v4890
  %v4892 = vpop.f32.mrf.mxu0
  %v4893 = vadd.f32 %v4700, %v4892
  %v4894 = vpop.f32.mrf.mxu0
  %v4895 = vadd.f32 %v4702, %v4894
  %v4896 = vpop.f32.mrf.mxu0
  %v4897 = vadd.f32 %v4704, %v4896
  %4898 = vmatprep.mubr.bf16.mxu0 %v3792
  %4899 = vmatmul.mubr.bf16.gmra.mxu0 %v3791
  %v4900 = vpop.f32.mrf.mxu0
  %v4901 = vadd.f32 %v4708, %v4900
  %v4902 = vpop.f32.mrf.mxu0
  %v4903 = vadd.f32 %v4710, %v4902
  %v4904 = vpop.f32.mrf.mxu0
  %v4905 = vadd.f32 %v4712, %v4904
  %v4906 = vpop.f32.mrf.mxu0
  %v4907 = vadd.f32 %v4714, %v4906
  %4908 = vmatprep.mubr.bf16.mxu0 %v3796
  %4909 = vmatmul.mubr.bf16.gmra.mxu0 %v3795
  %v4910 = vpop.f32.mrf.mxu0
  %v4911 = vadd.f32 %v4718, %v4910
  %v4912 = vpop.f32.mrf.mxu0
  %v4913 = vadd.f32 %v4720, %v4912
  %v4914 = vpop.f32.mrf.mxu0
  %v4915 = vadd.f32 %v4722, %v4914
  %v4916 = vpop.f32.mrf.mxu0
  %v4917 = vadd.f32 %v4724, %v4916
  %4918 = vmatprep.mubr.bf16.mxu0 %v3800
  %4919 = vmatmul.mubr.bf16.gmra.mxu0 %v3799
  %v4920 = vpop.f32.mrf.mxu0
  %v4921 = vadd.f32 %v4728, %v4920
  %v4922 = vpop.f32.mrf.mxu0
  %v4923 = vadd.f32 %v4730, %v4922
  %v4924 = vpop.f32.mrf.mxu0
  %v4925 = vadd.f32 %v4732, %v4924
  %v4926 = vpop.f32.mrf.mxu0
  %v4927 = vadd.f32 %v4734, %v4926
  %4928 = vmatprep.mubr.bf16.mxu0 %v3804
  %4929 = vmatmul.mubr.bf16.gmra.mxu0 %v3803
  %v4930 = vpop.f32.mrf.mxu0
  %v4931 = vadd.f32 %v4738, %v4930
  %v4932 = vpop.f32.mrf.mxu0
  %v4933 = vadd.f32 %v4740, %v4932
  %v4934 = vpop.f32.mrf.mxu0
  %v4935 = vadd.f32 %v4742, %v4934
  %v4936 = vpop.f32.mrf.mxu0
  %v4937 = vadd.f32 %v4744, %v4936
  %4938 = vmatprep.mubr.bf16.mxu0 %v3808
  %4939 = vmatmul.mubr.bf16.gmra.mxu0 %v3807
  %v4940 = vpop.f32.mrf.mxu0
  %v4941 = vadd.f32 %v4748, %v4940
  %v4942 = vpop.f32.mrf.mxu0
  %v4943 = vadd.f32 %v4750, %v4942
  %v4944 = vpop.f32.mrf.mxu0
  %v4945 = vadd.f32 %v4752, %v4944
  %v4946 = vpop.f32.mrf.mxu0
  %v4947 = vadd.f32 %v4754, %v4946
  %4948 = vmatprep.mubr.bf16.mxu0 %v3812
  %4949 = vmatmul.mubr.bf16.gmra.mxu0 %v3811
  %v4950 = vpop.f32.mrf.mxu0
  %v4951 = vadd.f32 %v4758, %v4950
  %v4952 = vpop.f32.mrf.mxu0
  %v4953 = vadd.f32 %v4760, %v4952
  %v4954 = vpop.f32.mrf.mxu0
  %v4955 = vadd.f32 %v4762, %v4954
  %v4956 = vpop.f32.mrf.mxu0
  %v4957 = vadd.f32 %v4764, %v4956
  %4958 = vmatprep.mubr.bf16.mxu0 %v3816
  %4959 = vmatmul.mubr.bf16.gmra.mxu0 %v3815
  %v4960 = vpop.f32.mrf.mxu0
  %v4961 = vadd.f32 %v4768, %v4960
  %v4962 = vpop.f32.mrf.mxu0
  %v4963 = vadd.f32 %v4770, %v4962
  %v4964 = vpop.f32.mrf.mxu0
  %v4965 = vadd.f32 %v4772, %v4964
  %v4966 = vpop.f32.mrf.mxu0
  %v4967 = vadd.f32 %v4774, %v4966
  %4968 = vmatprep.mubr.bf16.mxu0 %v3820
  %4969 = vmatmul.mubr.bf16.gmra.mxu0 %v3819
  %v4970 = vpop.f32.mrf.mxu0
  %v4971 = vadd.f32 %v4778, %v4970
  %v4972 = vpop.f32.mrf.mxu0
  %v4973 = vadd.f32 %v4780, %v4972
  %v4974 = vpop.f32.mrf.mxu0
  %v4975 = vadd.f32 %v4782, %v4974
  %v4976 = vpop.f32.mrf.mxu0
  %v4977 = vadd.f32 %v4784, %v4976
  %4978 = vmatprep.mubr.bf16.mxu0 %v3824
  %4979 = vmatmul.mubr.bf16.gmra.mxu0 %v3823
  %v4980 = vpop.f32.mrf.mxu0
  %v4981 = vadd.f32 %v4788, %v4980
  %v4982 = vpop.f32.mrf.mxu0
  %v4983 = vadd.f32 %v4790, %v4982
  %v4984 = vpop.f32.mrf.mxu0
  %v4985 = vadd.f32 %v4792, %v4984
  %v4986 = vpop.f32.mrf.mxu0
  %v4987 = vadd.f32 %v4794, %v4986
  %4988 = vmatprep.mubr.bf16.mxu0 %v3828
  %4989 = vmatmul.mubr.bf16.gmra.mxu0 %v3827
  %v4990 = vpop.f32.mrf.mxu0
  %v4991 = vadd.f32 %v4798, %v4990
  %v4992 = vpop.f32.mrf.mxu0
  %v4993 = vadd.f32 %v4800, %v4992
  %v4994 = vpop.f32.mrf.mxu0
  %v4995 = vadd.f32 %v4802, %v4994
  %v4996 = vpop.f32.mrf.mxu0
  %v4997 = vadd.f32 %v4804, %v4996
  %4998 = vmatprep.mubr.bf16.mxu0 %v3832
  %4999 = vmatmul.mubr.bf16.gmra.mxu0 %v3831
  %v5000 = vpop.f32.mrf.mxu0
  %v5001 = vadd.f32 %v4808, %v5000
  %v5002 = vpop.f32.mrf.mxu0
  %v5003 = vadd.f32 %v4810, %v5002
  %v5004 = vpop.f32.mrf.mxu0
  %v5005 = vadd.f32 %v4812, %v5004
  %v5006 = vpop.f32.mrf.mxu0
  %v5007 = vadd.f32 %v4814, %v5006
  %5008 = vdwg.mxu0
  %5009 = vmatprep.subr.bf16.mxu0 %v4398
  %5010 = vmatpush1.bf16.msra.mxu0 %v4397
  %5011 = vmatprep.subr.bf16.mxu0 %v4394
  %5012 = vmatpush1.bf16.msra.mxu0 %v4393
  %5013 = vmatprep.subr.bf16.mxu0 %v4390
  %5014 = vmatpush1.bf16.msra.mxu0 %v4389
  %5015 = vmatprep.subr.bf16.mxu0 %v4386
  %5016 = vmatpush1.bf16.msra.mxu0 %v4385
  %5017 = vmatprep.subr.bf16.mxu0 %v4382
  %5018 = vmatpush1.bf16.msra.mxu0 %v4381
  %5019 = vmatprep.subr.bf16.mxu0 %v4378
  %5020 = vmatpush1.bf16.msra.mxu0 %v4377
  %5021 = vmatprep.subr.bf16.mxu0 %v4374
  %5022 = vmatpush1.bf16.msra.mxu0 %v4373
  %5023 = vmatprep.subr.bf16.mxu0 %v4370
  %5024 = vmatpush1.bf16.msra.mxu0 %v4369
  %5025 = vmatprep.subr.bf16.mxu0 %v4430
  %5026 = vmatpush2.bf16.msra.mxu0 %v4429
  %5027 = vmatprep.subr.bf16.mxu0 %v4426
  %5028 = vmatpush2.bf16.msra.mxu0 %v4425
  %5029 = vmatprep.subr.bf16.mxu0 %v4422
  %5030 = vmatpush2.bf16.msra.mxu0 %v4421
  %5031 = vmatprep.subr.bf16.mxu0 %v4418
  %5032 = vmatpush2.bf16.msra.mxu0 %v4417
  %5033 = vmatprep.subr.bf16.mxu0 %v4414
  %5034 = vmatpush2.bf16.msra.mxu0 %v4413
  %5035 = vmatprep.subr.bf16.mxu0 %v4410
  %5036 = vmatpush2.bf16.msra.mxu0 %v4409
  %5037 = vmatprep.subr.bf16.mxu0 %v4406
  %5038 = vmatpush2.bf16.msra.mxu0 %v4405
  %5039 = vmatprep.subr.bf16.mxu0 %v4402
  %5040 = vmatpush2.bf16.msra.mxu0 %v4401
  %5041 = vmatprep.mubr.bf16.mxu0 %v3770
  %5042 = vmatmul.mubr.bf16.gmra.mxu0 %v3769
  %v5043 = vpop.f32.mrf.mxu0
  %v5044 = vadd.f32 %v3974, %v5043
  %v5045 = vpop.f32.mrf.mxu0
  %v5046 = vadd.f32 %v3978, %v5045
  %v5047 = vpop.f32.mrf.mxu0
  %v5048 = vadd.f32 %v3974, %v5047
  %v5049 = vpop.f32.mrf.mxu0
  %v5050 = vadd.f32 %v3978, %v5049
  %5051 = vmatprep.mubr.bf16.mxu0 %v3774
  %5052 = vmatmul.mubr.bf16.gmra.mxu0 %v3773
  %v5053 = vpop.f32.mrf.mxu0
  %v5054 = vadd.f32 %v3974, %v5053
  %v5055 = vpop.f32.mrf.mxu0
  %v5056 = vadd.f32 %v3978, %v5055
  %v5057 = vpop.f32.mrf.mxu0
  %v5058 = vadd.f32 %v3974, %v5057
  %v5059 = vpop.f32.mrf.mxu0
  %v5060 = vadd.f32 %v3978, %v5059
  %5061 = vmatprep.mubr.bf16.mxu0 %v3778
  %5062 = vmatmul.mubr.bf16.gmra.mxu0 %v3777
  %v5063 = vpop.f32.mrf.mxu0
  %v5064 = vadd.f32 %v3974, %v5063
  %v5065 = vpop.f32.mrf.mxu0
  %v5066 = vadd.f32 %v3978, %v5065
  %v5067 = vpop.f32.mrf.mxu0
  %v5068 = vadd.f32 %v3974, %v5067
  %v5069 = vpop.f32.mrf.mxu0
  %v5070 = vadd.f32 %v3978, %v5069
  %5071 = vmatprep.mubr.bf16.mxu0 %v3782
  %5072 = vmatmul.mubr.bf16.gmra.mxu0 %v3781
  %v5073 = vpop.f32.mrf.mxu0
  %v5074 = vadd.f32 %v3974, %v5073
  %v5075 = vpop.f32.mrf.mxu0
  %v5076 = vadd.f32 %v3978, %v5075
  %v5077 = vpop.f32.mrf.mxu0
  %v5078 = vadd.f32 %v3974, %v5077
  %v5079 = vpop.f32.mrf.mxu0
  %v5080 = vadd.f32 %v3978, %v5079
  %5081 = vmatprep.mubr.bf16.mxu0 %v3786
  %5082 = vmatmul.mubr.bf16.gmra.mxu0 %v3785
  %v5083 = vpop.f32.mrf.mxu0
  %v5084 = vadd.f32 %v3974, %v5083
  %v5085 = vpop.f32.mrf.mxu0
  %v5086 = vadd.f32 %v3978, %v5085
  %v5087 = vpop.f32.mrf.mxu0
  %v5088 = vadd.f32 %v3974, %v5087
  %v5089 = vpop.f32.mrf.mxu0
  %v5090 = vadd.f32 %v3978, %v5089
  %5091 = vmatprep.mubr.bf16.mxu0 %v3790
  %5092 = vmatmul.mubr.bf16.gmra.mxu0 %v3789
  %v5093 = vpop.f32.mrf.mxu0
  %v5094 = vadd.f32 %v3974, %v5093
  %v5095 = vpop.f32.mrf.mxu0
  %v5096 = vadd.f32 %v3978, %v5095
  %v5097 = vpop.f32.mrf.mxu0
  %v5098 = vadd.f32 %v3974, %v5097
  %v5099 = vpop.f32.mrf.mxu0
  %v5100 = vadd.f32 %v3978, %v5099
  %5101 = vmatprep.mubr.bf16.mxu0 %v3794
  %5102 = vmatmul.mubr.bf16.gmra.mxu0 %v3793
  %v5103 = vpop.f32.mrf.mxu0
  %v5104 = vadd.f32 %v3974, %v5103
  %v5105 = vpop.f32.mrf.mxu0
  %v5106 = vadd.f32 %v3978, %v5105
  %v5107 = vpop.f32.mrf.mxu0
  %v5108 = vadd.f32 %v3974, %v5107
  %v5109 = vpop.f32.mrf.mxu0
  %v5110 = vadd.f32 %v3978, %v5109
  %5111 = vmatprep.mubr.bf16.mxu0 %v3798
  %5112 = vmatmul.mubr.bf16.gmra.mxu0 %v3797
  %v5113 = vpop.f32.mrf.mxu0
  %v5114 = vadd.f32 %v3974, %v5113
  %v5115 = vpop.f32.mrf.mxu0
  %v5116 = vadd.f32 %v3978, %v5115
  %v5117 = vpop.f32.mrf.mxu0
  %v5118 = vadd.f32 %v3974, %v5117
  %v5119 = vpop.f32.mrf.mxu0
  %v5120 = vadd.f32 %v3978, %v5119
  %5121 = vmatprep.mubr.bf16.mxu0 %v3802
  %5122 = vmatmul.mubr.bf16.gmra.mxu0 %v3801
  %v5123 = vpop.f32.mrf.mxu0
  %v5124 = vadd.f32 %v3974, %v5123
  %v5125 = vpop.f32.mrf.mxu0
  %v5126 = vadd.f32 %v3978, %v5125
  %v5127 = vpop.f32.mrf.mxu0
  %v5128 = vadd.f32 %v3974, %v5127
  %v5129 = vpop.f32.mrf.mxu0
  %v5130 = vadd.f32 %v3978, %v5129
  %5131 = vmatprep.mubr.bf16.mxu0 %v3806
  %5132 = vmatmul.mubr.bf16.gmra.mxu0 %v3805
  %v5133 = vpop.f32.mrf.mxu0
  %v5134 = vadd.f32 %v3974, %v5133
  %v5135 = vpop.f32.mrf.mxu0
  %v5136 = vadd.f32 %v3978, %v5135
  %v5137 = vpop.f32.mrf.mxu0
  %v5138 = vadd.f32 %v3974, %v5137
  %v5139 = vpop.f32.mrf.mxu0
  %v5140 = vadd.f32 %v3978, %v5139
  %5141 = vmatprep.mubr.bf16.mxu0 %v3810
  %5142 = vmatmul.mubr.bf16.gmra.mxu0 %v3809
  %v5143 = vpop.f32.mrf.mxu0
  %v5144 = vadd.f32 %v3974, %v5143
  %v5145 = vpop.f32.mrf.mxu0
  %v5146 = vadd.f32 %v3978, %v5145
  %v5147 = vpop.f32.mrf.mxu0
  %v5148 = vadd.f32 %v3974, %v5147
  %v5149 = vpop.f32.mrf.mxu0
  %v5150 = vadd.f32 %v3978, %v5149
  %5151 = vmatprep.mubr.bf16.mxu0 %v3814
  %5152 = vmatmul.mubr.bf16.gmra.mxu0 %v3813
  %v5153 = vpop.f32.mrf.mxu0
  %v5154 = vadd.f32 %v3974, %v5153
  %v5155 = vpop.f32.mrf.mxu0
  %v5156 = vadd.f32 %v3978, %v5155
  %v5157 = vpop.f32.mrf.mxu0
  %v5158 = vadd.f32 %v3974, %v5157
  %v5159 = vpop.f32.mrf.mxu0
  %v5160 = vadd.f32 %v3978, %v5159
  %5161 = vmatprep.mubr.bf16.mxu0 %v3818
  %5162 = vmatmul.mubr.bf16.gmra.mxu0 %v3817
  %v5163 = vpop.f32.mrf.mxu0
  %v5164 = vadd.f32 %v3974, %v5163
  %v5165 = vpop.f32.mrf.mxu0
  %v5166 = vadd.f32 %v3978, %v5165
  %v5167 = vpop.f32.mrf.mxu0
  %v5168 = vadd.f32 %v3974, %v5167
  %v5169 = vpop.f32.mrf.mxu0
  %v5170 = vadd.f32 %v3978, %v5169
  %5171 = vmatprep.mubr.bf16.mxu0 %v3822
  %5172 = vmatmul.mubr.bf16.gmra.mxu0 %v3821
  %v5173 = vpop.f32.mrf.mxu0
  %v5174 = vadd.f32 %v3974, %v5173
  %v5175 = vpop.f32.mrf.mxu0
  %v5176 = vadd.f32 %v3978, %v5175
  %v5177 = vpop.f32.mrf.mxu0
  %v5178 = vadd.f32 %v3974, %v5177
  %v5179 = vpop.f32.mrf.mxu0
  %v5180 = vadd.f32 %v3978, %v5179
  %5181 = vmatprep.mubr.bf16.mxu0 %v3826
  %5182 = vmatmul.mubr.bf16.gmra.mxu0 %v3825
  %v5183 = vpop.f32.mrf.mxu0
  %v5184 = vadd.f32 %v3974, %v5183
  %v5185 = vpop.f32.mrf.mxu0
  %v5186 = vadd.f32 %v3978, %v5185
  %v5187 = vpop.f32.mrf.mxu0
  %v5188 = vadd.f32 %v3974, %v5187
  %v5189 = vpop.f32.mrf.mxu0
  %v5190 = vadd.f32 %v3978, %v5189
  %5191 = vmatprep.mubr.bf16.mxu0 %v3830
  %5192 = vmatmul.mubr.bf16.gmra.mxu0 %v3829
  %v5193 = vpop.f32.mrf.mxu0
  %v5194 = vadd.f32 %v3974, %v5193
  %v5195 = vpop.f32.mrf.mxu0
  %v5196 = vadd.f32 %v3978, %v5195
  %v5197 = vpop.f32.mrf.mxu0
  %v5198 = vadd.f32 %v3974, %v5197
  %v5199 = vpop.f32.mrf.mxu0
  %v5200 = vadd.f32 %v3978, %v5199
  %5201 = vdwg.mxu0
  %5202 = vmatprep.subr.bf16.mxu0 %v4462
  %5203 = vmatpush1.bf16.msra.mxu0 %v4461
  %5204 = vmatprep.subr.bf16.mxu0 %v4458
  %5205 = vmatpush1.bf16.msra.mxu0 %v4457
  %5206 = vmatprep.subr.bf16.mxu0 %v4454
  %5207 = vmatpush1.bf16.msra.mxu0 %v4453
  %5208 = vmatprep.subr.bf16.mxu0 %v4450
  %5209 = vmatpush1.bf16.msra.mxu0 %v4449
  %5210 = vmatprep.subr.bf16.mxu0 %v4446
  %5211 = vmatpush1.bf16.msra.mxu0 %v4445
  %5212 = vmatprep.subr.bf16.mxu0 %v4442
  %5213 = vmatpush1.bf16.msra.mxu0 %v4441
  %5214 = vmatprep.subr.bf16.mxu0 %v4438
  %5215 = vmatpush1.bf16.msra.mxu0 %v4437
  %5216 = vmatprep.subr.bf16.mxu0 %v4434
  %5217 = vmatpush1.bf16.msra.mxu0 %v4433
  %5218 = vmatprep.subr.bf16.mxu0 %v4494
  %5219 = vmatpush2.bf16.msra.mxu0 %v4493
  %5220 = vmatprep.subr.bf16.mxu0 %v4490
  %5221 = vmatpush2.bf16.msra.mxu0 %v4489
  %5222 = vmatprep.subr.bf16.mxu0 %v4486
  %5223 = vmatpush2.bf16.msra.mxu0 %v4485
  %5224 = vmatprep.subr.bf16.mxu0 %v4482
  %5225 = vmatpush2.bf16.msra.mxu0 %v4481
  %5226 = vmatprep.subr.bf16.mxu0 %v4478
  %5227 = vmatpush2.bf16.msra.mxu0 %v4477
  %5228 = vmatprep.subr.bf16.mxu0 %v4474
  %5229 = vmatpush2.bf16.msra.mxu0 %v4473
  %5230 = vmatprep.subr.bf16.mxu0 %v4470
  %5231 = vmatpush2.bf16.msra.mxu0 %v4469
  %5232 = vmatprep.subr.bf16.mxu0 %v4466
  %5233 = vmatpush2.bf16.msra.mxu0 %v4465
  %5234 = vmatprep.mubr.bf16.mxu0 %v3772
  %5235 = vmatmul.mubr.bf16.gmra.mxu0 %v3771
  %v5236 = vpop.f32.mrf.mxu0
  %v5237 = vadd.f32 %v5044, %v5236
  %v5238 = vpop.f32.mrf.mxu0
  %v5239 = vadd.f32 %v5046, %v5238
  %v5240 = vpop.f32.mrf.mxu0
  %v5241 = vadd.f32 %v5048, %v5240
  %v5242 = vpop.f32.mrf.mxu0
  %v5243 = vadd.f32 %v5050, %v5242
  %5244 = vmatprep.mubr.bf16.mxu0 %v3776
  %5245 = vmatmul.mubr.bf16.gmra.mxu0 %v3775
  %v5246 = vpop.f32.mrf.mxu0
  %v5247 = vadd.f32 %v5054, %v5246
  %v5248 = vpop.f32.mrf.mxu0
  %v5249 = vadd.f32 %v5056, %v5248
  %v5250 = vpop.f32.mrf.mxu0
  %v5251 = vadd.f32 %v5058, %v5250
  %v5252 = vpop.f32.mrf.mxu0
  %v5253 = vadd.f32 %v5060, %v5252
  %5254 = vmatprep.mubr.bf16.mxu0 %v3780
  %5255 = vmatmul.mubr.bf16.gmra.mxu0 %v3779
  %v5256 = vpop.f32.mrf.mxu0
  %v5257 = vadd.f32 %v5064, %v5256
  %v5258 = vpop.f32.mrf.mxu0
  %v5259 = vadd.f32 %v5066, %v5258
  %v5260 = vpop.f32.mrf.mxu0
  %v5261 = vadd.f32 %v5068, %v5260
  %v5262 = vpop.f32.mrf.mxu0
  %v5263 = vadd.f32 %v5070, %v5262
  %5264 = vmatprep.mubr.bf16.mxu0 %v3784
  %5265 = vmatmul.mubr.bf16.gmra.mxu0 %v3783
  %v5266 = vpop.f32.mrf.mxu0
  %v5267 = vadd.f32 %v5074, %v5266
  %v5268 = vpop.f32.mrf.mxu0
  %v5269 = vadd.f32 %v5076, %v5268
  %v5270 = vpop.f32.mrf.mxu0
  %v5271 = vadd.f32 %v5078, %v5270
  %v5272 = vpop.f32.mrf.mxu0
  %v5273 = vadd.f32 %v5080, %v5272
  %5274 = vmatprep.mubr.bf16.mxu0 %v3788
  %5275 = vmatmul.mubr.bf16.gmra.mxu0 %v3787
  %v5276 = vpop.f32.mrf.mxu0
  %v5277 = vadd.f32 %v5084, %v5276
  %v5278 = vpop.f32.mrf.mxu0
  %v5279 = vadd.f32 %v5086, %v5278
  %v5280 = vpop.f32.mrf.mxu0
  %v5281 = vadd.f32 %v5088, %v5280
  %v5282 = vpop.f32.mrf.mxu0
  %v5283 = vadd.f32 %v5090, %v5282
  %5284 = vmatprep.mubr.bf16.mxu0 %v3792
  %5285 = vmatmul.mubr.bf16.gmra.mxu0 %v3791
  %v5286 = vpop.f32.mrf.mxu0
  %v5287 = vadd.f32 %v5094, %v5286
  %v5288 = vpop.f32.mrf.mxu0
  %v5289 = vadd.f32 %v5096, %v5288
  %v5290 = vpop.f32.mrf.mxu0
  %v5291 = vadd.f32 %v5098, %v5290
  %v5292 = vpop.f32.mrf.mxu0
  %v5293 = vadd.f32 %v5100, %v5292
  %5294 = vmatprep.mubr.bf16.mxu0 %v3796
  %5295 = vmatmul.mubr.bf16.gmra.mxu0 %v3795
  %v5296 = vpop.f32.mrf.mxu0
  %v5297 = vadd.f32 %v5104, %v5296
  %v5298 = vpop.f32.mrf.mxu0
  %v5299 = vadd.f32 %v5106, %v5298
  %v5300 = vpop.f32.mrf.mxu0
  %v5301 = vadd.f32 %v5108, %v5300
  %v5302 = vpop.f32.mrf.mxu0
  %v5303 = vadd.f32 %v5110, %v5302
  %5304 = vmatprep.mubr.bf16.mxu0 %v3800
  %5305 = vmatmul.mubr.bf16.gmra.mxu0 %v3799
  %v5306 = vpop.f32.mrf.mxu0
  %v5307 = vadd.f32 %v5114, %v5306
  %v5308 = vpop.f32.mrf.mxu0
  %v5309 = vadd.f32 %v5116, %v5308
  %v5310 = vpop.f32.mrf.mxu0
  %v5311 = vadd.f32 %v5118, %v5310
  %v5312 = vpop.f32.mrf.mxu0
  %v5313 = vadd.f32 %v5120, %v5312
  %5314 = vmatprep.mubr.bf16.mxu0 %v3804
  %5315 = vmatmul.mubr.bf16.gmra.mxu0 %v3803
  %v5316 = vpop.f32.mrf.mxu0
  %v5317 = vadd.f32 %v5124, %v5316
  %v5318 = vpop.f32.mrf.mxu0
  %v5319 = vadd.f32 %v5126, %v5318
  %v5320 = vpop.f32.mrf.mxu0
  %v5321 = vadd.f32 %v5128, %v5320
  %v5322 = vpop.f32.mrf.mxu0
  %v5323 = vadd.f32 %v5130, %v5322
  %5324 = vmatprep.mubr.bf16.mxu0 %v3808
  %5325 = vmatmul.mubr.bf16.gmra.mxu0 %v3807
  %v5326 = vpop.f32.mrf.mxu0
  %v5327 = vadd.f32 %v5134, %v5326
  %v5328 = vpop.f32.mrf.mxu0
  %v5329 = vadd.f32 %v5136, %v5328
  %v5330 = vpop.f32.mrf.mxu0
  %v5331 = vadd.f32 %v5138, %v5330
  %v5332 = vpop.f32.mrf.mxu0
  %v5333 = vadd.f32 %v5140, %v5332
  %5334 = vmatprep.mubr.bf16.mxu0 %v3812
  %5335 = vmatmul.mubr.bf16.gmra.mxu0 %v3811
  %v5336 = vpop.f32.mrf.mxu0
  %v5337 = vadd.f32 %v5144, %v5336
  %v5338 = vpop.f32.mrf.mxu0
  %v5339 = vadd.f32 %v5146, %v5338
  %v5340 = vpop.f32.mrf.mxu0
  %v5341 = vadd.f32 %v5148, %v5340
  %v5342 = vpop.f32.mrf.mxu0
  %v5343 = vadd.f32 %v5150, %v5342
  %5344 = vmatprep.mubr.bf16.mxu0 %v3816
  %5345 = vmatmul.mubr.bf16.gmra.mxu0 %v3815
  %v5346 = vpop.f32.mrf.mxu0
  %v5347 = vadd.f32 %v5154, %v5346
  %v5348 = vpop.f32.mrf.mxu0
  %v5349 = vadd.f32 %v5156, %v5348
  %v5350 = vpop.f32.mrf.mxu0
  %v5351 = vadd.f32 %v5158, %v5350
  %v5352 = vpop.f32.mrf.mxu0
  %v5353 = vadd.f32 %v5160, %v5352
  %5354 = vmatprep.mubr.bf16.mxu0 %v3820
  %5355 = vmatmul.mubr.bf16.gmra.mxu0 %v3819
  %v5356 = vpop.f32.mrf.mxu0
  %v5357 = vadd.f32 %v5164, %v5356
  %v5358 = vpop.f32.mrf.mxu0
  %v5359 = vadd.f32 %v5166, %v5358
  %v5360 = vpop.f32.mrf.mxu0
  %v5361 = vadd.f32 %v5168, %v5360
  %v5362 = vpop.f32.mrf.mxu0
  %v5363 = vadd.f32 %v5170, %v5362
  %5364 = vmatprep.mubr.bf16.mxu0 %v3824
  %5365 = vmatmul.mubr.bf16.gmra.mxu0 %v3823
  %v5366 = vpop.f32.mrf.mxu0
  %v5367 = vadd.f32 %v5174, %v5366
  %v5368 = vpop.f32.mrf.mxu0
  %v5369 = vadd.f32 %v5176, %v5368
  %v5370 = vpop.f32.mrf.mxu0
  %v5371 = vadd.f32 %v5178, %v5370
  %v5372 = vpop.f32.mrf.mxu0
  %v5373 = vadd.f32 %v5180, %v5372
  %5374 = vmatprep.mubr.bf16.mxu0 %v3828
  %5375 = vmatmul.mubr.bf16.gmra.mxu0 %v3827
  %v5376 = vpop.f32.mrf.mxu0
  %v5377 = vadd.f32 %v5184, %v5376
  %v5378 = vpop.f32.mrf.mxu0
  %v5379 = vadd.f32 %v5186, %v5378
  %v5380 = vpop.f32.mrf.mxu0
  %v5381 = vadd.f32 %v5188, %v5380
  %v5382 = vpop.f32.mrf.mxu0
  %v5383 = vadd.f32 %v5190, %v5382
  %5384 = vmatprep.mubr.bf16.mxu0 %v3832
  %5385 = vmatmul.mubr.bf16.gmra.mxu0 %v3831
  %v5386 = vpop.f32.mrf.mxu0
  %v5387 = vadd.f32 %v5194, %v5386
  %v5388 = vpop.f32.mrf.mxu0
  %v5389 = vadd.f32 %v5196, %v5388
  %v5390 = vpop.f32.mrf.mxu0
  %v5391 = vadd.f32 %v5198, %v5390
  %v5392 = vpop.f32.mrf.mxu0
  %v5393 = vadd.f32 %v5200, %v5392
  %5394 = vdwg.mxu0
  %v5395 = vmax.f32 %v4851, 0.0
  %v5396 = vmax.f32 %v4853, 0.0
  %v5397 = vmax.f32 %v5237, 0.0
  %v5398 = vmax.f32 %v5239, 0.0
  %v5399 = vmax.f32 %v4855, 0.0
  %v5400 = vmax.f32 %v4857, 0.0
  %v5401 = vmax.f32 %v5241, 0.0
  %v5402 = vmax.f32 %v5243, 0.0
  %v5403 = vmax.f32 %v4861, 0.0
  %v5404 = vmax.f32 %v4863, 0.0
  %v5405 = vmax.f32 %v5247, 0.0
  %v5406 = vmax.f32 %v5249, 0.0
  %v5407 = vmax.f32 %v4865, 0.0
  %v5408 = vmax.f32 %v4867, 0.0
  %v5409 = vmax.f32 %v5251, 0.0
  %v5410 = vmax.f32 %v5253, 0.0
  %v5411 = vmax.f32 %v4871, 0.0
  %v5412 = vmax.f32 %v4873, 0.0
  %v5413 = vmax.f32 %v5257, 0.0
  %v5414 = vmax.f32 %v5259, 0.0
  %v5415 = vmax.f32 %v4875, 0.0
  %v5416 = vmax.f32 %v4877, 0.0
  %v5417 = vmax.f32 %v5261, 0.0
  %v5418 = vmax.f32 %v5263, 0.0
  %v5419 = vmax.f32 %v4881, 0.0
  %v5420 = vmax.f32 %v4883, 0.0
  %v5421 = vmax.f32 %v5267, 0.0
  %v5422 = vmax.f32 %v5269, 0.0
  %v5423 = vmax.f32 %v4885, 0.0
  %v5424 = vmax.f32 %v4887, 0.0
  %v5425 = vmax.f32 %v5271, 0.0
  %v5426 = vmax.f32 %v5273, 0.0
  %v5427 = vmax.f32 %v4891, 0.0
  %v5428 = vmax.f32 %v4893, 0.0
  %v5429 = vmax.f32 %v5277, 0.0
  %v5430 = vmax.f32 %v5279, 0.0
  %v5431 = vmax.f32 %v4895, 0.0
  %v5432 = vmax.f32 %v4897, 0.0
  %v5433 = vmax.f32 %v5281, 0.0
  %v5434 = vmax.f32 %v5283, 0.0
  %v5435 = vmax.f32 %v4901, 0.0
  %v5436 = vmax.f32 %v4903, 0.0
  %v5437 = vmax.f32 %v5287, 0.0
  %v5438 = vmax.f32 %v5289, 0.0
  %v5439 = vmax.f32 %v4905, 0.0
  %v5440 = vmax.f32 %v4907, 0.0
  %v5441 = vmax.f32 %v5291, 0.0
  %v5442 = vmax.f32 %v5293, 0.0
  %v5443 = vmax.f32 %v4911, 0.0
  %v5444 = vmax.f32 %v4913, 0.0
  %v5445 = vmax.f32 %v5297, 0.0
  %v5446 = vmax.f32 %v5299, 0.0
  %v5447 = vmax.f32 %v4915, 0.0
  %v5448 = vmax.f32 %v4917, 0.0
  %v5449 = vmax.f32 %v5301, 0.0
  %v5450 = vmax.f32 %v5303, 0.0
  %v5451 = vmax.f32 %v4921, 0.0
  %v5452 = vmax.f32 %v4923, 0.0
  %v5453 = vmax.f32 %v5307, 0.0
  %v5454 = vmax.f32 %v5309, 0.0
  %v5455 = vmax.f32 %v4925, 0.0
  %v5456 = vmax.f32 %v4927, 0.0
  %v5457 = vmax.f32 %v5311, 0.0
  %v5458 = vmax.f32 %v5313, 0.0
  %v5459 = vmax.f32 %v4931, 0.0
  %v5460 = vmax.f32 %v4933, 0.0
  %v5461 = vmax.f32 %v5317, 0.0
  %v5462 = vmax.f32 %v5319, 0.0
  %v5463 = vmax.f32 %v4935, 0.0
  %v5464 = vmax.f32 %v4937, 0.0
  %v5465 = vmax.f32 %v5321, 0.0
  %v5466 = vmax.f32 %v5323, 0.0
  %v5467 = vmax.f32 %v4941, 0.0
  %v5468 = vmax.f32 %v4943, 0.0
  %v5469 = vmax.f32 %v5327, 0.0
  %v5470 = vmax.f32 %v5329, 0.0
  %v5471 = vmax.f32 %v4945, 0.0
  %v5472 = vmax.f32 %v4947, 0.0
  %v5473 = vmax.f32 %v5331, 0.0
  %v5474 = vmax.f32 %v5333, 0.0
  %v5475 = vmax.f32 %v4951, 0.0
  %v5476 = vmax.f32 %v4953, 0.0
  %v5477 = vmax.f32 %v5337, 0.0
  %v5478 = vmax.f32 %v5339, 0.0
  %v5479 = vmax.f32 %v4955, 0.0
  %v5480 = vmax.f32 %v4957, 0.0
  %v5481 = vmax.f32 %v5341, 0.0
  %v5482 = vmax.f32 %v5343, 0.0
  %v5483 = vmax.f32 %v4961, 0.0
  %v5484 = vmax.f32 %v4963, 0.0
  %v5485 = vmax.f32 %v5347, 0.0
  %v5486 = vmax.f32 %v5349, 0.0
  %v5487 = vmax.f32 %v4965, 0.0
  %v5488 = vmax.f32 %v4967, 0.0
  %v5489 = vmax.f32 %v5351, 0.0
  %v5490 = vmax.f32 %v5353, 0.0
  %v5491 = vmax.f32 %v4971, 0.0
  %v5492 = vmax.f32 %v4973, 0.0
  %v5493 = vmax.f32 %v5357, 0.0
  %v5494 = vmax.f32 %v5359, 0.0
  %v5495 = vmax.f32 %v4975, 0.0
  %v5496 = vmax.f32 %v4977, 0.0
  %v5497 = vmax.f32 %v5361, 0.0
  %v5498 = vmax.f32 %v5363, 0.0
  %v5499 = vmax.f32 %v4981, 0.0
  %v5500 = vmax.f32 %v4983, 0.0
  %v5501 = vmax.f32 %v5367, 0.0
  %v5502 = vmax.f32 %v5369, 0.0
  %v5503 = vmax.f32 %v4985, 0.0
  %v5504 = vmax.f32 %v4987, 0.0
  %v5505 = vmax.f32 %v5371, 0.0
  %v5506 = vmax.f32 %v5373, 0.0
  %v5507 = vmax.f32 %v4991, 0.0
  %v5508 = vmax.f32 %v4993, 0.0
  %v5509 = vmax.f32 %v5377, 0.0
  %v5510 = vmax.f32 %v5379, 0.0
  %v5511 = vmax.f32 %v4995, 0.0
  %v5512 = vmax.f32 %v4997, 0.0
  %v5513 = vmax.f32 %v5381, 0.0
  %v5514 = vmax.f32 %v5383, 0.0
  %v5515 = vmax.f32 %v5001, 0.0
  %v5516 = vmax.f32 %v5003, 0.0
  %v5517 = vmax.f32 %v5387, 0.0
  %v5518 = vmax.f32 %v5389, 0.0
  %v5519 = vmax.f32 %v5005, 0.0
  %v5520 = vmax.f32 %v5007, 0.0
  %v5521 = vmax.f32 %v5391, 0.0
  %v5522 = vmax.f32 %v5393, 0.0
  %v5523 = vpack.c.bf16 %v5399, %v5395
  %v5524 = vpack.c.bf16 %v5400, %v5396
  %v5525 = vpack.c.bf16 %v5401, %v5397
  %v5526 = vpack.c.bf16 %v5402, %v5398
  %v5527 = vpack.c.bf16 %v5407, %v5403
  %v5528 = vpack.c.bf16 %v5408, %v5404
  %v5529 = vpack.c.bf16 %v5409, %v5405
  %v5530 = vpack.c.bf16 %v5410, %v5406
  %v5531 = vpack.c.bf16 %v5415, %v5411
  %v5532 = vpack.c.bf16 %v5416, %v5412
  %v5533 = vpack.c.bf16 %v5417, %v5413
  %v5534 = vpack.c.bf16 %v5418, %v5414
  %v5535 = vpack.c.bf16 %v5423, %v5419
  %v5536 = vpack.c.bf16 %v5424, %v5420
  %v5537 = vpack.c.bf16 %v5425, %v5421
  %v5538 = vpack.c.bf16 %v5426, %v5422
  %v5539 = vpack.c.bf16 %v5431, %v5427
  %v5540 = vpack.c.bf16 %v5432, %v5428
  %v5541 = vpack.c.bf16 %v5433, %v5429
  %v5542 = vpack.c.bf16 %v5434, %v5430
  %v5543 = vpack.c.bf16 %v5439, %v5435
  %v5544 = vpack.c.bf16 %v5440, %v5436
  %v5545 = vpack.c.bf16 %v5441, %v5437
  %v5546 = vpack.c.bf16 %v5442, %v5438
  %v5547 = vpack.c.bf16 %v5447, %v5443
  %v5548 = vpack.c.bf16 %v5448, %v5444
  %v5549 = vpack.c.bf16 %v5449, %v5445
  %v5550 = vpack.c.bf16 %v5450, %v5446
  %v5551 = vpack.c.bf16 %v5455, %v5451
  %v5552 = vpack.c.bf16 %v5456, %v5452
  %v5553 = vpack.c.bf16 %v5457, %v5453
  %v5554 = vpack.c.bf16 %v5458, %v5454
  %v5555 = vpack.c.bf16 %v5463, %v5459
  %v5556 = vpack.c.bf16 %v5464, %v5460
  %v5557 = vpack.c.bf16 %v5465, %v5461
  %v5558 = vpack.c.bf16 %v5466, %v5462
  %v5559 = vpack.c.bf16 %v5471, %v5467
  %v5560 = vpack.c.bf16 %v5472, %v5468
  %v5561 = vpack.c.bf16 %v5473, %v5469
  %v5562 = vpack.c.bf16 %v5474, %v5470
  %v5563 = vpack.c.bf16 %v5479, %v5475
  %v5564 = vpack.c.bf16 %v5480, %v5476
  %v5565 = vpack.c.bf16 %v5481, %v5477
  %v5566 = vpack.c.bf16 %v5482, %v5478
  %v5567 = vpack.c.bf16 %v5487, %v5483
  %v5568 = vpack.c.bf16 %v5488, %v5484
  %v5569 = vpack.c.bf16 %v5489, %v5485
  %v5570 = vpack.c.bf16 %v5490, %v5486
  %v5571 = vpack.c.bf16 %v5495, %v5491
  %v5572 = vpack.c.bf16 %v5496, %v5492
  %v5573 = vpack.c.bf16 %v5497, %v5493
  %v5574 = vpack.c.bf16 %v5498, %v5494
  %v5575 = vpack.c.bf16 %v5503, %v5499
  %v5576 = vpack.c.bf16 %v5504, %v5500
  %v5577 = vpack.c.bf16 %v5505, %v5501
  %v5578 = vpack.c.bf16 %v5506, %v5502
  %v5579 = vpack.c.bf16 %v5511, %v5507
  %v5580 = vpack.c.bf16 %v5512, %v5508
  %v5581 = vpack.c.bf16 %v5513, %v5509
  %v5582 = vpack.c.bf16 %v5514, %v5510
  %v5583 = vpack.c.bf16 %v5519, %v5515
  %v5584 = vpack.c.bf16 %v5520, %v5516
  %v5585 = vpack.c.bf16 %v5521, %v5517
  %v5586 = vpack.c.bf16 %v5522, %v5518
  %v5587 = vld [vmem:[%s5] sm:$0xf]
  %v5588 = vld [vmem:[%s5 + $0x4] sm:$0xf]
  %v5589 = vld [vmem:[%s5 + $0x8] sm:$0xf]
  %v5590 = vld [vmem:[%s5 + $0xc] sm:$0xf]
  %v5591 = vld [vmem:[%s5 + $0x10] sm:$0xf]
  %v5592 = vld [vmem:[%s5 + $0x14] sm:$0xf]
  %v5593 = vld [vmem:[%s5 + $0x18] sm:$0xf]
  %v5594 = vld [vmem:[%s5 + $0x1c] sm:$0xf]
  %v5595 = vld [vmem:[%s5 + $0x20] sm:$0xf]
  %v5596 = vld [vmem:[%s5 + $0x24] sm:$0xf]
  %v5597 = vld [vmem:[%s5 + $0x28] sm:$0xf]
  %v5598 = vld [vmem:[%s5 + $0x2c] sm:$0xf]
  %v5599 = vld [vmem:[%s5 + $0x30] sm:$0xf]
  %v5600 = vld [vmem:[%s5 + $0x34] sm:$0xf]
  %v5601 = vld [vmem:[%s5 + $0x38] sm:$0xf]
  %v5602 = vld [vmem:[%s5 + $0x3c] sm:$0xf]
  %v5603 = vld [vmem:[%s5 + $0x40] sm:$0xf]
  %v5604 = vld [vmem:[%s5 + $0x44] sm:$0xf]
  %v5605 = vld [vmem:[%s5 + $0x48] sm:$0xf]
  %v5606 = vld [vmem:[%s5 + $0x4c] sm:$0xf]
  %v5607 = vld [vmem:[%s5 + $0x50] sm:$0xf]
  %v5608 = vld [vmem:[%s5 + $0x54] sm:$0xf]
  %v5609 = vld [vmem:[%s5 + $0x58] sm:$0xf]
  %v5610 = vld [vmem:[%s5 + $0x5c] sm:$0xf]
  %v5611 = vld [vmem:[%s5 + $0x60] sm:$0xf]
  %v5612 = vld [vmem:[%s5 + $0x64] sm:$0xf]
  %v5613 = vld [vmem:[%s5 + $0x68] sm:$0xf]
  %v5614 = vld [vmem:[%s5 + $0x6c] sm:$0xf]
  %v5615 = vld [vmem:[%s5 + $0x70] sm:$0xf]
  %v5616 = vld [vmem:[%s5 + $0x74] sm:$0xf]
  %v5617 = vld [vmem:[%s5 + $0x78] sm:$0xf]
  %v5618 = vld [vmem:[%s5 + $0x7c] sm:$0xf]
  %v5619 = vld [vmem:[%s5 + $0x80] sm:$0xf]
  %v5620 = vld [vmem:[%s5 + $0x84] sm:$0xf]
  %v5621 = vld [vmem:[%s5 + $0x88] sm:$0xf]
  %v5622 = vld [vmem:[%s5 + $0x8c] sm:$0xf]
  %v5623 = vld [vmem:[%s5 + $0x90] sm:$0xf]
  %v5624 = vld [vmem:[%s5 + $0x94] sm:$0xf]
  %v5625 = vld [vmem:[%s5 + $0x98] sm:$0xf]
  %v5626 = vld [vmem:[%s5 + $0x9c] sm:$0xf]
  %v5627 = vld [vmem:[%s5 + $0xa0] sm:$0xf]
  %v5628 = vld [vmem:[%s5 + $0xa4] sm:$0xf]
  %v5629 = vld [vmem:[%s5 + $0xa8] sm:$0xf]
  %v5630 = vld [vmem:[%s5 + $0xac] sm:$0xf]
  %v5631 = vld [vmem:[%s5 + $0xb0] sm:$0xf]
  %v5632 = vld [vmem:[%s5 + $0xb4] sm:$0xf]
  %v5633 = vld [vmem:[%s5 + $0xb8] sm:$0xf]
  %v5634 = vld [vmem:[%s5 + $0xbc] sm:$0xf]
  %v5635 = vld [vmem:[%s5 + $0xc0] sm:$0xf]
  %v5636 = vld [vmem:[%s5 + $0xc4] sm:$0xf]
  %v5637 = vld [vmem:[%s5 + $0xc8] sm:$0xf]
  %v5638 = vld [vmem:[%s5 + $0xcc] sm:$0xf]
  %v5639 = vld [vmem:[%s5 + $0xd0] sm:$0xf]
  %v5640 = vld [vmem:[%s5 + $0xd4] sm:$0xf]
  %v5641 = vld [vmem:[%s5 + $0xd8] sm:$0xf]
  %v5642 = vld [vmem:[%s5 + $0xdc] sm:$0xf]
  %v5643 = vld [vmem:[%s5 + $0xe0] sm:$0xf]
  %v5644 = vld [vmem:[%s5 + $0xe4] sm:$0xf]
  %v5645 = vld [vmem:[%s5 + $0xe8] sm:$0xf]
  %v5646 = vld [vmem:[%s5 + $0xec] sm:$0xf]
  %v5647 = vld [vmem:[%s5 + $0xf0] sm:$0xf]
  %v5648 = vld [vmem:[%s5 + $0xf4] sm:$0xf]
  %v5649 = vld [vmem:[%s5 + $0xf8] sm:$0xf]
  %v5650 = vld [vmem:[%s5 + $0xfc] sm:$0xf]
  %v5651 = vld [vmem:[%s6] sm:$0x1]
  %v5653 = vlaneseq
  %v5654 = vshrl.u32 %v5653, 7
  %v5655 = vsub.s32 0, %v5654
  %v5656 = vrot.slane %v5651, %v5655
  %v5722 = vunpack.c.l.b16 %v5587
  %v5723 = vunpack.c.l.b16 %v5588
  %v5724 = vunpack.c.l.b16 %v5589
  %v5725 = vunpack.c.l.b16 %v5590
  %v5726 = vunpack.c.l.b16 %v5591
  %v5727 = vunpack.c.l.b16 %v5592
  %v5728 = vunpack.c.l.b16 %v5593
  %v5729 = vunpack.c.l.b16 %v5594
  %v5730 = vunpack.c.l.b16 %v5595
  %v5731 = vunpack.c.l.b16 %v5596
  %v5732 = vunpack.c.l.b16 %v5597
  %v5733 = vunpack.c.l.b16 %v5598
  %v5734 = vunpack.c.l.b16 %v5599
  %v5735 = vunpack.c.l.b16 %v5600
  %v5736 = vunpack.c.l.b16 %v5601
  %v5737 = vunpack.c.l.b16 %v5602
  %v5738 = vunpack.c.l.b16 %v5603
  %v5739 = vunpack.c.l.b16 %v5604
  %v5740 = vunpack.c.l.b16 %v5605
  %v5741 = vunpack.c.l.b16 %v5606
  %v5742 = vunpack.c.l.b16 %v5607
  %v5743 = vunpack.c.l.b16 %v5608
  %v5744 = vunpack.c.l.b16 %v5609
  %v5745 = vunpack.c.l.b16 %v5610
  %v5746 = vunpack.c.l.b16 %v5611
  %v5747 = vunpack.c.l.b16 %v5612
  %v5748 = vunpack.c.l.b16 %v5613
  %v5749 = vunpack.c.l.b16 %v5614
  %v5750 = vunpack.c.l.b16 %v5615
  %v5751 = vunpack.c.l.b16 %v5616
  %v5752 = vunpack.c.l.b16 %v5617
  %v5753 = vunpack.c.l.b16 %v5618
  %v5754 = vunpack.c.l.b16 %v5619
  %v5755 = vunpack.c.l.b16 %v5620
  %v5756 = vunpack.c.l.b16 %v5621
  %v5757 = vunpack.c.l.b16 %v5622
  %v5758 = vunpack.c.l.b16 %v5623
  %v5759 = vunpack.c.l.b16 %v5624
  %v5760 = vunpack.c.l.b16 %v5625
  %v5761 = vunpack.c.l.b16 %v5626
  %v5762 = vunpack.c.l.b16 %v5627
  %v5763 = vunpack.c.l.b16 %v5628
  %v5764 = vunpack.c.l.b16 %v5629
  %v5765 = vunpack.c.l.b16 %v5630
  %v5766 = vunpack.c.l.b16 %v5631
  %v5767 = vunpack.c.l.b16 %v5632
  %v5768 = vunpack.c.l.b16 %v5633
  %v5769 = vunpack.c.l.b16 %v5634
  %v5770 = vunpack.c.l.b16 %v5635
  %v5771 = vunpack.c.l.b16 %v5636
  %v5772 = vunpack.c.l.b16 %v5637
  %v5773 = vunpack.c.l.b16 %v5638
  %v5774 = vunpack.c.l.b16 %v5639
  %v5775 = vunpack.c.l.b16 %v5640
  %v5776 = vunpack.c.l.b16 %v5641
  %v5777 = vunpack.c.l.b16 %v5642
  %v5778 = vunpack.c.l.b16 %v5643
  %v5779 = vunpack.c.l.b16 %v5644
  %v5780 = vunpack.c.l.b16 %v5645
  %v5781 = vunpack.c.l.b16 %v5646
  %v5782 = vunpack.c.l.b16 %v5647
  %v5783 = vunpack.c.l.b16 %v5648
  %v5784 = vunpack.c.l.b16 %v5649
  %v5785 = vunpack.c.l.b16 %v5650
  %v5786 = vpack.c.b16 %v5723, %v5722
  %v5787 = vpack.c.b16 %v5725, %v5724
  %v5788 = vpack.c.b16 %v5727, %v5726
  %v5789 = vpack.c.b16 %v5729, %v5728
  %v5790 = vpack.c.b16 %v5731, %v5730
  %v5791 = vpack.c.b16 %v5733, %v5732
  %v5792 = vpack.c.b16 %v5735, %v5734
  %v5793 = vpack.c.b16 %v5737, %v5736
  %v5794 = vpack.c.b16 %v5739, %v5738
  %v5795 = vpack.c.b16 %v5741, %v5740
  %v5796 = vpack.c.b16 %v5743, %v5742
  %v5797 = vpack.c.b16 %v5745, %v5744
  %v5798 = vpack.c.b16 %v5747, %v5746
  %v5799 = vpack.c.b16 %v5749, %v5748
  %v5800 = vpack.c.b16 %v5751, %v5750
  %v5801 = vpack.c.b16 %v5753, %v5752
  %v5802 = vpack.c.b16 %v5755, %v5754
  %v5803 = vpack.c.b16 %v5757, %v5756
  %v5804 = vpack.c.b16 %v5759, %v5758
  %v5805 = vpack.c.b16 %v5761, %v5760
  %v5806 = vpack.c.b16 %v5763, %v5762
  %v5807 = vpack.c.b16 %v5765, %v5764
  %v5808 = vpack.c.b16 %v5767, %v5766
  %v5809 = vpack.c.b16 %v5769, %v5768
  %v5810 = vpack.c.b16 %v5771, %v5770
  %v5811 = vpack.c.b16 %v5773, %v5772
  %v5812 = vpack.c.b16 %v5775, %v5774
  %v5813 = vpack.c.b16 %v5777, %v5776
  %v5814 = vpack.c.b16 %v5779, %v5778
  %v5815 = vpack.c.b16 %v5781, %v5780
  %v5816 = vpack.c.b16 %v5783, %v5782
  %v5817 = vpack.c.b16 %v5785, %v5784
  %5850 = vmatprep.subr.bf16.mxu0 0
  %5851 = vmatpush1.bf16.msra.mxu0 %v5793
  %5852 = vmatprep.subr.bf16.mxu0 0
  %5853 = vmatpush1.bf16.msra.mxu0 %v5792
  %5854 = vmatprep.subr.bf16.mxu0 0
  %5855 = vmatpush1.bf16.msra.mxu0 %v5791
  %5856 = vmatprep.subr.bf16.mxu0 0
  %5857 = vmatpush1.bf16.msra.mxu0 %v5790
  %5858 = vmatprep.subr.bf16.mxu0 0
  %5859 = vmatpush1.bf16.msra.mxu0 %v5789
  %5860 = vmatprep.subr.bf16.mxu0 0
  %5861 = vmatpush1.bf16.msra.mxu0 %v5788
  %5862 = vmatprep.subr.bf16.mxu0 0
  %5863 = vmatpush1.bf16.msra.mxu0 %v5787
  %5864 = vmatprep.subr.bf16.mxu0 0
  %5865 = vmatpush1.bf16.msra.mxu0 %v5786
  %5866 = vmatprep.subr.bf16.mxu0 0
  %5867 = vmatpush2.bf16.msra.mxu0 %v5801
  %5868 = vmatprep.subr.bf16.mxu0 0
  %5869 = vmatpush2.bf16.msra.mxu0 %v5800
  %5870 = vmatprep.subr.bf16.mxu0 0
  %5871 = vmatpush2.bf16.msra.mxu0 %v5799
  %5872 = vmatprep.subr.bf16.mxu0 0
  %5873 = vmatpush2.bf16.msra.mxu0 %v5798
  %5874 = vmatprep.subr.bf16.mxu0 0
  %5875 = vmatpush2.bf16.msra.mxu0 %v5797
  %5876 = vmatprep.subr.bf16.mxu0 0
  %5877 = vmatpush2.bf16.msra.mxu0 %v5796
  %5878 = vmatprep.subr.bf16.mxu0 0
  %5879 = vmatpush2.bf16.msra.mxu0 %v5795
  %5880 = vmatprep.subr.bf16.mxu0 0
  %5881 = vmatpush2.bf16.msra.mxu0 %v5794
  %5882 = vmatprep.mubr.bf16.mxu0 %v5524
  %5883 = vmatmul.mubr.bf16.gmra.mxu0 %v5523
  %v5884 = vpop.f32.mrf.mxu0
  %v5885 = vadd.f32 %v5656, %v5884
  %v5886 = vpop.f32.mrf.mxu0
  %v5887 = vpop.f32.mrf.mxu0
  %v5888 = vadd.f32 %v5656, %v5887
  %v5889 = vpop.f32.mrf.mxu0
  %5890 = vmatprep.mubr.bf16.mxu0 %v5528
  %5891 = vmatmul.mubr.bf16.gmra.mxu0 %v5527
  %v5892 = vpop.f32.mrf.mxu0
  %v5893 = vadd.f32 %v5656, %v5892
  %v5894 = vpop.f32.mrf.mxu0
  %v5895 = vpop.f32.mrf.mxu0
  %v5896 = vadd.f32 %v5656, %v5895
  %v5897 = vpop.f32.mrf.mxu0
  %5898 = vmatprep.mubr.bf16.mxu0 %v5532
  %5899 = vmatmul.mubr.bf16.gmra.mxu0 %v5531
  %v5900 = vpop.f32.mrf.mxu0
  %v5901 = vadd.f32 %v5656, %v5900
  %v5902 = vpop.f32.mrf.mxu0
  %v5903 = vpop.f32.mrf.mxu0
  %v5904 = vadd.f32 %v5656, %v5903
  %v5905 = vpop.f32.mrf.mxu0
  %5906 = vmatprep.mubr.bf16.mxu0 %v5536
  %5907 = vmatmul.mubr.bf16.gmra.mxu0 %v5535
  %v5908 = vpop.f32.mrf.mxu0
  %v5909 = vadd.f32 %v5656, %v5908
  %v5910 = vpop.f32.mrf.mxu0
  %v5911 = vpop.f32.mrf.mxu0
  %v5912 = vadd.f32 %v5656, %v5911
  %v5913 = vpop.f32.mrf.mxu0
  %5914 = vmatprep.mubr.bf16.mxu0 %v5540
  %5915 = vmatmul.mubr.bf16.gmra.mxu0 %v5539
  %v5916 = vpop.f32.mrf.mxu0
  %v5917 = vadd.f32 %v5656, %v5916
  %v5918 = vpop.f32.mrf.mxu0
  %v5919 = vpop.f32.mrf.mxu0
  %v5920 = vadd.f32 %v5656, %v5919
  %v5921 = vpop.f32.mrf.mxu0
  %5922 = vmatprep.mubr.bf16.mxu0 %v5544
  %5923 = vmatmul.mubr.bf16.gmra.mxu0 %v5543
  %v5924 = vpop.f32.mrf.mxu0
  %v5925 = vadd.f32 %v5656, %v5924
  %v5926 = vpop.f32.mrf.mxu0
  %v5927 = vpop.f32.mrf.mxu0
  %v5928 = vadd.f32 %v5656, %v5927
  %v5929 = vpop.f32.mrf.mxu0
  %5930 = vmatprep.mubr.bf16.mxu0 %v5548
  %5931 = vmatmul.mubr.bf16.gmra.mxu0 %v5547
  %v5932 = vpop.f32.mrf.mxu0
  %v5933 = vadd.f32 %v5656, %v5932
  %v5934 = vpop.f32.mrf.mxu0
  %v5935 = vpop.f32.mrf.mxu0
  %v5936 = vadd.f32 %v5656, %v5935
  %v5937 = vpop.f32.mrf.mxu0
  %5938 = vmatprep.mubr.bf16.mxu0 %v5552
  %5939 = vmatmul.mubr.bf16.gmra.mxu0 %v5551
  %v5940 = vpop.f32.mrf.mxu0
  %v5941 = vadd.f32 %v5656, %v5940
  %v5942 = vpop.f32.mrf.mxu0
  %v5943 = vpop.f32.mrf.mxu0
  %v5944 = vadd.f32 %v5656, %v5943
  %v5945 = vpop.f32.mrf.mxu0
  %5946 = vmatprep.mubr.bf16.mxu0 %v5556
  %5947 = vmatmul.mubr.bf16.gmra.mxu0 %v5555
  %v5948 = vpop.f32.mrf.mxu0
  %v5949 = vadd.f32 %v5656, %v5948
  %v5950 = vpop.f32.mrf.mxu0
  %v5951 = vpop.f32.mrf.mxu0
  %v5952 = vadd.f32 %v5656, %v5951
  %v5953 = vpop.f32.mrf.mxu0
  %5954 = vmatprep.mubr.bf16.mxu0 %v5560
  %5955 = vmatmul.mubr.bf16.gmra.mxu0 %v5559
  %v5956 = vpop.f32.mrf.mxu0
  %v5957 = vadd.f32 %v5656, %v5956
  %v5958 = vpop.f32.mrf.mxu0
  %v5959 = vpop.f32.mrf.mxu0
  %v5960 = vadd.f32 %v5656, %v5959
  %v5961 = vpop.f32.mrf.mxu0
  %5962 = vmatprep.mubr.bf16.mxu0 %v5564
  %5963 = vmatmul.mubr.bf16.gmra.mxu0 %v5563
  %v5964 = vpop.f32.mrf.mxu0
  %v5965 = vadd.f32 %v5656, %v5964
  %v5966 = vpop.f32.mrf.mxu0
  %v5967 = vpop.f32.mrf.mxu0
  %v5968 = vadd.f32 %v5656, %v5967
  %v5969 = vpop.f32.mrf.mxu0
  %5970 = vmatprep.mubr.bf16.mxu0 %v5568
  %5971 = vmatmul.mubr.bf16.gmra.mxu0 %v5567
  %v5972 = vpop.f32.mrf.mxu0
  %v5973 = vadd.f32 %v5656, %v5972
  %v5974 = vpop.f32.mrf.mxu0
  %v5975 = vpop.f32.mrf.mxu0
  %v5976 = vadd.f32 %v5656, %v5975
  %v5977 = vpop.f32.mrf.mxu0
  %5978 = vmatprep.mubr.bf16.mxu0 %v5572
  %5979 = vmatmul.mubr.bf16.gmra.mxu0 %v5571
  %v5980 = vpop.f32.mrf.mxu0
  %v5981 = vadd.f32 %v5656, %v5980
  %v5982 = vpop.f32.mrf.mxu0
  %v5983 = vpop.f32.mrf.mxu0
  %v5984 = vadd.f32 %v5656, %v5983
  %v5985 = vpop.f32.mrf.mxu0
  %5986 = vmatprep.mubr.bf16.mxu0 %v5576
  %5987 = vmatmul.mubr.bf16.gmra.mxu0 %v5575
  %v5988 = vpop.f32.mrf.mxu0
  %v5989 = vadd.f32 %v5656, %v5988
  %v5990 = vpop.f32.mrf.mxu0
  %v5991 = vpop.f32.mrf.mxu0
  %v5992 = vadd.f32 %v5656, %v5991
  %v5993 = vpop.f32.mrf.mxu0
  %5994 = vmatprep.mubr.bf16.mxu0 %v5580
  %5995 = vmatmul.mubr.bf16.gmra.mxu0 %v5579
  %v5996 = vpop.f32.mrf.mxu0
  %v5997 = vadd.f32 %v5656, %v5996
  %v5998 = vpop.f32.mrf.mxu0
  %v5999 = vpop.f32.mrf.mxu0
  %v6000 = vadd.f32 %v5656, %v5999
  %v6001 = vpop.f32.mrf.mxu0
  %6002 = vmatprep.mubr.bf16.mxu0 %v5584
  %6003 = vmatmul.mubr.bf16.gmra.mxu0 %v5583
  %v6004 = vpop.f32.mrf.mxu0
  %v6005 = vadd.f32 %v5656, %v6004
  %v6006 = vpop.f32.mrf.mxu0
  %v6007 = vpop.f32.mrf.mxu0
  %v6008 = vadd.f32 %v5656, %v6007
  %v6009 = vpop.f32.mrf.mxu0
  %6010 = vdwg.mxu0
  %6011 = vmatprep.subr.bf16.mxu0 0
  %6012 = vmatpush1.bf16.msra.mxu0 %v5809
  %6013 = vmatprep.subr.bf16.mxu0 0
  %6014 = vmatpush1.bf16.msra.mxu0 %v5808
  %6015 = vmatprep.subr.bf16.mxu0 0
  %6016 = vmatpush1.bf16.msra.mxu0 %v5807
  %6017 = vmatprep.subr.bf16.mxu0 0
  %6018 = vmatpush1.bf16.msra.mxu0 %v5806
  %6019 = vmatprep.subr.bf16.mxu0 0
  %6020 = vmatpush1.bf16.msra.mxu0 %v5805
  %6021 = vmatprep.subr.bf16.mxu0 0
  %6022 = vmatpush1.bf16.msra.mxu0 %v5804
  %6023 = vmatprep.subr.bf16.mxu0 0
  %6024 = vmatpush1.bf16.msra.mxu0 %v5803
  %6025 = vmatprep.subr.bf16.mxu0 0
  %6026 = vmatpush1.bf16.msra.mxu0 %v5802
  %6027 = vmatprep.subr.bf16.mxu0 0
  %6028 = vmatpush2.bf16.msra.mxu0 %v5817
  %6029 = vmatprep.subr.bf16.mxu0 0
  %6030 = vmatpush2.bf16.msra.mxu0 %v5816
  %6031 = vmatprep.subr.bf16.mxu0 0
  %6032 = vmatpush2.bf16.msra.mxu0 %v5815
  %6033 = vmatprep.subr.bf16.mxu0 0
  %6034 = vmatpush2.bf16.msra.mxu0 %v5814
  %6035 = vmatprep.subr.bf16.mxu0 0
  %6036 = vmatpush2.bf16.msra.mxu0 %v5813
  %6037 = vmatprep.subr.bf16.mxu0 0
  %6038 = vmatpush2.bf16.msra.mxu0 %v5812
  %6039 = vmatprep.subr.bf16.mxu0 0
  %6040 = vmatpush2.bf16.msra.mxu0 %v5811
  %6041 = vmatprep.subr.bf16.mxu0 0
  %6042 = vmatpush2.bf16.msra.mxu0 %v5810
  %6043 = vmatprep.mubr.bf16.mxu0 %v5526
  %6044 = vmatmul.mubr.bf16.gmra.mxu0 %v5525
  %v6045 = vpop.f32.mrf.mxu0
  %v6046 = vadd.f32 %v5885, %v6045
  %v6047 = vpop.f32.mrf.mxu0
  %v6048 = vpop.f32.mrf.mxu0
  %v6049 = vadd.f32 %v5888, %v6048
  %v6050 = vpop.f32.mrf.mxu0
  %6051 = vmatprep.mubr.bf16.mxu0 %v5530
  %6052 = vmatmul.mubr.bf16.gmra.mxu0 %v5529
  %v6053 = vpop.f32.mrf.mxu0
  %v6054 = vadd.f32 %v5893, %v6053
  %v6055 = vpop.f32.mrf.mxu0
  %v6056 = vpop.f32.mrf.mxu0
  %v6057 = vadd.f32 %v5896, %v6056
  %v6058 = vpop.f32.mrf.mxu0
  %6059 = vmatprep.mubr.bf16.mxu0 %v5534
  %6060 = vmatmul.mubr.bf16.gmra.mxu0 %v5533
  %v6061 = vpop.f32.mrf.mxu0
  %v6062 = vadd.f32 %v5901, %v6061
  %v6063 = vpop.f32.mrf.mxu0
  %v6064 = vpop.f32.mrf.mxu0
  %v6065 = vadd.f32 %v5904, %v6064
  %v6066 = vpop.f32.mrf.mxu0
  %6067 = vmatprep.mubr.bf16.mxu0 %v5538
  %6068 = vmatmul.mubr.bf16.gmra.mxu0 %v5537
  %v6069 = vpop.f32.mrf.mxu0
  %v6070 = vadd.f32 %v5909, %v6069
  %v6071 = vpop.f32.mrf.mxu0
  %v6072 = vpop.f32.mrf.mxu0
  %v6073 = vadd.f32 %v5912, %v6072
  %v6074 = vpop.f32.mrf.mxu0
  %6075 = vmatprep.mubr.bf16.mxu0 %v5542
  %6076 = vmatmul.mubr.bf16.gmra.mxu0 %v5541
  %v6077 = vpop.f32.mrf.mxu0
  %v6078 = vadd.f32 %v5917, %v6077
  %v6079 = vpop.f32.mrf.mxu0
  %v6080 = vpop.f32.mrf.mxu0
  %v6081 = vadd.f32 %v5920, %v6080
  %v6082 = vpop.f32.mrf.mxu0
  %6083 = vmatprep.mubr.bf16.mxu0 %v5546
  %6084 = vmatmul.mubr.bf16.gmra.mxu0 %v5545
  %v6085 = vpop.f32.mrf.mxu0
  %v6086 = vadd.f32 %v5925, %v6085
  %v6087 = vpop.f32.mrf.mxu0
  %v6088 = vpop.f32.mrf.mxu0
  %v6089 = vadd.f32 %v5928, %v6088
  %v6090 = vpop.f32.mrf.mxu0
  %6091 = vmatprep.mubr.bf16.mxu0 %v5550
  %6092 = vmatmul.mubr.bf16.gmra.mxu0 %v5549
  %v6093 = vpop.f32.mrf.mxu0
  %v6094 = vadd.f32 %v5933, %v6093
  %v6095 = vpop.f32.mrf.mxu0
  %v6096 = vpop.f32.mrf.mxu0
  %v6097 = vadd.f32 %v5936, %v6096
  %v6098 = vpop.f32.mrf.mxu0
  %6099 = vmatprep.mubr.bf16.mxu0 %v5554
  %6100 = vmatmul.mubr.bf16.gmra.mxu0 %v5553
  %v6101 = vpop.f32.mrf.mxu0
  %v6102 = vadd.f32 %v5941, %v6101
  %v6103 = vpop.f32.mrf.mxu0
  %v6104 = vpop.f32.mrf.mxu0
  %v6105 = vadd.f32 %v5944, %v6104
  %v6106 = vpop.f32.mrf.mxu0
  %6107 = vmatprep.mubr.bf16.mxu0 %v5558
  %6108 = vmatmul.mubr.bf16.gmra.mxu0 %v5557
  %v6109 = vpop.f32.mrf.mxu0
  %v6110 = vadd.f32 %v5949, %v6109
  %v6111 = vpop.f32.mrf.mxu0
  %v6112 = vpop.f32.mrf.mxu0
  %v6113 = vadd.f32 %v5952, %v6112
  %v6114 = vpop.f32.mrf.mxu0
  %6115 = vmatprep.mubr.bf16.mxu0 %v5562
  %6116 = vmatmul.mubr.bf16.gmra.mxu0 %v5561
  %v6117 = vpop.f32.mrf.mxu0
  %v6118 = vadd.f32 %v5957, %v6117
  %v6119 = vpop.f32.mrf.mxu0
  %v6120 = vpop.f32.mrf.mxu0
  %v6121 = vadd.f32 %v5960, %v6120
  %v6122 = vpop.f32.mrf.mxu0
  %6123 = vmatprep.mubr.bf16.mxu0 %v5566
  %6124 = vmatmul.mubr.bf16.gmra.mxu0 %v5565
  %v6125 = vpop.f32.mrf.mxu0
  %v6126 = vadd.f32 %v5965, %v6125
  %v6127 = vpop.f32.mrf.mxu0
  %v6128 = vpop.f32.mrf.mxu0
  %v6129 = vadd.f32 %v5968, %v6128
  %v6130 = vpop.f32.mrf.mxu0
  %6131 = vmatprep.mubr.bf16.mxu0 %v5570
  %6132 = vmatmul.mubr.bf16.gmra.mxu0 %v5569
  %v6133 = vpop.f32.mrf.mxu0
  %v6134 = vadd.f32 %v5973, %v6133
  %v6135 = vpop.f32.mrf.mxu0
  %v6136 = vpop.f32.mrf.mxu0
  %v6137 = vadd.f32 %v5976, %v6136
  %v6138 = vpop.f32.mrf.mxu0
  %6139 = vmatprep.mubr.bf16.mxu0 %v5574
  %6140 = vmatmul.mubr.bf16.gmra.mxu0 %v5573
  %v6141 = vpop.f32.mrf.mxu0
  %v6142 = vadd.f32 %v5981, %v6141
  %v6143 = vpop.f32.mrf.mxu0
  %v6144 = vpop.f32.mrf.mxu0
  %v6145 = vadd.f32 %v5984, %v6144
  %v6146 = vpop.f32.mrf.mxu0
  %6147 = vmatprep.mubr.bf16.mxu0 %v5578
  %6148 = vmatmul.mubr.bf16.gmra.mxu0 %v5577
  %v6149 = vpop.f32.mrf.mxu0
  %v6150 = vadd.f32 %v5989, %v6149
  %v6151 = vpop.f32.mrf.mxu0
  %v6152 = vpop.f32.mrf.mxu0
  %v6153 = vadd.f32 %v5992, %v6152
  %v6154 = vpop.f32.mrf.mxu0
  %6155 = vmatprep.mubr.bf16.mxu0 %v5582
  %6156 = vmatmul.mubr.bf16.gmra.mxu0 %v5581
  %v6157 = vpop.f32.mrf.mxu0
  %v6158 = vadd.f32 %v5997, %v6157
  %v6159 = vpop.f32.mrf.mxu0
  %v6160 = vpop.f32.mrf.mxu0
  %v6161 = vadd.f32 %v6000, %v6160
  %v6162 = vpop.f32.mrf.mxu0
  %6163 = vmatprep.mubr.bf16.mxu0 %v5586
  %6164 = vmatmul.mubr.bf16.gmra.mxu0 %v5585
  %v6165 = vpop.f32.mrf.mxu0
  %v6166 = vadd.f32 %v6005, %v6165
  %v6167 = vpop.f32.mrf.mxu0
  %v6168 = vpop.f32.mrf.mxu0
  %v6169 = vadd.f32 %v6008, %v6168
  %v6170 = vpop.f32.mrf.mxu0
  %6171 = vdwg.mxu0
  %6172 = vst [vmem:[%s7] sm:$0xff] %v6046
  %6173 = vst [vmem:[%s7 + $0x8] sm:$0xff] %v6049
  %6174 = vst [vmem:[%s7 + $0x10] sm:$0xff] %v6054
  %6175 = vst [vmem:[%s7 + $0x18] sm:$0xff] %v6057
  %6176 = vst [vmem:[%s7 + $0x20] sm:$0xff] %v6062
  %6177 = vst [vmem:[%s7 + $0x28] sm:$0xff] %v6065
  %6178 = vst [vmem:[%s7 + $0x30] sm:$0xff] %v6070
  %6179 = vst [vmem:[%s7 + $0x38] sm:$0xff] %v6073
  %6180 = vst [vmem:[%s7 + $0x40] sm:$0xff] %v6078
  %6181 = vst [vmem:[%s7 + $0x48] sm:$0xff] %v6081
  %6182 = vst [vmem:[%s7 + $0x50] sm:$0xff] %v6086
  %6183 = vst [vmem:[%s7 + $0x58] sm:$0xff] %v6089
  %6184 = vst [vmem:[%s7 + $0x60] sm:$0xff] %v6094
  %6185 = vst [vmem:[%s7 + $0x68] sm:$0xff] %v6097
  %6186 = vst [vmem:[%s7 + $0x70] sm:$0xff] %v6102
  %6187 = vst [vmem:[%s7 + $0x78] sm:$0xff] %v6105
  %6188 = vst [vmem:[%s7 + $0x80] sm:$0xff] %v6110
  %6189 = vst [vmem:[%s7 + $0x88] sm:$0xff] %v6113
  %6190 = vst [vmem:[%s7 + $0x90] sm:$0xff] %v6118
  %6191 = vst [vmem:[%s7 + $0x98] sm:$0xff] %v6121
  %6192 = vst [vmem:[%s7 + $0xa0] sm:$0xff] %v6126
  %6193 = vst [vmem:[%s7 + $0xa8] sm:$0xff] %v6129
  %6194 = vst [vmem:[%s7 + $0xb0] sm:$0xff] %v6134
  %6195 = vst [vmem:[%s7 + $0xb8] sm:$0xff] %v6137
  %6196 = vst [vmem:[%s7 + $0xc0] sm:$0xff] %v6142
  %6197 = vst [vmem:[%s7 + $0xc8] sm:$0xff] %v6145
  %6198 = vst [vmem:[%s7 + $0xd0] sm:$0xff] %v6150
  %6199 = vst [vmem:[%s7 + $0xd8] sm:$0xff] %v6153
  %6200 = vst [vmem:[%s7 + $0xe0] sm:$0xff] %v6158
  %6201 = vst [vmem:[%s7 + $0xe8] sm:$0xff] %v6161
  %6202 = vst [vmem:[%s7 + $0xf0] sm:$0xff] %v6166
  %6203 = vst [vmem:[%s7 + $0xf8] sm:$0xff] %v6169
  // Predicated region
  $region30: #{simple_nn_forward.1} parent=0 // pred_check
    _
  $region31: #{simple_nn_forward.1} parent=0 // pred_check_branch
    %6205 = sbr.rel (0) target = $region33
  $region32: #{simple_nn_forward.1} parent=0 // pred_region
    _
  $region33: #{simple_nn_forward.1} parent=0 // pred_fallthru
    _
  // Predicated region
  $region34: #{simple_nn_forward.1} parent=0 // pred_check
    _
  $region35: #{simple_nn_forward.1} parent=0 // pred_check_branch
    %6207 = sbr.rel (0) target = $region37
  $region36: #{simple_nn_forward.1} parent=0 // pred_region
    _
  $region37: #{simple_nn_forward.1} parent=0 // pred_fallthru
    _

</llo_original>
